<compile_context>
chip_gen: v7x
topology: tpu7x:2x2x1
jax: 0.10.0
libtpu: 0.0.40
codegen_flags: <defaults>
</compile_context>

<pallas_src>
import math
import functools

import jax
import jax.numpy as jnp
from jax.experimental import pallas as pl
from jax.experimental.pallas import tpu as pltpu


# --------------------------- fused kernel ----------------------------------- #
def _graph_learning_kernel(x_ref, wih_ref, bih_ref, whh_ref, bhh_ref,
                           wqkv_ref, bqkv_ref, wd_ref, bd_ref,
                           lnw_ref, lnb_ref, out_ref, gru_ref,
                           *, num_heads, eps):
    Bt, L, D = x_ref.shape
    H = bd_ref.shape[1]          # attention hidden size == n_leads (== L)
    hs = H // num_heads          # attention head size
    D2 = 2 * D

    # ---------------- GRU (h0 = 0), batched over the Bt rows ---------------- #
    # Hoisted, gate-fused input projection: ONE (Bt*L, D) x (D, 3D) matmul for
    # all timesteps and all three gates (columns ordered r | z | n).
    x2 = x_ref[...].reshape(Bt * L, D)
    gi = jnp.dot(x2, wih_ref[...], preferred_element_type=jnp.float32) + bih_ref[...]
    gi3 = gi.reshape(Bt, L, 3 * D)

    whh = whh_ref[...]           # (D, 3D), columns [r | z | n]
    bhh = bhh_ref[...]           # (1, 3D)

    h = jnp.zeros((Bt, D), dtype=jnp.float32)      # vreg-carried hidden state
    for t in range(L):                             # short static recurrence
        # ONE fused hidden matmul on the serial chain (was 3 per step).
        gh = jnp.dot(h, whh, preferred_element_type=jnp.float32) + bhh   # (Bt, 3D)
        git = gi3[:, t, :]                                               # (Bt, 3D)
        # Fused r|z gate: ONE sigmoid push per step; n kept separate (tanh).
        rz = jax.nn.sigmoid(git[:, :D2] + gh[:, :D2])
        r = rz[:, :D]
        z = rz[:, D:D2]
        n = jnp.tanh(git[:, D2:] + r * gh[:, D2:])
        h = (1.0 - z) * n + z * h
        # Row write into scratch (no L-way concatenate at the end).
        gru_ref[:, pl.ds(t, 1), :] = h.reshape(Bt, 1, D)

    # ------------- SelfAttention: fused QKV, batched over Bt ---------------- #
    g2 = gru_ref[...].reshape(Bt * L, D)
    qkv = jnp.dot(g2, wqkv_ref[...], preferred_element_type=jnp.float32) + bqkv_ref[...]
    qkv3 = qkv.reshape(Bt, L, 3 * H)               # columns [Q | K | V], head-major

    scale = 1.0 / math.sqrt(hs)
    ctxs = []
    for hd in range(num_heads):                    # static loop over 2 heads
        q = qkv3[:, :, hd * hs:(hd + 1) * hs]
        k = qkv3[:, :, H + hd * hs:H + (hd + 1) * hs]
        v = qkv3[:, :, 2 * H + hd * hs:2 * H + (hd + 1) * hs]
        s = jnp.einsum('bld,bmd->blm', q, k,
                       preferred_element_type=jnp.float32) * scale
        s = s - jnp.max(s, axis=-1, keepdims=True)
        e = jnp.exp(s)
        p = e / jnp.sum(e, axis=-1, keepdims=True)     # exact softmax (torch parity)
        ctxs.append(jnp.einsum('blm,bmd->bld', p, v,
                               preferred_element_type=jnp.float32))
    # TODO(synk): attn_dropout / out_dropout are eval-mode identity here.
    ctx = jnp.concatenate(ctxs, axis=-1).reshape(Bt * L, H)

    # Output dense (single matmul on the lane-concatenated context) +
    # TF-style LayerNorm (eps inside the square root).
    hid = jnp.dot(ctx, wd_ref[...], preferred_element_type=jnp.float32) + bd_ref[...]
    u = jnp.mean(hid, axis=-1, keepdims=True)
    var = jnp.mean((hid - u) ** 2, axis=-1, keepdims=True)
    hid = (hid - u) * jax.lax.rsqrt(var + eps)
    hid = lnw_ref[...] * hid + lnb_ref[...]

    # -------- relu + symmetrize + normalized Laplacian, per element ---------- #
    for b in range(Bt):                            # small static loop, 2-D ops
        adj = jnp.maximum(hid[b * L:(b + 1) * L, :], 0.0)          # (L, L)
        adj = 0.5 * (adj + adj.T)
        rs = jnp.sum(adj, axis=1, keepdims=True)                   # (L, 1)
        cs = jnp.sum(adj, axis=0, keepdims=True)                   # (1, L) == rs.T
        dr = jnp.where(rs > 0.0, jax.lax.rsqrt(rs), 0.0)           # pow(-0.5); inf -> 0
        dc = jnp.where(cs > 0.0, jax.lax.rsqrt(cs), 0.0)
        out_ref[b] = adj * dr * dc


# ------------------------------ wrapper -------------------------------------- #
def graph_learning_forward(x, params, num_heads=2, block_batch=None):
    """x: (B, L, D) -> normalized Laplacian (B, L, L).

    block_batch: batch elements per grid step.  Default ceil(B/2) keeps >= 2
    grid steps (both v7x TensorCores); on single-TC chips (v5e/v6e) pass
    block_batch=B to minimize per-step overhead.
    """
    B, L, D = x.shape
    H = params['wd'].shape[0]
    assert H % num_heads == 0

    if block_batch is None:
        block_batch = pl.cdiv(B, 2) if B > 1 else 1
    Bt = int(min(block_batch, B))
    steps = pl.cdiv(B, Bt)
    Bp = steps * Bt
    if Bp != B:
        x = jnp.pad(x, ((0, Bp - B), (0, 0), (0, 0)))

    f32 = jnp.float32
    # GRU weights gate-fused and pre-transposed: (D, 3D) with columns [r | z | n].
    wih3 = params['w_ih'].T.astype(f32)
    whh3 = params['w_hh'].T.astype(f32)
    bih3 = params['b_ih'].reshape(1, 3 * D).astype(f32)
    bhh3 = params['b_hh'].reshape(1, 3 * D).astype(f32)
    # Fused QKV: (D, 3H), columns [Q | K | V], heads contiguous inside each.
    wqkv = jnp.concatenate(
        [params['wq'].T, params['wk'].T, params['wv'].T], axis=1).astype(f32)
    bqkv = jnp.concatenate(
        [params['bq'], params['bk'], params['bv']]).reshape(1, 3 * H).astype(f32)
    wdT = params['wd'].T.astype(f32)               # (H, H)
    bd = params['bd'].reshape(1, H).astype(f32)
    lnw = params['ln_w'].reshape(1, H).astype(f32)
    lnb = params['ln_b'].reshape(1, H).astype(f32)

    kernel = functools.partial(_graph_learning_kernel,
                               num_heads=num_heads, eps=1e-12)
    w2 = lambda b: (0, 0)

    out = pl.pallas_call(
        kernel,
        out_shape=jax.ShapeDtypeStruct((Bp, L, L), f32),
        grid=(steps,),
        in_specs=[
            pl.BlockSpec((Bt, L, D), lambda b: (b, 0, 0)),     # x: Bt batch elems / step
            pl.BlockSpec((D, 3 * D), w2),                      # fused GRU input weights
            pl.BlockSpec((1, 3 * D), w2),
            pl.BlockSpec((D, 3 * D), w2),                      # fused GRU hidden weights
            pl.BlockSpec((1, 3 * D), w2),
            pl.BlockSpec((D, 3 * H), w2),                      # fused QKV weights
            pl.BlockSpec((1, 3 * H), w2),
            pl.BlockSpec((H, H), w2),                          # dense weight (transposed)
            pl.BlockSpec((1, H), w2),                          # dense bias
            pl.BlockSpec((1, H), w2),                          # LayerNorm gamma
            pl.BlockSpec((1, H), w2),                          # LayerNorm beta
        ],
        out_specs=pl.BlockSpec((Bt, L, L), lambda b: (b, 0, 0)),
        scratch_shapes=[pltpu.VMEM((Bt, L, D), jnp.float32)],  # GRU output buffer
        compiler_params=pltpu.CompilerParams(
            dimension_semantics=("parallel",)),
    )(x.astype(f32), wih3, bih3, whh3, bhh3, wqkv, bqkv, wdT, bd, lnw, lnb)
    return out[:B]


# --------------------------- pure-JAX reference ------------------------------ #
def _reference_forward(x, params, num_heads=2, eps=1e-12):
    B, L, D = x.shape
    H = params['wd'].shape[0]
    hs = H // num_heads
    w_ih, w_hh = params['w_ih'], params['w_hh']
    b_ih, b_hh = params['b_ih'], params['b_hh']

    def cell(h, xt):
        gi = xt @ w_ih.T + b_ih
        gh = h @ w_hh.T + b_hh
        i_r, i_z, i_n = jnp.split(gi, 3, axis=-1)
        h_r, h_z, h_n = jnp.split(gh, 3, axis=-1)
        r = jax.nn.sigmoid(i_r + h_r)
        z = jax.nn.sigmoid(i_z + h_z)
        n = jnp.tanh(i_n + r * h_n)
        h_new = (1.0 - z) * n + z * h
        return h_new, h_new

    _, seq = jax.lax.scan(cell, jnp.zeros((B, D), jnp.float32), jnp.swapaxes(x, 0, 1))
    gru_out = jnp.swapaxes(seq, 0, 1)                          # (B, L, D)

    def lin(y, w, b):
        return y @ w.T + b

    def heads(y):                                              # (B,L,H)->(B,nh,L,hs)
        return y.reshape(B, L, num_heads, hs).transpose(0, 2, 1, 3)

    q = heads(lin(gru_out, params['wq'], params['bq']))
    k = heads(lin(gru_out, params['wk'], params['bk']))
    v = heads(lin(gru_out, params['wv'], params['bv']))
    s = jnp.einsum('bhld,bhmd->bhlm', q, k) / math.sqrt(hs)
    p = jax.nn.softmax(s, axis=-1)
    ctx = jnp.einsum('bhlm,bhmd->bhld', p, v).transpose(0, 2, 1, 3).reshape(B, L, H)
    hid = lin(ctx, params['wd'], params['bd'])
    u = hid.mean(-1, keepdims=True)
    var = ((hid - u) ** 2).mean(-1, keepdims=True)
    hid = params['ln_w'] * ((hid - u) / jnp.sqrt(var + eps)) + params['ln_b']

    adj = jnp.maximum(hid, 0.0)
    adj = 0.5 * (adj + jnp.swapaxes(adj, 1, 2))
    rsum = adj.sum(1)                                          # (B, L)
    dinv = jnp.where(rsum > 0.0, rsum ** -0.5, 0.0)
    return adj * dinv[:, :, None] * dinv[:, None, :]


# ------------------------------ parameters ----------------------------------- #
def init_params(key, n_leads, step_len):
    D, H = step_len, n_leads
    ks = jax.random.split(key, 12)

    def u(k, shape, std):
        return jax.random.uniform(k, shape, jnp.float32, -std, std)

    std_gru = 1.0 / math.sqrt(D)
    std_qkv = 1.0 / math.sqrt(D)
    std_dense = 1.0 / math.sqrt(H)
    return dict(
        w_ih=u(ks[0], (3 * D, D), std_gru),   # GRU weight_ih_l0 (r|z|n rows)
        w_hh=u(ks[1], (3 * D, D), std_gru),   # GRU weight_hh_l0
        b_ih=u(ks[2], (3 * D,), std_gru),
        b_hh=u(ks[3], (3 * D,), std_gru),
        wq=u(ks[4], (H, D), std_qkv), bq=u(ks[5], (H,), std_qkv),
        wk=u(ks[6], (H, D), std_qkv), bk=u(ks[7], (H,), std_qkv),
        wv=u(ks[8], (H, D), std_qkv), bv=u(ks[9], (H,), std_qkv),
        wd=u(ks[10], (H, H), std_dense), bd=u(ks[11], (H,), std_dense),
        ln_w=jnp.ones((H,), jnp.float32),
        ln_b=jnp.zeros((H,), jnp.float32),
    )


if __name__ == "__main__":
    # batch=4, n_leads=8 (attention hidden, divisible by 2 heads),
    # step_len=16 (GRU input/hidden size).  seq_len in __init__ is unused by forward.
    B, L, D = 4, 8, 16
    key = jax.random.PRNGKey(0)
    k_x, k_p = jax.random.split(key)
    x = jax.random.normal(k_x, (B, L, D), dtype=jnp.float32)
    params = init_params(k_p, n_leads=L, step_len=D)

    lap = graph_learning_forward(x, params)          # default: 2 grid steps of Bt=2
    lap = jax.block_until_ready(lap)
    ref = jax.block_until_ready(_reference_forward(x, params))

    assert lap.shape == (B, L, L)
    assert bool(jnp.all(jnp.isfinite(lap)))
    max_err = float(jnp.max(jnp.abs(lap - ref)))
    assert bool(jnp.allclose(lap, ref, atol=2e-2, rtol=2e-2)), max_err
    print("KERNEL_OK")
</pallas_src>

<mosaic_0001>
module attributes {stable_mosaic.version = 11 : i64} {
  func.func @_graph_learning_kernel(%arg0: i32, %arg1: memref<2x8x16xf32, #tpu.memory_space<vmem>>, %arg2: memref<16x48xf32, #tpu.memory_space<vmem>>, %arg3: memref<1x48xf32, #tpu.memory_space<vmem>>, %arg4: memref<16x48xf32, #tpu.memory_space<vmem>>, %arg5: memref<1x48xf32, #tpu.memory_space<vmem>>, %arg6: memref<16x24xf32, #tpu.memory_space<vmem>>, %arg7: memref<1x24xf32, #tpu.memory_space<vmem>>, %arg8: memref<8x8xf32, #tpu.memory_space<vmem>>, %arg9: memref<1x8xf32, #tpu.memory_space<vmem>>, %arg10: memref<1x8xf32, #tpu.memory_space<vmem>>, %arg11: memref<1x8xf32, #tpu.memory_space<vmem>>, %arg12: memref<2x8x8xf32, #tpu.memory_space<vmem>>, %arg13: memref<2x8x16xf32, #tpu.memory_space<vmem>>) attributes {dimension_semantics = [#tpu.dimension_semantics<parallel>], iteration_bounds = array<i64: 2>, scalar_prefetch = 0 : i64, scratch_operands = 1 : i64, tpu.core_type = #tpu.core_type<tc>, window_params = [{transform_indices = @transform_0, window_bounds = array<i64: 2, 8, 16>}, {pipeline_mode = #tpu.pipeline_mode<synchronous>, transform_indices = @transform_1, window_bounds = array<i64: 16, 48>}, {pipeline_mode = #tpu.pipeline_mode<synchronous>, transform_indices = @transform_2, window_bounds = array<i64: 1, 48>}, {pipeline_mode = #tpu.pipeline_mode<synchronous>, transform_indices = @transform_3, window_bounds = array<i64: 16, 48>}, {pipeline_mode = #tpu.pipeline_mode<synchronous>, transform_indices = @transform_4, window_bounds = array<i64: 1, 48>}, {pipeline_mode = #tpu.pipeline_mode<synchronous>, transform_indices = @transform_5, window_bounds = array<i64: 16, 24>}, {pipeline_mode = #tpu.pipeline_mode<synchronous>, transform_indices = @transform_6, window_bounds = array<i64: 1, 24>}, {pipeline_mode = #tpu.pipeline_mode<synchronous>, transform_indices = @transform_7, window_bounds = array<i64: 8, 8>}, {pipeline_mode = #tpu.pipeline_mode<synchronous>, transform_indices = @transform_8, window_bounds = array<i64: 1, 8>}, {pipeline_mode = #tpu.pipeline_mode<synchronous>, transform_indices = @transform_9, window_bounds = array<i64: 1, 8>}, {pipeline_mode = #tpu.pipeline_mode<synchronous>, transform_indices = @transform_10, window_bounds = array<i64: 1, 8>}, {transform_indices = @transform_11, window_bounds = array<i64: 2, 8, 8>}]} {
    %c0 = arith.constant 0 : index
    %c0_0 = arith.constant 0 : index
    %c0_1 = arith.constant 0 : index
    %0 = vector.load %arg1[%c0, %c0_0, %c0_1] : memref<2x8x16xf32, #tpu.memory_space<vmem>>, vector<2x8x16xf32>
    %1 = vector.shape_cast %0 : vector<2x8x16xf32> to vector<16x16xf32>
    %c0_2 = arith.constant 0 : index
    %c0_3 = arith.constant 0 : index
    %2 = vector.load %arg2[%c0_2, %c0_3] : memref<16x48xf32, #tpu.memory_space<vmem>>, vector<16x48xf32>
    %cst = arith.constant dense<0.000000e+00> : vector<16x48xf32>
    %3 = tpu.matmul %1, %2, %cst {dimension_numbers = #tpu.dot_dimension_numbers<[1], [0], [0], [1], [0, 0, 1, 1], [], []>} : vector<16x16xf32>, vector<16x48xf32>, vector<16x48xf32> -> vector<16x48xf32>
    %c0_4 = arith.constant 0 : index
    %c0_5 = arith.constant 0 : index
    %4 = vector.load %arg3[%c0_4, %c0_5] : memref<1x48xf32, #tpu.memory_space<vmem>>, vector<1x48xf32>
    %5 = vector.broadcast %4 : vector<1x48xf32> to vector<16x48xf32>
    %6 = arith.addf %3, %5 : vector<16x48xf32>
    %7 = vector.shape_cast %6 : vector<16x48xf32> to vector<2x8x48xf32>
    %c0_6 = arith.constant 0 : index
    %c0_7 = arith.constant 0 : index
    %8 = vector.load %arg4[%c0_6, %c0_7] : memref<16x48xf32, #tpu.memory_space<vmem>>, vector<16x48xf32>
    %c0_8 = arith.constant 0 : index
    %c0_9 = arith.constant 0 : index
    %9 = vector.load %arg5[%c0_8, %c0_9] : memref<1x48xf32, #tpu.memory_space<vmem>>, vector<1x48xf32>
    %cst_10 = arith.constant 0.000000e+00 : f32
    %10 = vector.broadcast %cst_10 : f32 to vector<2x16xf32>
    %cst_11 = arith.constant dense<0.000000e+00> : vector<2x48xf32>
    %11 = tpu.matmul %10, %8, %cst_11 {dimension_numbers = #tpu.dot_dimension_numbers<[1], [0], [0], [1], [0, 0, 1, 1], [], []>} : vector<2x16xf32>, vector<16x48xf32>, vector<2x48xf32> -> vector<2x48xf32>
    %12 = vector.broadcast %9 : vector<1x48xf32> to vector<2x48xf32>
    %13 = arith.addf %11, %12 : vector<2x48xf32>
    %14 = vector.extract_strided_slice %7 {offsets = [0, 0, 0], sizes = [2, 1, 48], strides = [1, 1, 1]} : vector<2x8x48xf32> to vector<2x1x48xf32>
    %15 = vector.shape_cast %14 : vector<2x1x48xf32> to vector<2x48xf32>
    %16 = vector.extract_strided_slice %15 {offsets = [0, 0], sizes = [2, 32], strides = [1, 1]} : vector<2x48xf32> to vector<2x32xf32>
    %17 = vector.extract_strided_slice %13 {offsets = [0, 0], sizes = [2, 32], strides = [1, 1]} : vector<2x48xf32> to vector<2x32xf32>
    %18 = arith.addf %16, %17 : vector<2x32xf32>
    %19 = arith.negf %18 : vector<2x32xf32>
    %20 = math.exp %19 : vector<2x32xf32>
    %cst_12 = arith.constant 1.000000e+00 : f32
    %21 = vector.broadcast %cst_12 : f32 to vector<2x32xf32>
    %22 = arith.addf %21, %20 : vector<2x32xf32>
    %23 = arith.divf %21, %22 : vector<2x32xf32>
    %24 = vector.extract_strided_slice %23 {offsets = [0, 0], sizes = [2, 16], strides = [1, 1]} : vector<2x32xf32> to vector<2x16xf32>
    %25 = vector.extract_strided_slice %23 {offsets = [0, 16], sizes = [2, 16], strides = [1, 1]} : vector<2x32xf32> to vector<2x16xf32>
    %26 = vector.extract_strided_slice %15 {offsets = [0, 32], sizes = [2, 16], strides = [1, 1]} : vector<2x48xf32> to vector<2x16xf32>
    %27 = vector.extract_strided_slice %13 {offsets = [0, 32], sizes = [2, 16], strides = [1, 1]} : vector<2x48xf32> to vector<2x16xf32>
    %28 = arith.mulf %24, %27 : vector<2x16xf32>
    %29 = arith.addf %26, %28 : vector<2x16xf32>
    %30 = math.tanh %29 : vector<2x16xf32>
    %cst_13 = arith.constant 1.000000e+00 : f32
    %31 = vector.broadcast %cst_13 : f32 to vector<2x16xf32>
    %32 = arith.subf %31, %25 : vector<2x16xf32>
    %33 = arith.mulf %32, %30 : vector<2x16xf32>
    %34 = arith.mulf %25, %10 : vector<2x16xf32>
    %35 = arith.addf %33, %34 : vector<2x16xf32>
    %36 = vector.shape_cast %35 : vector<2x16xf32> to vector<2x1x16xf32>
    %c0_14 = arith.constant 0 : index
    %c0_15 = arith.constant 0 : index
    %c0_16 = arith.constant 0 : index
    %37 = vector.load %arg13[%c0_14, %c0_15, %c0_16] : memref<2x8x16xf32, #tpu.memory_space<vmem>>, vector<2x1x16xf32>
    tpu.vector_store %arg13[%c0_14, %c0_15, %c0_16], %36 {strides = array<i32>} : memref<2x8x16xf32, #tpu.memory_space<vmem>>, vector<2x1x16xf32>,
    %cst_17 = arith.constant dense<0.000000e+00> : vector<2x48xf32>
    %38 = tpu.matmul %35, %8, %cst_17 {dimension_numbers = #tpu.dot_dimension_numbers<[1], [0], [0], [1], [0, 0, 1, 1], [], []>} : vector<2x16xf32>, vector<16x48xf32>, vector<2x48xf32> -> vector<2x48xf32>
    %39 = vector.broadcast %9 : vector<1x48xf32> to vector<2x48xf32>
    %40 = arith.addf %38, %39 : vector<2x48xf32>
    %41 = vector.extract_strided_slice %7 {offsets = [0, 1, 0], sizes = [2, 1, 48], strides = [1, 1, 1]} : vector<2x8x48xf32> to vector<2x1x48xf32>
    %42 = vector.shape_cast %41 : vector<2x1x48xf32> to vector<2x48xf32>
    %43 = vector.extract_strided_slice %42 {offsets = [0, 0], sizes = [2, 32], strides = [1, 1]} : vector<2x48xf32> to vector<2x32xf32>
    %44 = vector.extract_strided_slice %40 {offsets = [0, 0], sizes = [2, 32], strides = [1, 1]} : vector<2x48xf32> to vector<2x32xf32>
    %45 = arith.addf %43, %44 : vector<2x32xf32>
    %46 = arith.negf %45 : vector<2x32xf32>
    %47 = math.exp %46 : vector<2x32xf32>
    %cst_18 = arith.constant 1.000000e+00 : f32
    %48 = vector.broadcast %cst_18 : f32 to vector<2x32xf32>
    %49 = arith.addf %48, %47 : vector<2x32xf32>
    %50 = arith.divf %48, %49 : vector<2x32xf32>
    %51 = vector.extract_strided_slice %50 {offsets = [0, 0], sizes = [2, 16], strides = [1, 1]} : vector<2x32xf32> to vector<2x16xf32>
    %52 = vector.extract_strided_slice %50 {offsets = [0, 16], sizes = [2, 16], strides = [1, 1]} : vector<2x32xf32> to vector<2x16xf32>
    %53 = vector.extract_strided_slice %42 {offsets = [0, 32], sizes = [2, 16], strides = [1, 1]} : vector<2x48xf32> to vector<2x16xf32>
    %54 = vector.extract_strided_slice %40 {offsets = [0, 32], sizes = [2, 16], strides = [1, 1]} : vector<2x48xf32> to vector<2x16xf32>
    %55 = arith.mulf %51, %54 : vector<2x16xf32>
    %56 = arith.addf %53, %55 : vector<2x16xf32>
    %57 = math.tanh %56 : vector<2x16xf32>
    %cst_19 = arith.constant 1.000000e+00 : f32
    %58 = vector.broadcast %cst_19 : f32 to vector<2x16xf32>
    %59 = arith.subf %58, %52 : vector<2x16xf32>
    %60 = arith.mulf %59, %57 : vector<2x16xf32>
    %61 = arith.mulf %52, %35 : vector<2x16xf32>
    %62 = arith.addf %60, %61 : vector<2x16xf32>
    %63 = vector.shape_cast %62 : vector<2x16xf32> to vector<2x1x16xf32>
    %c0_20 = arith.constant 0 : index
    %c1 = arith.constant 1 : index
    %c0_21 = arith.constant 0 : index
    %64 = vector.load %arg13[%c0_20, %c1, %c0_21] : memref<2x8x16xf32, #tpu.memory_space<vmem>>, vector<2x1x16xf32>
    tpu.vector_store %arg13[%c0_20, %c1, %c0_21], %63 {strides = array<i32>} : memref<2x8x16xf32, #tpu.memory_space<vmem>>, vector<2x1x16xf32>,
    %cst_22 = arith.constant dense<0.000000e+00> : vector<2x48xf32>
    %65 = tpu.matmul %62, %8, %cst_22 {dimension_numbers = #tpu.dot_dimension_numbers<[1], [0], [0], [1], [0, 0, 1, 1], [], []>} : vector<2x16xf32>, vector<16x48xf32>, vector<2x48xf32> -> vector<2x48xf32>
    %66 = vector.broadcast %9 : vector<1x48xf32> to vector<2x48xf32>
    %67 = arith.addf %65, %66 : vector<2x48xf32>
    %68 = vector.extract_strided_slice %7 {offsets = [0, 2, 0], sizes = [2, 1, 48], strides = [1, 1, 1]} : vector<2x8x48xf32> to vector<2x1x48xf32>
    %69 = vector.shape_cast %68 : vector<2x1x48xf32> to vector<2x48xf32>
    %70 = vector.extract_strided_slice %69 {offsets = [0, 0], sizes = [2, 32], strides = [1, 1]} : vector<2x48xf32> to vector<2x32xf32>
    %71 = vector.extract_strided_slice %67 {offsets = [0, 0], sizes = [2, 32], strides = [1, 1]} : vector<2x48xf32> to vector<2x32xf32>
    %72 = arith.addf %70, %71 : vector<2x32xf32>
    %73 = arith.negf %72 : vector<2x32xf32>
    %74 = math.exp %73 : vector<2x32xf32>
    %cst_23 = arith.constant 1.000000e+00 : f32
    %75 = vector.broadcast %cst_23 : f32 to vector<2x32xf32>
    %76 = arith.addf %75, %74 : vector<2x32xf32>
    %77 = arith.divf %75, %76 : vector<2x32xf32>
    %78 = vector.extract_strided_slice %77 {offsets = [0, 0], sizes = [2, 16], strides = [1, 1]} : vector<2x32xf32> to vector<2x16xf32>
    %79 = vector.extract_strided_slice %77 {offsets = [0, 16], sizes = [2, 16], strides = [1, 1]} : vector<2x32xf32> to vector<2x16xf32>
    %80 = vector.extract_strided_slice %69 {offsets = [0, 32], sizes = [2, 16], strides = [1, 1]} : vector<2x48xf32> to vector<2x16xf32>
    %81 = vector.extract_strided_slice %67 {offsets = [0, 32], sizes = [2, 16], strides = [1, 1]} : vector<2x48xf32> to vector<2x16xf32>
    %82 = arith.mulf %78, %81 : vector<2x16xf32>
    %83 = arith.addf %80, %82 : vector<2x16xf32>
    %84 = math.tanh %83 : vector<2x16xf32>
    %cst_24 = arith.constant 1.000000e+00 : f32
    %85 = vector.broadcast %cst_24 : f32 to vector<2x16xf32>
    %86 = arith.subf %85, %79 : vector<2x16xf32>
    %87 = arith.mulf %86, %84 : vector<2x16xf32>
    %88 = arith.mulf %79, %62 : vector<2x16xf32>
    %89 = arith.addf %87, %88 : vector<2x16xf32>
    %90 = vector.shape_cast %89 : vector<2x16xf32> to vector<2x1x16xf32>
    %c0_25 = arith.constant 0 : index
    %c2 = arith.constant 2 : index
    %c0_26 = arith.constant 0 : index
    %91 = vector.load %arg13[%c0_25, %c2, %c0_26] : memref<2x8x16xf32, #tpu.memory_space<vmem>>, vector<2x1x16xf32>
    tpu.vector_store %arg13[%c0_25, %c2, %c0_26], %90 {strides = array<i32>} : memref<2x8x16xf32, #tpu.memory_space<vmem>>, vector<2x1x16xf32>,
    %cst_27 = arith.constant dense<0.000000e+00> : vector<2x48xf32>
    %92 = tpu.matmul %89, %8, %cst_27 {dimension_numbers = #tpu.dot_dimension_numbers<[1], [0], [0], [1], [0, 0, 1, 1], [], []>} : vector<2x16xf32>, vector<16x48xf32>, vector<2x48xf32> -> vector<2x48xf32>
    %93 = vector.broadcast %9 : vector<1x48xf32> to vector<2x48xf32>
    %94 = arith.addf %92, %93 : vector<2x48xf32>
    %95 = vector.extract_strided_slice %7 {offsets = [0, 3, 0], sizes = [2, 1, 48], strides = [1, 1, 1]} : vector<2x8x48xf32> to vector<2x1x48xf32>
    %96 = vector.shape_cast %95 : vector<2x1x48xf32> to vector<2x48xf32>
    %97 = vector.extract_strided_slice %96 {offsets = [0, 0], sizes = [2, 32], strides = [1, 1]} : vector<2x48xf32> to vector<2x32xf32>
    %98 = vector.extract_strided_slice %94 {offsets = [0, 0], sizes = [2, 32], strides = [1, 1]} : vector<2x48xf32> to vector<2x32xf32>
    %99 = arith.addf %97, %98 : vector<2x32xf32>
    %100 = arith.negf %99 : vector<2x32xf32>
    %101 = math.exp %100 : vector<2x32xf32>
    %cst_28 = arith.constant 1.000000e+00 : f32
    %102 = vector.broadcast %cst_28 : f32 to vector<2x32xf32>
    %103 = arith.addf %102, %101 : vector<2x32xf32>
    %104 = arith.divf %102, %103 : vector<2x32xf32>
    %105 = vector.extract_strided_slice %104 {offsets = [0, 0], sizes = [2, 16], strides = [1, 1]} : vector<2x32xf32> to vector<2x16xf32>
    %106 = vector.extract_strided_slice %104 {offsets = [0, 16], sizes = [2, 16], strides = [1, 1]} : vector<2x32xf32> to vector<2x16xf32>
    %107 = vector.extract_strided_slice %96 {offsets = [0, 32], sizes = [2, 16], strides = [1, 1]} : vector<2x48xf32> to vector<2x16xf32>
    %108 = vector.extract_strided_slice %94 {offsets = [0, 32], sizes = [2, 16], strides = [1, 1]} : vector<2x48xf32> to vector<2x16xf32>
    %109 = arith.mulf %105, %108 : vector<2x16xf32>
    %110 = arith.addf %107, %109 : vector<2x16xf32>
    %111 = math.tanh %110 : vector<2x16xf32>
    %cst_29 = arith.constant 1.000000e+00 : f32
    %112 = vector.broadcast %cst_29 : f32 to vector<2x16xf32>
    %113 = arith.subf %112, %106 : vector<2x16xf32>
    %114 = arith.mulf %113, %111 : vector<2x16xf32>
    %115 = arith.mulf %106, %89 : vector<2x16xf32>
    %116 = arith.addf %114, %115 : vector<2x16xf32>
    %117 = vector.shape_cast %116 : vector<2x16xf32> to vector<2x1x16xf32>
    %c0_30 = arith.constant 0 : index
    %c3 = arith.constant 3 : index
    %c0_31 = arith.constant 0 : index
    %118 = vector.load %arg13[%c0_30, %c3, %c0_31] : memref<2x8x16xf32, #tpu.memory_space<vmem>>, vector<2x1x16xf32>
    tpu.vector_store %arg13[%c0_30, %c3, %c0_31], %117 {strides = array<i32>} : memref<2x8x16xf32, #tpu.memory_space<vmem>>, vector<2x1x16xf32>,
    %cst_32 = arith.constant dense<0.000000e+00> : vector<2x48xf32>
    %119 = tpu.matmul %116, %8, %cst_32 {dimension_numbers = #tpu.dot_dimension_numbers<[1], [0], [0], [1], [0, 0, 1, 1], [], []>} : vector<2x16xf32>, vector<16x48xf32>, vector<2x48xf32> -> vector<2x48xf32>
    %120 = vector.broadcast %9 : vector<1x48xf32> to vector<2x48xf32>
    %121 = arith.addf %119, %120 : vector<2x48xf32>
    %122 = vector.extract_strided_slice %7 {offsets = [0, 4, 0], sizes = [2, 1, 48], strides = [1, 1, 1]} : vector<2x8x48xf32> to vector<2x1x48xf32>
    %123 = vector.shape_cast %122 : vector<2x1x48xf32> to vector<2x48xf32>
    %124 = vector.extract_strided_slice %123 {offsets = [0, 0], sizes = [2, 32], strides = [1, 1]} : vector<2x48xf32> to vector<2x32xf32>
    %125 = vector.extract_strided_slice %121 {offsets = [0, 0], sizes = [2, 32], strides = [1, 1]} : vector<2x48xf32> to vector<2x32xf32>
    %126 = arith.addf %124, %125 : vector<2x32xf32>
    %127 = arith.negf %126 : vector<2x32xf32>
    %128 = math.exp %127 : vector<2x32xf32>
    %cst_33 = arith.constant 1.000000e+00 : f32
    %129 = vector.broadcast %cst_33 : f32 to vector<2x32xf32>
    %130 = arith.addf %129, %128 : vector<2x32xf32>
    %131 = arith.divf %129, %130 : vector<2x32xf32>
    %132 = vector.extract_strided_slice %131 {offsets = [0, 0], sizes = [2, 16], strides = [1, 1]} : vector<2x32xf32> to vector<2x16xf32>
    %133 = vector.extract_strided_slice %131 {offsets = [0, 16], sizes = [2, 16], strides = [1, 1]} : vector<2x32xf32> to vector<2x16xf32>
    %134 = vector.extract_strided_slice %123 {offsets = [0, 32], sizes = [2, 16], strides = [1, 1]} : vector<2x48xf32> to vector<2x16xf32>
    %135 = vector.extract_strided_slice %121 {offsets = [0, 32], sizes = [2, 16], strides = [1, 1]} : vector<2x48xf32> to vector<2x16xf32>
    %136 = arith.mulf %132, %135 : vector<2x16xf32>
    %137 = arith.addf %134, %136 : vector<2x16xf32>
    %138 = math.tanh %137 : vector<2x16xf32>
    %cst_34 = arith.constant 1.000000e+00 : f32
    %139 = vector.broadcast %cst_34 : f32 to vector<2x16xf32>
    %140 = arith.subf %139, %133 : vector<2x16xf32>
    %141 = arith.mulf %140, %138 : vector<2x16xf32>
    %142 = arith.mulf %133, %116 : vector<2x16xf32>
    %143 = arith.addf %141, %142 : vector<2x16xf32>
    %144 = vector.shape_cast %143 : vector<2x16xf32> to vector<2x1x16xf32>
    %c0_35 = arith.constant 0 : index
    %c4 = arith.constant 4 : index
    %c0_36 = arith.constant 0 : index
    %145 = vector.load %arg13[%c0_35, %c4, %c0_36] : memref<2x8x16xf32, #tpu.memory_space<vmem>>, vector<2x1x16xf32>
    tpu.vector_store %arg13[%c0_35, %c4, %c0_36], %144 {strides = array<i32>} : memref<2x8x16xf32, #tpu.memory_space<vmem>>, vector<2x1x16xf32>,
    %cst_37 = arith.constant dense<0.000000e+00> : vector<2x48xf32>
    %146 = tpu.matmul %143, %8, %cst_37 {dimension_numbers = #tpu.dot_dimension_numbers<[1], [0], [0], [1], [0, 0, 1, 1], [], []>} : vector<2x16xf32>, vector<16x48xf32>, vector<2x48xf32> -> vector<2x48xf32>
    %147 = vector.broadcast %9 : vector<1x48xf32> to vector<2x48xf32>
    %148 = arith.addf %146, %147 : vector<2x48xf32>
    %149 = vector.extract_strided_slice %7 {offsets = [0, 5, 0], sizes = [2, 1, 48], strides = [1, 1, 1]} : vector<2x8x48xf32> to vector<2x1x48xf32>
    %150 = vector.shape_cast %149 : vector<2x1x48xf32> to vector<2x48xf32>
    %151 = vector.extract_strided_slice %150 {offsets = [0, 0], sizes = [2, 32], strides = [1, 1]} : vector<2x48xf32> to vector<2x32xf32>
    %152 = vector.extract_strided_slice %148 {offsets = [0, 0], sizes = [2, 32], strides = [1, 1]} : vector<2x48xf32> to vector<2x32xf32>
    %153 = arith.addf %151, %152 : vector<2x32xf32>
    %154 = arith.negf %153 : vector<2x32xf32>
    %155 = math.exp %154 : vector<2x32xf32>
    %cst_38 = arith.constant 1.000000e+00 : f32
    %156 = vector.broadcast %cst_38 : f32 to vector<2x32xf32>
    %157 = arith.addf %156, %155 : vector<2x32xf32>
    %158 = arith.divf %156, %157 : vector<2x32xf32>
    %159 = vector.extract_strided_slice %158 {offsets = [0, 0], sizes = [2, 16], strides = [1, 1]} : vector<2x32xf32> to vector<2x16xf32>
    %160 = vector.extract_strided_slice %158 {offsets = [0, 16], sizes = [2, 16], strides = [1, 1]} : vector<2x32xf32> to vector<2x16xf32>
    %161 = vector.extract_strided_slice %150 {offsets = [0, 32], sizes = [2, 16], strides = [1, 1]} : vector<2x48xf32> to vector<2x16xf32>
    %162 = vector.extract_strided_slice %148 {offsets = [0, 32], sizes = [2, 16], strides = [1, 1]} : vector<2x48xf32> to vector<2x16xf32>
    %163 = arith.mulf %159, %162 : vector<2x16xf32>
    %164 = arith.addf %161, %163 : vector<2x16xf32>
    %165 = math.tanh %164 : vector<2x16xf32>
    %cst_39 = arith.constant 1.000000e+00 : f32
    %166 = vector.broadcast %cst_39 : f32 to vector<2x16xf32>
    %167 = arith.subf %166, %160 : vector<2x16xf32>
    %168 = arith.mulf %167, %165 : vector<2x16xf32>
    %169 = arith.mulf %160, %143 : vector<2x16xf32>
    %170 = arith.addf %168, %169 : vector<2x16xf32>
    %171 = vector.shape_cast %170 : vector<2x16xf32> to vector<2x1x16xf32>
    %c0_40 = arith.constant 0 : index
    %c5 = arith.constant 5 : index
    %c0_41 = arith.constant 0 : index
    %172 = vector.load %arg13[%c0_40, %c5, %c0_41] : memref<2x8x16xf32, #tpu.memory_space<vmem>>, vector<2x1x16xf32>
    tpu.vector_store %arg13[%c0_40, %c5, %c0_41], %171 {strides = array<i32>} : memref<2x8x16xf32, #tpu.memory_space<vmem>>, vector<2x1x16xf32>,
    %cst_42 = arith.constant dense<0.000000e+00> : vector<2x48xf32>
    %173 = tpu.matmul %170, %8, %cst_42 {dimension_numbers = #tpu.dot_dimension_numbers<[1], [0], [0], [1], [0, 0, 1, 1], [], []>} : vector<2x16xf32>, vector<16x48xf32>, vector<2x48xf32> -> vector<2x48xf32>
    %174 = vector.broadcast %9 : vector<1x48xf32> to vector<2x48xf32>
    %175 = arith.addf %173, %174 : vector<2x48xf32>
    %176 = vector.extract_strided_slice %7 {offsets = [0, 6, 0], sizes = [2, 1, 48], strides = [1, 1, 1]} : vector<2x8x48xf32> to vector<2x1x48xf32>
    %177 = vector.shape_cast %176 : vector<2x1x48xf32> to vector<2x48xf32>
    %178 = vector.extract_strided_slice %177 {offsets = [0, 0], sizes = [2, 32], strides = [1, 1]} : vector<2x48xf32> to vector<2x32xf32>
    %179 = vector.extract_strided_slice %175 {offsets = [0, 0], sizes = [2, 32], strides = [1, 1]} : vector<2x48xf32> to vector<2x32xf32>
    %180 = arith.addf %178, %179 : vector<2x32xf32>
    %181 = arith.negf %180 : vector<2x32xf32>
    %182 = math.exp %181 : vector<2x32xf32>
    %cst_43 = arith.constant 1.000000e+00 : f32
    %183 = vector.broadcast %cst_43 : f32 to vector<2x32xf32>
    %184 = arith.addf %183, %182 : vector<2x32xf32>
    %185 = arith.divf %183, %184 : vector<2x32xf32>
    %186 = vector.extract_strided_slice %185 {offsets = [0, 0], sizes = [2, 16], strides = [1, 1]} : vector<2x32xf32> to vector<2x16xf32>
    %187 = vector.extract_strided_slice %185 {offsets = [0, 16], sizes = [2, 16], strides = [1, 1]} : vector<2x32xf32> to vector<2x16xf32>
    %188 = vector.extract_strided_slice %177 {offsets = [0, 32], sizes = [2, 16], strides = [1, 1]} : vector<2x48xf32> to vector<2x16xf32>
    %189 = vector.extract_strided_slice %175 {offsets = [0, 32], sizes = [2, 16], strides = [1, 1]} : vector<2x48xf32> to vector<2x16xf32>
    %190 = arith.mulf %186, %189 : vector<2x16xf32>
    %191 = arith.addf %188, %190 : vector<2x16xf32>
    %192 = math.tanh %191 : vector<2x16xf32>
    %cst_44 = arith.constant 1.000000e+00 : f32
    %193 = vector.broadcast %cst_44 : f32 to vector<2x16xf32>
    %194 = arith.subf %193, %187 : vector<2x16xf32>
    %195 = arith.mulf %194, %192 : vector<2x16xf32>
    %196 = arith.mulf %187, %170 : vector<2x16xf32>
    %197 = arith.addf %195, %196 : vector<2x16xf32>
    %198 = vector.shape_cast %197 : vector<2x16xf32> to vector<2x1x16xf32>
    %c0_45 = arith.constant 0 : index
    %c6 = arith.constant 6 : index
    %c0_46 = arith.constant 0 : index
    %199 = vector.load %arg13[%c0_45, %c6, %c0_46] : memref<2x8x16xf32, #tpu.memory_space<vmem>>, vector<2x1x16xf32>
    tpu.vector_store %arg13[%c0_45, %c6, %c0_46], %198 {strides = array<i32>} : memref<2x8x16xf32, #tpu.memory_space<vmem>>, vector<2x1x16xf32>,
    %cst_47 = arith.constant dense<0.000000e+00> : vector<2x48xf32>
    %200 = tpu.matmul %197, %8, %cst_47 {dimension_numbers = #tpu.dot_dimension_numbers<[1], [0], [0], [1], [0, 0, 1, 1], [], []>} : vector<2x16xf32>, vector<16x48xf32>, vector<2x48xf32> -> vector<2x48xf32>
    %201 = vector.broadcast %9 : vector<1x48xf32> to vector<2x48xf32>
    %202 = arith.addf %200, %201 : vector<2x48xf32>
    %203 = vector.extract_strided_slice %7 {offsets = [0, 7, 0], sizes = [2, 1, 48], strides = [1, 1, 1]} : vector<2x8x48xf32> to vector<2x1x48xf32>
    %204 = vector.shape_cast %203 : vector<2x1x48xf32> to vector<2x48xf32>
    %205 = vector.extract_strided_slice %204 {offsets = [0, 0], sizes = [2, 32], strides = [1, 1]} : vector<2x48xf32> to vector<2x32xf32>
    %206 = vector.extract_strided_slice %202 {offsets = [0, 0], sizes = [2, 32], strides = [1, 1]} : vector<2x48xf32> to vector<2x32xf32>
    %207 = arith.addf %205, %206 : vector<2x32xf32>
    %208 = arith.negf %207 : vector<2x32xf32>
    %209 = math.exp %208 : vector<2x32xf32>
    %cst_48 = arith.constant 1.000000e+00 : f32
    %210 = vector.broadcast %cst_48 : f32 to vector<2x32xf32>
    %211 = arith.addf %210, %209 : vector<2x32xf32>
    %212 = arith.divf %210, %211 : vector<2x32xf32>
    %213 = vector.extract_strided_slice %212 {offsets = [0, 0], sizes = [2, 16], strides = [1, 1]} : vector<2x32xf32> to vector<2x16xf32>
    %214 = vector.extract_strided_slice %212 {offsets = [0, 16], sizes = [2, 16], strides = [1, 1]} : vector<2x32xf32> to vector<2x16xf32>
    %215 = vector.extract_strided_slice %204 {offsets = [0, 32], sizes = [2, 16], strides = [1, 1]} : vector<2x48xf32> to vector<2x16xf32>
    %216 = vector.extract_strided_slice %202 {offsets = [0, 32], sizes = [2, 16], strides = [1, 1]} : vector<2x48xf32> to vector<2x16xf32>
    %217 = arith.mulf %213, %216 : vector<2x16xf32>
    %218 = arith.addf %215, %217 : vector<2x16xf32>
    %219 = math.tanh %218 : vector<2x16xf32>
    %cst_49 = arith.constant 1.000000e+00 : f32
    %220 = vector.broadcast %cst_49 : f32 to vector<2x16xf32>
    %221 = arith.subf %220, %214 : vector<2x16xf32>
    %222 = arith.mulf %221, %219 : vector<2x16xf32>
    %223 = arith.mulf %214, %197 : vector<2x16xf32>
    %224 = arith.addf %222, %223 : vector<2x16xf32>
    %225 = vector.shape_cast %224 : vector<2x16xf32> to vector<2x1x16xf32>
    %c0_50 = arith.constant 0 : index
    %c7 = arith.constant 7 : index
    %c0_51 = arith.constant 0 : index
    %226 = vector.load %arg13[%c0_50, %c7, %c0_51] : memref<2x8x16xf32, #tpu.memory_space<vmem>>, vector<2x1x16xf32>
    tpu.vector_store %arg13[%c0_50, %c7, %c0_51], %225 {strides = array<i32>} : memref<2x8x16xf32, #tpu.memory_space<vmem>>, vector<2x1x16xf32>,
    %c0_52 = arith.constant 0 : index
    %c0_53 = arith.constant 0 : index
    %c0_54 = arith.constant 0 : index
    %227 = vector.load %arg13[%c0_52, %c0_53, %c0_54] : memref<2x8x16xf32, #tpu.memory_space<vmem>>, vector<2x8x16xf32>
    %228 = vector.shape_cast %227 : vector<2x8x16xf32> to vector<16x16xf32>
    %c0_55 = arith.constant 0 : index
    %c0_56 = arith.constant 0 : index
    %229 = vector.load %arg6[%c0_55, %c0_56] : memref<16x24xf32, #tpu.memory_space<vmem>>, vector<16x24xf32>
    %cst_57 = arith.constant dense<0.000000e+00> : vector<16x24xf32>
    %230 = tpu.matmul %228, %229, %cst_57 {dimension_numbers = #tpu.dot_dimension_numbers<[1], [0], [0], [1], [0, 0, 1, 1], [], []>} : vector<16x16xf32>, vector<16x24xf32>, vector<16x24xf32> -> vector<16x24xf32>
    %c0_58 = arith.constant 0 : index
    %c0_59 = arith.constant 0 : index
    %231 = vector.load %arg7[%c0_58, %c0_59] : memref<1x24xf32, #tpu.memory_space<vmem>>, vector<1x24xf32>
    %232 = vector.broadcast %231 : vector<1x24xf32> to vector<16x24xf32>
    %233 = arith.addf %230, %232 : vector<16x24xf32>
    %234 = vector.shape_cast %233 : vector<16x24xf32> to vector<2x8x24xf32>
    %235 = vector.extract_strided_slice %234 {offsets = [0, 0, 0], sizes = [2, 8, 4], strides = [1, 1, 1]} : vector<2x8x24xf32> to vector<2x8x4xf32>
    %236 = vector.extract_strided_slice %234 {offsets = [0, 0, 8], sizes = [2, 8, 4], strides = [1, 1, 1]} : vector<2x8x24xf32> to vector<2x8x4xf32>
    %237 = vector.extract_strided_slice %234 {offsets = [0, 0, 16], sizes = [2, 8, 4], strides = [1, 1, 1]} : vector<2x8x24xf32> to vector<2x8x4xf32>
    "tpu.trace_start"() <{level = 10 : i32, message = "bld,bmd->blm"}> : () -> ()
    %cst_60 = arith.constant dense<0.000000e+00> : vector<2x8x8xf32>
    %238 = tpu.matmul %235, %236, %cst_60 {dimension_numbers = #tpu.dot_dimension_numbers<[2], [2], [1], [1], [0, 0, 0, 1, 1, 1], [0], [0]>} : vector<2x8x4xf32>, vector<2x8x4xf32>, vector<2x8x8xf32> -> vector<2x8x8xf32>
    "tpu.trace_stop"() : () -> ()
    %cst_61 = arith.constant 5.000000e-01 : f32
    %239 = vector.broadcast %cst_61 : f32 to vector<2x8x8xf32>
    %240 = arith.mulf %238, %239 : vector<2x8x8xf32>
    %cst_62 = arith.constant dense<0xFF800000> : vector<2x8xf32>
    %241 = vector.multi_reduction <maximumf>, %240, %cst_62 [2] : vector<2x8x8xf32> to vector<2x8xf32>
    %242 = vector.shape_cast %241 : vector<2x8xf32> to vector<2x8x1xf32>
    %243 = vector.broadcast %242 : vector<2x8x1xf32> to vector<2x8x8xf32>
    %244 = arith.subf %240, %243 : vector<2x8x8xf32>
    %245 = math.exp %244 : vector<2x8x8xf32>
    %cst_63 = arith.constant dense<0.000000e+00> : vector<2x8xf32>
    %246 = vector.multi_reduction <add>, %245, %cst_63 [2] : vector<2x8x8xf32> to vector<2x8xf32>
    %247 = vector.shape_cast %246 : vector<2x8xf32> to vector<2x8x1xf32>
    %248 = vector.broadcast %247 : vector<2x8x1xf32> to vector<2x8x8xf32>
    %249 = arith.divf %245, %248 : vector<2x8x8xf32>
    "tpu.trace_start"() <{level = 10 : i32, message = "blm,bmd->bld"}> : () -> ()
    %cst_64 = arith.constant dense<0.000000e+00> : vector<2x8x4xf32>
    %250 = tpu.matmul %249, %237, %cst_64 {dimension_numbers = #tpu.dot_dimension_numbers<[2], [1], [1], [2], [0, 0, 0, 1, 1, 2], [0], [0]>} : vector<2x8x8xf32>, vector<2x8x4xf32>, vector<2x8x4xf32> -> vector<2x8x4xf32>
    "tpu.trace_stop"() : () -> ()
    %251 = vector.extract_strided_slice %234 {offsets = [0, 0, 4], sizes = [2, 8, 4], strides = [1, 1, 1]} : vector<2x8x24xf32> to vector<2x8x4xf32>
    %252 = vector.extract_strided_slice %234 {offsets = [0, 0, 12], sizes = [2, 8, 4], strides = [1, 1, 1]} : vector<2x8x24xf32> to vector<2x8x4xf32>
    %253 = vector.extract_strided_slice %234 {offsets = [0, 0, 20], sizes = [2, 8, 4], strides = [1, 1, 1]} : vector<2x8x24xf32> to vector<2x8x4xf32>
    "tpu.trace_start"() <{level = 10 : i32, message = "bld,bmd->blm"}> : () -> ()
    %cst_65 = arith.constant dense<0.000000e+00> : vector<2x8x8xf32>
    %254 = tpu.matmul %251, %252, %cst_65 {dimension_numbers = #tpu.dot_dimension_numbers<[2], [2], [1], [1], [0, 0, 0, 1, 1, 1], [0], [0]>} : vector<2x8x4xf32>, vector<2x8x4xf32>, vector<2x8x8xf32> -> vector<2x8x8xf32>
    "tpu.trace_stop"() : () -> ()
    %cst_66 = arith.constant 5.000000e-01 : f32
    %255 = vector.broadcast %cst_66 : f32 to vector<2x8x8xf32>
    %256 = arith.mulf %254, %255 : vector<2x8x8xf32>
    %cst_67 = arith.constant dense<0xFF800000> : vector<2x8xf32>
    %257 = vector.multi_reduction <maximumf>, %256, %cst_67 [2] : vector<2x8x8xf32> to vector<2x8xf32>
    %258 = vector.shape_cast %257 : vector<2x8xf32> to vector<2x8x1xf32>
    %259 = vector.broadcast %258 : vector<2x8x1xf32> to vector<2x8x8xf32>
    %260 = arith.subf %256, %259 : vector<2x8x8xf32>
    %261 = math.exp %260 : vector<2x8x8xf32>
    %cst_68 = arith.constant dense<0.000000e+00> : vector<2x8xf32>
    %262 = vector.multi_reduction <add>, %261, %cst_68 [2] : vector<2x8x8xf32> to vector<2x8xf32>
    %263 = vector.shape_cast %262 : vector<2x8xf32> to vector<2x8x1xf32>
    %264 = vector.broadcast %263 : vector<2x8x1xf32> to vector<2x8x8xf32>
    %265 = arith.divf %261, %264 : vector<2x8x8xf32>
    "tpu.trace_start"() <{level = 10 : i32, message = "blm,bmd->bld"}> : () -> ()
    %cst_69 = arith.constant dense<0.000000e+00> : vector<2x8x4xf32>
    %266 = tpu.matmul %265, %253, %cst_69 {dimension_numbers = #tpu.dot_dimension_numbers<[2], [1], [1], [2], [0, 0, 0, 1, 1, 2], [0], [0]>} : vector<2x8x8xf32>, vector<2x8x4xf32>, vector<2x8x4xf32> -> vector<2x8x4xf32>
    "tpu.trace_stop"() : () -> ()
    %267 = tpu.concatenate %250, %266 in 2 : vector<2x8x4xf32>, vector<2x8x4xf32> -> vector<2x8x8xf32>
    %268 = vector.shape_cast %267 : vector<2x8x8xf32> to vector<16x8xf32>
    %c0_70 = arith.constant 0 : index
    %c0_71 = arith.constant 0 : index
    %269 = vector.load %arg8[%c0_70, %c0_71] : memref<8x8xf32, #tpu.memory_space<vmem>>, vector<8x8xf32>
    %cst_72 = arith.constant dense<0.000000e+00> : vector<16x8xf32>
    %270 = tpu.matmul %268, %269, %cst_72 {dimension_numbers = #tpu.dot_dimension_numbers<[1], [0], [0], [1], [0, 0, 1, 1], [], []>} : vector<16x8xf32>, vector<8x8xf32>, vector<16x8xf32> -> vector<16x8xf32>
    %c0_73 = arith.constant 0 : index
    %c0_74 = arith.constant 0 : index
    %271 = vector.load %arg9[%c0_73, %c0_74] : memref<1x8xf32, #tpu.memory_space<vmem>>, vector<1x8xf32>
    %272 = vector.broadcast %271 : vector<1x8xf32> to vector<16x8xf32>
    %273 = arith.addf %270, %272 : vector<16x8xf32>
    %cst_75 = arith.constant dense<0.000000e+00> : vector<16xf32>
    %274 = vector.multi_reduction <add>, %273, %cst_75 [1] : vector<16x8xf32> to vector<16xf32>
    %275 = vector.shape_cast %274 : vector<16xf32> to vector<16x1xf32>
    %cst_76 = arith.constant 8.000000e+00 : f32
    %276 = vector.broadcast %cst_76 : f32 to vector<16x1xf32>
    %277 = arith.divf %275, %276 : vector<16x1xf32>
    %278 = vector.broadcast %277 : vector<16x1xf32> to vector<16x8xf32>
    %279 = arith.subf %273, %278 : vector<16x8xf32>
    %280 = arith.mulf %279, %279 : vector<16x8xf32>
    %cst_77 = arith.constant dense<0.000000e+00> : vector<16xf32>
    %281 = vector.multi_reduction <add>, %280, %cst_77 [1] : vector<16x8xf32> to vector<16xf32>
    %282 = vector.shape_cast %281 : vector<16xf32> to vector<16x1xf32>
    %cst_78 = arith.constant 8.000000e+00 : f32
    %283 = vector.broadcast %cst_78 : f32 to vector<16x1xf32>
    %284 = arith.divf %282, %283 : vector<16x1xf32>
    %285 = vector.broadcast %277 : vector<16x1xf32> to vector<16x8xf32>
    %286 = arith.subf %273, %285 : vector<16x8xf32>
    %cst_79 = arith.constant 9.99999996E-13 : f32
    %287 = vector.broadcast %cst_79 : f32 to vector<16x1xf32>
    %288 = arith.addf %284, %287 : vector<16x1xf32>
    %289 = math.rsqrt %288 : vector<16x1xf32>
    %290 = vector.broadcast %289 : vector<16x1xf32> to vector<16x8xf32>
    %291 = arith.mulf %286, %290 : vector<16x8xf32>
    %c0_80 = arith.constant 0 : index
    %c0_81 = arith.constant 0 : index
    %292 = vector.load %arg10[%c0_80, %c0_81] : memref<1x8xf32, #tpu.memory_space<vmem>>, vector<1x8xf32>
    %293 = vector.broadcast %292 : vector<1x8xf32> to vector<16x8xf32>
    %294 = arith.mulf %293, %291 : vector<16x8xf32>
    %c0_82 = arith.constant 0 : index
    %c0_83 = arith.constant 0 : index
    %295 = vector.load %arg11[%c0_82, %c0_83] : memref<1x8xf32, #tpu.memory_space<vmem>>, vector<1x8xf32>
    %296 = vector.broadcast %295 : vector<1x8xf32> to vector<16x8xf32>
    %297 = arith.addf %294, %296 : vector<16x8xf32>
    %298 = vector.extract_strided_slice %297 {offsets = [0, 0], sizes = [8, 8], strides = [1, 1]} : vector<16x8xf32> to vector<8x8xf32>
    %cst_84 = arith.constant 0.000000e+00 : f32
    %299 = vector.broadcast %cst_84 : f32 to vector<8x8xf32>
    %300 = arith.maximumf %298, %299 : vector<8x8xf32>
    %301 = tpu.transpose %300, [1, 0] : vector<8x8xf32> -> vector<8x8xf32>
    %302 = arith.addf %300, %301 : vector<8x8xf32>
    %cst_85 = arith.constant 5.000000e-01 : f32
    %303 = vector.broadcast %cst_85 : f32 to vector<8x8xf32>
    %304 = arith.mulf %303, %302 : vector<8x8xf32>
    %cst_86 = arith.constant dense<0.000000e+00> : vector<8xf32>
    %305 = vector.multi_reduction <add>, %304, %cst_86 [1] : vector<8x8xf32> to vector<8xf32>
    %306 = vector.shape_cast %305 : vector<8xf32> to vector<8x1xf32>
    %cst_87 = arith.constant dense<0.000000e+00> : vector<8xf32>
    %307 = vector.multi_reduction <add>, %304, %cst_87 [0] : vector<8x8xf32> to vector<8xf32>
    %308 = vector.shape_cast %307 : vector<8xf32> to vector<1x8xf32>
    %cst_88 = arith.constant 0.000000e+00 : f32
    %309 = vector.broadcast %cst_88 : f32 to vector<8x1xf32>
    %310 = arith.cmpf ogt, %306, %309 : vector<8x1xf32>
    %311 = math.rsqrt %306 : vector<8x1xf32>
    %cst_89 = arith.constant 0.000000e+00 : f32
    %312 = vector.broadcast %cst_89 : f32 to vector<8x1xf32>
    %313 = arith.select %310, %311, %312 : vector<8x1xi1>, vector<8x1xf32>
    %cst_90 = arith.constant 0.000000e+00 : f32
    %314 = vector.broadcast %cst_90 : f32 to vector<1x8xf32>
    %315 = arith.cmpf ogt, %308, %314 : vector<1x8xf32>
    %316 = math.rsqrt %308 : vector<1x8xf32>
    %cst_91 = arith.constant 0.000000e+00 : f32
    %317 = vector.broadcast %cst_91 : f32 to vector<1x8xf32>
    %318 = arith.select %315, %316, %317 : vector<1x8xi1>, vector<1x8xf32>
    %319 = vector.broadcast %313 : vector<8x1xf32> to vector<8x8xf32>
    %320 = arith.mulf %304, %319 : vector<8x8xf32>
    %321 = vector.broadcast %318 : vector<1x8xf32> to vector<8x8xf32>
    %322 = arith.mulf %320, %321 : vector<8x8xf32>
    %c0_92 = arith.constant 0 : index
    %c0_93 = arith.constant 0 : index
    %c0_94 = arith.constant 0 : index
    %323 = vector.load %arg12[%c0_92, %c0_93, %c0_94] : memref<2x8x8xf32, #tpu.memory_space<vmem>>, vector<1x8x8xf32>
    %324 = vector.shape_cast %323 : vector<1x8x8xf32> to vector<8x8xf32>
    %325 = vector.shape_cast %322 : vector<8x8xf32> to vector<1x8x8xf32>
    tpu.vector_store %arg12[%c0_92, %c0_93, %c0_94], %325 {strides = array<i32>} : memref<2x8x8xf32, #tpu.memory_space<vmem>>, vector<1x8x8xf32>,
    %326 = vector.extract_strided_slice %297 {offsets = [8, 0], sizes = [8, 8], strides = [1, 1]} : vector<16x8xf32> to vector<8x8xf32>
    %cst_95 = arith.constant 0.000000e+00 : f32
    %327 = vector.broadcast %cst_95 : f32 to vector<8x8xf32>
    %328 = arith.maximumf %326, %327 : vector<8x8xf32>
    %329 = tpu.transpose %328, [1, 0] : vector<8x8xf32> -> vector<8x8xf32>
    %330 = arith.addf %328, %329 : vector<8x8xf32>
    %cst_96 = arith.constant 5.000000e-01 : f32
    %331 = vector.broadcast %cst_96 : f32 to vector<8x8xf32>
    %332 = arith.mulf %331, %330 : vector<8x8xf32>
    %cst_97 = arith.constant dense<0.000000e+00> : vector<8xf32>
    %333 = vector.multi_reduction <add>, %332, %cst_97 [1] : vector<8x8xf32> to vector<8xf32>
    %334 = vector.shape_cast %333 : vector<8xf32> to vector<8x1xf32>
    %cst_98 = arith.constant dense<0.000000e+00> : vector<8xf32>
    %335 = vector.multi_reduction <add>, %332, %cst_98 [0] : vector<8x8xf32> to vector<8xf32>
    %336 = vector.shape_cast %335 : vector<8xf32> to vector<1x8xf32>
    %cst_99 = arith.constant 0.000000e+00 : f32
    %337 = vector.broadcast %cst_99 : f32 to vector<8x1xf32>
    %338 = arith.cmpf ogt, %334, %337 : vector<8x1xf32>
    %339 = math.rsqrt %334 : vector<8x1xf32>
    %cst_100 = arith.constant 0.000000e+00 : f32
    %340 = vector.broadcast %cst_100 : f32 to vector<8x1xf32>
    %341 = arith.select %338, %339, %340 : vector<8x1xi1>, vector<8x1xf32>
    %cst_101 = arith.constant 0.000000e+00 : f32
    %342 = vector.broadcast %cst_101 : f32 to vector<1x8xf32>
    %343 = arith.cmpf ogt, %336, %342 : vector<1x8xf32>
    %344 = math.rsqrt %336 : vector<1x8xf32>
    %cst_102 = arith.constant 0.000000e+00 : f32
    %345 = vector.broadcast %cst_102 : f32 to vector<1x8xf32>
    %346 = arith.select %343, %344, %345 : vector<1x8xi1>, vector<1x8xf32>
    %347 = vector.broadcast %341 : vector<8x1xf32> to vector<8x8xf32>
    %348 = arith.mulf %332, %347 : vector<8x8xf32>
    %349 = vector.broadcast %346 : vector<1x8xf32> to vector<8x8xf32>
    %350 = arith.mulf %348, %349 : vector<8x8xf32>
    %c1_103 = arith.constant 1 : index
    %c0_104 = arith.constant 0 : index
    %c0_105 = arith.constant 0 : index
    %351 = vector.load %arg12[%c1_103, %c0_104, %c0_105] : memref<2x8x8xf32, #tpu.memory_space<vmem>>, vector<1x8x8xf32>
    %352 = vector.shape_cast %351 : vector<1x8x8xf32> to vector<8x8xf32>
    %353 = vector.shape_cast %350 : vector<8x8xf32> to vector<1x8x8xf32>
    tpu.vector_store %arg12[%c1_103, %c0_104, %c0_105], %353 {strides = array<i32>} : memref<2x8x8xf32, #tpu.memory_space<vmem>>, vector<1x8x8xf32>,
    return
  }
  func.func @transform_0(%arg0: i32) -> (i32, i32, i32) {
    %c0_i32 = arith.constant 0 : i32
    %c0_i32_0 = arith.constant 0 : i32
    %c0_i32_1 = arith.constant 0 : i32
    return %arg0, %c0_i32, %c0_i32_0 : i32, i32, i32
  }
  func.func @transform_1(%arg0: i32) -> (i32, i32) {
    %c0_i32 = arith.constant 0 : i32
    %c0_i32_0 = arith.constant 0 : i32
    %c0_i32_1 = arith.constant 0 : i32
    return %c0_i32, %c0_i32_0 : i32, i32
  }
  func.func @transform_2(%arg0: i32) -> (i32, i32) {
    %c0_i32 = arith.constant 0 : i32
    %c0_i32_0 = arith.constant 0 : i32
    %c0_i32_1 = arith.constant 0 : i32
    return %c0_i32, %c0_i32_0 : i32, i32
  }
  func.func @transform_3(%arg0: i32) -> (i32, i32) {
    %c0_i32 = arith.constant 0 : i32
    %c0_i32_0 = arith.constant 0 : i32
    %c0_i32_1 = arith.constant 0 : i32
    return %c0_i32, %c0_i32_0 : i32, i32
  }
  func.func @transform_4(%arg0: i32) -> (i32, i32) {
    %c0_i32 = arith.constant 0 : i32
    %c0_i32_0 = arith.constant 0 : i32
    %c0_i32_1 = arith.constant 0 : i32
    return %c0_i32, %c0_i32_0 : i32, i32
  }
  func.func @transform_5(%arg0: i32) -> (i32, i32) {
    %c0_i32 = arith.constant 0 : i32
    %c0_i32_0 = arith.constant 0 : i32
    %c0_i32_1 = arith.constant 0 : i32
    return %c0_i32, %c0_i32_0 : i32, i32
  }
  func.func @transform_6(%arg0: i32) -> (i32, i32) {
    %c0_i32 = arith.constant 0 : i32
    %c0_i32_0 = arith.constant 0 : i32
    %c0_i32_1 = arith.constant 0 : i32
    return %c0_i32, %c0_i32_0 : i32, i32
  }
  func.func @transform_7(%arg0: i32) -> (i32, i32) {
    %c0_i32 = arith.constant 0 : i32
    %c0_i32_0 = arith.constant 0 : i32
    %c0_i32_1 = arith.constant 0 : i32
    return %c0_i32, %c0_i32_0 : i32, i32
  }
  func.func @transform_8(%arg0: i32) -> (i32, i32) {
    %c0_i32 = arith.constant 0 : i32
    %c0_i32_0 = arith.constant 0 : i32
    %c0_i32_1 = arith.constant 0 : i32
    return %c0_i32, %c0_i32_0 : i32, i32
  }
  func.func @transform_9(%arg0: i32) -> (i32, i32) {
    %c0_i32 = arith.constant 0 : i32
    %c0_i32_0 = arith.constant 0 : i32
    %c0_i32_1 = arith.constant 0 : i32
    return %c0_i32, %c0_i32_0 : i32, i32
  }
  func.func @transform_10(%arg0: i32) -> (i32, i32) {
    %c0_i32 = arith.constant 0 : i32
    %c0_i32_0 = arith.constant 0 : i32
    %c0_i32_1 = arith.constant 0 : i32
    return %c0_i32, %c0_i32_0 : i32, i32
  }
  func.func @transform_11(%arg0: i32) -> (i32, i32, i32) {
    %c0_i32 = arith.constant 0 : i32
    %c0_i32_0 = arith.constant 0 : i32
    %c0_i32_1 = arith.constant 0 : i32
    return %arg0, %c0_i32, %c0_i32_0 : i32, i32, i32
  }
}

</mosaic_0001>

<llo_original>
// kernel: tpu_custom_call.1
$region0: #{tpu_custom_call.1}
  #allocation0 [shape = 'u32[]', space=smem, size = 0x4, offset = 0x4, fixed_abs, tag = 'smem constant byte address 0x4 - core index']
  #allocation1 [shape = 'u32[144,128]{1,0:T(1,128)}', space=vmem, size = 0x12000, scoped, tag = 'internal scratch']
  #allocation2 [shape = 'f32[2,8,16]{2,1,0:T(8,128)}', space=vmem, size = 0x2000, scoped, tag = 'scratch operand']
  %s0 = inlined_call_operand.hbm [shape: f32[4,8,16], index: 0, kind: input, shape index: {}]
  %s1 = inlined_call_operand.hbm [shape: f32[16,48], index: 1, kind: input, shape index: {}]
  %s2 = inlined_call_operand.vmem [shape: f32[1,48], index: 2, kind: input, shape index: {}]
  %s3 = inlined_call_operand.hbm [shape: f32[16,48], index: 3, kind: input, shape index: {}]
  %s4 = inlined_call_operand.vmem [shape: f32[1,48], index: 4, kind: input, shape index: {}]
  %s5 = inlined_call_operand.vmem [shape: f32[16,24], index: 5, kind: input, shape index: {}]
  %s6 = inlined_call_operand.hbm [shape: f32[1,24], index: 6, kind: input, shape index: {}]
  %s7 = inlined_call_operand.vmem [shape: f32[8,8], index: 7, kind: input, shape index: {}]
  %s8 = inlined_call_operand.vmem [shape: f32[1,8], index: 8, kind: input, shape index: {}]
  %s9 = inlined_call_operand.vmem [shape: f32[1,8], index: 9, kind: input, shape index: {}]
  %s10 = inlined_call_operand.vmem [shape: f32[1,8], index: 10, kind: input, shape index: {}]
  %s11 = inlined_call_operand.hbm [shape: f32[4,8,8], index: 11, kind: output, shape index: {}]
  %s12 = sld [smem:[#allocation0]]
  $region93: #{tpu_custom_call.1} parent=0
    _
  %s14 = ssub.s32 1, %s12
  %s15 = scalar_select 0, %s14, %s12
  $region1: #{tpu_custom_call.1} parent=0
    #allocation3 [shape = 'u8[16384]{0}', space=vmem, size = 0x4000, scoped, tag = 'input window, operand 0']
    #allocation4 [shape = 's32[2]{0}', space=sflag, size = 0x8, scoped, tag = 'scoped memory for tpu_custom_call.1']
    #allocation5 [shape = 's32[2]{0}', space=sflag, size = 0x8, scoped, tag = 'scoped memory for tpu_custom_call.1']
    #allocation6 [shape = 'u8[8192]{0}', space=vmem, size = 0x2000, scoped, tag = 'input window, operand 1, single buffered']
    #allocation7 [shape = 's32[1]{0}', space=sflag, size = 0x4, scoped, tag = 'scoped memory for tpu_custom_call.1']
    #allocation8 [shape = 'u8[8192]{0}', space=vmem, size = 0x2000, scoped, tag = 'input window, operand 3, single buffered']
    #allocation9 [shape = 'u8[512]{0}', space=vmem, size = 0x400, scoped, tag = 'input window, operand 6, single buffered']
    #allocation10 [shape = 's32[1]{0}', space=sflag, size = 0x4, scoped, tag = 'scoped memory for tpu_custom_call.1']
    #allocation11 [shape = 'u8[16384]{0}', space=vmem, size = 0x4000, scoped, tag = 'output window, operand 0']
    %16 = vsyncpa [#allocation4], 0
    %s17 = scalar_lea.sflag [#allocation4], 1
    %18 = vsyncpa %s17, 0
    %19 = vsyncpa [#allocation7], 0
    %20 = vsyncpa [#allocation10], 0
    %21 = vsyncpa [#allocation5], 0
    %s22 = scalar_lea.sflag [#allocation5], 1
    %23 = vsyncpa %s22, 0
    loop: start=0, step=1, limit=4
    $region2: #{tpu_custom_call.1} parent=1 // loop_pre_header
      _
    $region3: #{tpu_custom_call.1} parent=1 // loop_header
      %s25 = sphi 0, %s29
      %p26 = scmp.ge.s32.totalorder %s25, 4
      %s35 = sphi 0, %s37
      %s38 = sphi 0, %s35
      %s39 = sphi 0, %s38
      %s55 = sphi 0, %s39
      %s59 = sphi 0, %s59
      %s61 = sphi 0, %s59
      %s62 = sphi 0, %s61
      %s76 = sphi 0, %s62
      %s80 = sphi 0, %s80
      %s82 = sphi 0, %s80
      %s83 = sphi 0, %s82
      %s97 = sphi 0, %s83
      %s101 = sphi 0, %s101
      %s103 = sphi 0, %s101
      %s104 = sphi 0, %s103
      %s118 = sphi 0, %s104
      %s122 = sphi 0, %s122
      %s124 = sphi 0, %s122
      %s125 = sphi 0, %s124
      %s139 = sphi 0, %s125
      %s143 = sphi 0, %s143
      %s145 = sphi 0, %s143
      %s146 = sphi 0, %s145
      %s160 = sphi 0, %s146
      %s164 = sphi 0, %s164
      %s166 = sphi 0, %s164
      %s167 = sphi 0, %s166
      %s181 = sphi 0, %s167
      %s185 = sphi 0, %s185
      %s187 = sphi 0, %s185
      %s188 = sphi 0, %s187
      %s202 = sphi 0, %s188
      %s206 = sphi 0, %s206
      %s208 = sphi 0, %s206
      %s209 = sphi 0, %s208
      %s223 = sphi 0, %s209
      %s227 = sphi 0, %s227
      %s229 = sphi 0, %s227
      %s230 = sphi 0, %s229
      %s244 = sphi 0, %s230
      %s248 = sphi 0, %s248
      %s250 = sphi 0, %s248
      %s251 = sphi 0, %s250
      %s265 = sphi 0, %s251
      %s271 = sphi 0, %s273
      %s274 = sphi 0, %s271
      %s275 = sphi 0, %s274
      %s291 = sphi 0, %s275
    $region4: #{tpu_custom_call.1} parent=1 // loop_header_branch
      %28 = sbr.rel (%p26) target = $region8
    $region5: #{tpu_custom_call.1} parent=1 // loop_body
      %s30 = ssub.s32 %s25, 1
      %s31 = ssub.s32 %s25, 2
      %s32 = sadd.s32 %s25, 1
      %s33 = ssub.s32 %s25, %s32
      %p34 = scmp.eq.s32.totalorder %s33, 0
      %s36 = sadd.s32 %s35, 1
      %s37 = scalar_select %p34, %s35, %s36
      %p40 = pneg %p34
      %p41 = scmp.eq.s32.totalorder %s25, 1
      %p42 = por %p40, %p41
      %p43 = scmp.ne.s32.totalorder %s35, %s38
      %p44 = scmp.eq.s32.totalorder %s25, 0
      %p45 = por %p43, %p44
      %p46 = scmp.ne.s32.totalorder %s35, %s38
      %p47 = scmp.eq.s32.totalorder %s30, 1
      %p48 = por %p46, %p47
      %p49 = scmp.ne.s32.totalorder %s38, %s39
      %p50 = scmp.eq.s32.totalorder %s30, 0
      %p51 = por %p49, %p50
      %p52 = scmp.ne.s32.totalorder %s38, %s39
      %p53 = scmp.eq.s32.totalorder %s31, 1
      %p54 = por %p52, %p53
      %p56 = scmp.ne.s32.totalorder %s39, %s55
      %p57 = scmp.eq.s32.totalorder %s31, 0
      %p58 = por %p56, %p57
      %s60 = sadd.s32 %s59, 1
      %p63 = scmp.eq.s32.totalorder %s25, 1
      %p64 = scmp.ne.s32.totalorder %s59, %s61
      %p65 = scmp.eq.s32.totalorder %s25, 0
      %p66 = por %p64, %p65
      %p67 = scmp.ne.s32.totalorder %s59, %s61
      %p68 = scmp.eq.s32.totalorder %s30, 1
      %p69 = por %p67, %p68
      %p70 = scmp.ne.s32.totalorder %s61, %s62
      %p71 = scmp.eq.s32.totalorder %s30, 0
      %p72 = por %p70, %p71
      %p73 = scmp.ne.s32.totalorder %s61, %s62
      %p74 = scmp.eq.s32.totalorder %s31, 1
      %p75 = por %p73, %p74
      %p77 = scmp.ne.s32.totalorder %s62, %s76
      %p78 = scmp.eq.s32.totalorder %s31, 0
      %p79 = por %p77, %p78
      %s81 = sadd.s32 %s80, 1
      %p84 = scmp.eq.s32.totalorder %s25, 1
      %p85 = scmp.ne.s32.totalorder %s80, %s82
      %p86 = scmp.eq.s32.totalorder %s25, 0
      %p87 = por %p85, %p86
      %p88 = scmp.ne.s32.totalorder %s80, %s82
      %p89 = scmp.eq.s32.totalorder %s30, 1
      %p90 = por %p88, %p89
      %p91 = scmp.ne.s32.totalorder %s82, %s83
      %p92 = scmp.eq.s32.totalorder %s30, 0
      %p93 = por %p91, %p92
      %p94 = scmp.ne.s32.totalorder %s82, %s83
      %p95 = scmp.eq.s32.totalorder %s31, 1
      %p96 = por %p94, %p95
      %p98 = scmp.ne.s32.totalorder %s83, %s97
      %p99 = scmp.eq.s32.totalorder %s31, 0
      %p100 = por %p98, %p99
      %s102 = sadd.s32 %s101, 1
      %p105 = scmp.eq.s32.totalorder %s25, 1
      %p106 = scmp.ne.s32.totalorder %s101, %s103
      %p107 = scmp.eq.s32.totalorder %s25, 0
      %p108 = por %p106, %p107
      %p109 = scmp.ne.s32.totalorder %s101, %s103
      %p110 = scmp.eq.s32.totalorder %s30, 1
      %p111 = por %p109, %p110
      %p112 = scmp.ne.s32.totalorder %s103, %s104
      %p113 = scmp.eq.s32.totalorder %s30, 0
      %p114 = por %p112, %p113
      %p115 = scmp.ne.s32.totalorder %s103, %s104
      %p116 = scmp.eq.s32.totalorder %s31, 1
      %p117 = por %p115, %p116
      %p119 = scmp.ne.s32.totalorder %s104, %s118
      %p120 = scmp.eq.s32.totalorder %s31, 0
      %p121 = por %p119, %p120
      %s123 = sadd.s32 %s122, 1
      %p126 = scmp.eq.s32.totalorder %s25, 1
      %p127 = scmp.ne.s32.totalorder %s122, %s124
      %p128 = scmp.eq.s32.totalorder %s25, 0
      %p129 = por %p127, %p128
      %p130 = scmp.ne.s32.totalorder %s122, %s124
      %p131 = scmp.eq.s32.totalorder %s30, 1
      %p132 = por %p130, %p131
      %p133 = scmp.ne.s32.totalorder %s124, %s125
      %p134 = scmp.eq.s32.totalorder %s30, 0
      %p135 = por %p133, %p134
      %p136 = scmp.ne.s32.totalorder %s124, %s125
      %p137 = scmp.eq.s32.totalorder %s31, 1
      %p138 = por %p136, %p137
      %p140 = scmp.ne.s32.totalorder %s125, %s139
      %p141 = scmp.eq.s32.totalorder %s31, 0
      %p142 = por %p140, %p141
      %s144 = sadd.s32 %s143, 1
      %p147 = scmp.eq.s32.totalorder %s25, 1
      %p148 = scmp.ne.s32.totalorder %s143, %s145
      %p149 = scmp.eq.s32.totalorder %s25, 0
      %p150 = por %p148, %p149
      %p151 = scmp.ne.s32.totalorder %s143, %s145
      %p152 = scmp.eq.s32.totalorder %s30, 1
      %p153 = por %p151, %p152
      %p154 = scmp.ne.s32.totalorder %s145, %s146
      %p155 = scmp.eq.s32.totalorder %s30, 0
      %p156 = por %p154, %p155
      %p157 = scmp.ne.s32.totalorder %s145, %s146
      %p158 = scmp.eq.s32.totalorder %s31, 1
      %p159 = por %p157, %p158
      %p161 = scmp.ne.s32.totalorder %s146, %s160
      %p162 = scmp.eq.s32.totalorder %s31, 0
      %p163 = por %p161, %p162
      %s165 = sadd.s32 %s164, 1
      %p168 = scmp.eq.s32.totalorder %s25, 1
      %p169 = scmp.ne.s32.totalorder %s164, %s166
      %p170 = scmp.eq.s32.totalorder %s25, 0
      %p171 = por %p169, %p170
      %p172 = scmp.ne.s32.totalorder %s164, %s166
      %p173 = scmp.eq.s32.totalorder %s30, 1
      %p174 = por %p172, %p173
      %p175 = scmp.ne.s32.totalorder %s166, %s167
      %p176 = scmp.eq.s32.totalorder %s30, 0
      %p177 = por %p175, %p176
      %p178 = scmp.ne.s32.totalorder %s166, %s167
      %p179 = scmp.eq.s32.totalorder %s31, 1
      %p180 = por %p178, %p179
      %p182 = scmp.ne.s32.totalorder %s167, %s181
      %p183 = scmp.eq.s32.totalorder %s31, 0
      %p184 = por %p182, %p183
      %s186 = sadd.s32 %s185, 1
      %p189 = scmp.eq.s32.totalorder %s25, 1
      %p190 = scmp.ne.s32.totalorder %s185, %s187
      %p191 = scmp.eq.s32.totalorder %s25, 0
      %p192 = por %p190, %p191
      %p193 = scmp.ne.s32.totalorder %s185, %s187
      %p194 = scmp.eq.s32.totalorder %s30, 1
      %p195 = por %p193, %p194
      %p196 = scmp.ne.s32.totalorder %s187, %s188
      %p197 = scmp.eq.s32.totalorder %s30, 0
      %p198 = por %p196, %p197
      %p199 = scmp.ne.s32.totalorder %s187, %s188
      %p200 = scmp.eq.s32.totalorder %s31, 1
      %p201 = por %p199, %p200
      %p203 = scmp.ne.s32.totalorder %s188, %s202
      %p204 = scmp.eq.s32.totalorder %s31, 0
      %p205 = por %p203, %p204
      %s207 = sadd.s32 %s206, 1
      %p210 = scmp.eq.s32.totalorder %s25, 1
      %p211 = scmp.ne.s32.totalorder %s206, %s208
      %p212 = scmp.eq.s32.totalorder %s25, 0
      %p213 = por %p211, %p212
      %p214 = scmp.ne.s32.totalorder %s206, %s208
      %p215 = scmp.eq.s32.totalorder %s30, 1
      %p216 = por %p214, %p215
      %p217 = scmp.ne.s32.totalorder %s208, %s209
      %p218 = scmp.eq.s32.totalorder %s30, 0
      %p219 = por %p217, %p218
      %p220 = scmp.ne.s32.totalorder %s208, %s209
      %p221 = scmp.eq.s32.totalorder %s31, 1
      %p222 = por %p220, %p221
      %p224 = scmp.ne.s32.totalorder %s209, %s223
      %p225 = scmp.eq.s32.totalorder %s31, 0
      %p226 = por %p224, %p225
      %s228 = sadd.s32 %s227, 1
      %p231 = scmp.eq.s32.totalorder %s25, 1
      %p232 = scmp.ne.s32.totalorder %s227, %s229
      %p233 = scmp.eq.s32.totalorder %s25, 0
      %p234 = por %p232, %p233
      %p235 = scmp.ne.s32.totalorder %s227, %s229
      %p236 = scmp.eq.s32.totalorder %s30, 1
      %p237 = por %p235, %p236
      %p238 = scmp.ne.s32.totalorder %s229, %s230
      %p239 = scmp.eq.s32.totalorder %s30, 0
      %p240 = por %p238, %p239
      %p241 = scmp.ne.s32.totalorder %s229, %s230
      %p242 = scmp.eq.s32.totalorder %s31, 1
      %p243 = por %p241, %p242
      %p245 = scmp.ne.s32.totalorder %s230, %s244
      %p246 = scmp.eq.s32.totalorder %s31, 0
      %p247 = por %p245, %p246
      %s249 = sadd.s32 %s248, 1
      %p252 = scmp.eq.s32.totalorder %s25, 1
      %p253 = scmp.ne.s32.totalorder %s248, %s250
      %p254 = scmp.eq.s32.totalorder %s25, 0
      %p255 = por %p253, %p254
      %p256 = scmp.ne.s32.totalorder %s248, %s250
      %p257 = scmp.eq.s32.totalorder %s30, 1
      %p258 = por %p256, %p257
      %p259 = scmp.ne.s32.totalorder %s250, %s251
      %p260 = scmp.eq.s32.totalorder %s30, 0
      %p261 = por %p259, %p260
      %p262 = scmp.ne.s32.totalorder %s250, %s251
      %p263 = scmp.eq.s32.totalorder %s31, 1
      %p264 = por %p262, %p263
      %p266 = scmp.ne.s32.totalorder %s251, %s265
      %p267 = scmp.eq.s32.totalorder %s31, 0
      %p268 = por %p266, %p267
      %s269 = ssub.s32 %s25, %s32
      %p270 = scmp.eq.s32.totalorder %s269, 0
      %s272 = sadd.s32 %s271, 1
      %s273 = scalar_select %p270, %s271, %s272
      %p276 = pneg %p270
      %p277 = scmp.eq.s32.totalorder %s25, 1
      %p278 = por %p276, %p277
      %p279 = scmp.ne.s32.totalorder %s271, %s274
      %p280 = scmp.eq.s32.totalorder %s25, 0
      %p281 = por %p279, %p280
      %p282 = scmp.ne.s32.totalorder %s271, %s274
      %p283 = scmp.eq.s32.totalorder %s30, 1
      %p284 = por %p282, %p283
      %p285 = scmp.ne.s32.totalorder %s274, %s275
      %p286 = scmp.eq.s32.totalorder %s30, 0
      %p287 = por %p285, %p286
      %p288 = scmp.ne.s32.totalorder %s274, %s275
      %p289 = scmp.eq.s32.totalorder %s31, 1
      %p290 = por %p288, %p289
      %p292 = scmp.ne.s32.totalorder %s275, %s291
      %p293 = scmp.eq.s32.totalorder %s31, 0
      %p294 = por %p292, %p293
      %p295 = scmp.le.s32.totalorder 1, %s25
      %p296 = scmp.lt.s32.totalorder %s25, 3
      %p297 = pnand %p295, %p296
      %p298 = pneg %p297
      // Predicated region
      $region9: #{tpu_custom_call.1} parent=5 // pred_check
        _
      $region10: #{tpu_custom_call.1} parent=5 // pred_check_branch
        %300 = sbr.rel (%p297) target = $region12
      $region11: #{tpu_custom_call.1} parent=5 // pred_region
        %s301 = ssub.s32 %s25, 1
        // Predicated region
        $region13: #{tpu_custom_call.1} parent=11 // pred_check
          %p302 = pneg %p72
        $region14: #{tpu_custom_call.1} parent=11 // pred_check_branch
          %304 = sbr.rel (%p302) target = $region16
        $region15: #{tpu_custom_call.1} parent=11 // pred_region
          %s306 = ssub.s32 256, 256
          %307 = vsyncadd [#allocation7], %s306
          %s308 = sshll.u32 [#allocation6], 4
          %s309 = int_to_ptr.vmem [resolvable:$true] %s308
          %314 = dma.hbm_to_vmem [thread:$0]  %s1, 256, %s309, [#allocation7], 128, 128, 8
        $region16: #{tpu_custom_call.1} parent=11 // pred_fallthru
          _
        // Predicated region
        $region17: #{tpu_custom_call.1} parent=11 // pred_check
          %p315 = pneg %p93
        $region18: #{tpu_custom_call.1} parent=11 // pred_check_branch
          %317 = sbr.rel (%p315) target = $region20
        $region19: #{tpu_custom_call.1} parent=11 // pred_region
          _
        $region20: #{tpu_custom_call.1} parent=11 // pred_fallthru
          _
        // Predicated region
        $region21: #{tpu_custom_call.1} parent=11 // pred_check
          %p318 = pneg %p114
        $region22: #{tpu_custom_call.1} parent=11 // pred_check_branch
          %320 = sbr.rel (%p318) target = $region24
        $region23: #{tpu_custom_call.1} parent=11 // pred_region
          %s322 = ssub.s32 256, 256
          %323 = vsyncadd [#allocation7], %s322
          %s324 = sshll.u32 [#allocation8], 4
          %s325 = int_to_ptr.vmem [resolvable:$true] %s324
          %330 = dma.hbm_to_vmem [thread:$0]  %s3, 256, %s325, [#allocation7], 128, 128, 8
        $region24: #{tpu_custom_call.1} parent=11 // pred_fallthru
          _
        // Predicated region
        $region25: #{tpu_custom_call.1} parent=11 // pred_check
          %p331 = pneg %p135
        $region26: #{tpu_custom_call.1} parent=11 // pred_check_branch
          %333 = sbr.rel (%p331) target = $region28
        $region27: #{tpu_custom_call.1} parent=11 // pred_region
          _
        $region28: #{tpu_custom_call.1} parent=11 // pred_fallthru
          _
        // Predicated region
        $region29: #{tpu_custom_call.1} parent=11 // pred_check
          %p334 = pneg %p156
        $region30: #{tpu_custom_call.1} parent=11 // pred_check_branch
          %336 = sbr.rel (%p334) target = $region32
        $region31: #{tpu_custom_call.1} parent=11 // pred_region
          _
        $region32: #{tpu_custom_call.1} parent=11 // pred_fallthru
          _
        // Predicated region
        $region33: #{tpu_custom_call.1} parent=11 // pred_check
          %p337 = pneg %p177
        $region34: #{tpu_custom_call.1} parent=11 // pred_check_branch
          %339 = sbr.rel (%p337) target = $region36
        $region35: #{tpu_custom_call.1} parent=11 // pred_region
          %s341 = ssub.s32 16, 16
          %342 = vsyncadd [#allocation10], %s341
          %s344 = sshll.u32 [#allocation9], 4
          %s345 = int_to_ptr.vmem [resolvable:$true] %s344
          %347 = dma.hbm_to_vmem [thread:$0]  %s6, 16, %s345, [#allocation10]
        $region36: #{tpu_custom_call.1} parent=11 // pred_fallthru
          _
        // Predicated region
        $region37: #{tpu_custom_call.1} parent=11 // pred_check
          %p348 = pneg %p198
        $region38: #{tpu_custom_call.1} parent=11 // pred_check_branch
          %350 = sbr.rel (%p348) target = $region40
        $region39: #{tpu_custom_call.1} parent=11 // pred_region
          _
        $region40: #{tpu_custom_call.1} parent=11 // pred_fallthru
          _
        // Predicated region
        $region41: #{tpu_custom_call.1} parent=11 // pred_check
          %p351 = pneg %p219
        $region42: #{tpu_custom_call.1} parent=11 // pred_check_branch
          %353 = sbr.rel (%p351) target = $region44
        $region43: #{tpu_custom_call.1} parent=11 // pred_region
          _
        $region44: #{tpu_custom_call.1} parent=11 // pred_fallthru
          _
        // Predicated region
        $region45: #{tpu_custom_call.1} parent=11 // pred_check
          %p354 = pneg %p240
        $region46: #{tpu_custom_call.1} parent=11 // pred_check_branch
          %356 = sbr.rel (%p354) target = $region48
        $region47: #{tpu_custom_call.1} parent=11 // pred_region
          _
        $region48: #{tpu_custom_call.1} parent=11 // pred_fallthru
          _
        // Predicated region
        $region49: #{tpu_custom_call.1} parent=11 // pred_check
          %p357 = pneg %p261
        $region50: #{tpu_custom_call.1} parent=11 // pred_check_branch
          %359 = sbr.rel (%p357) target = $region52
        $region51: #{tpu_custom_call.1} parent=11 // pred_region
          _
        $region52: #{tpu_custom_call.1} parent=11 // pred_fallthru
          _
      $region12: #{tpu_custom_call.1} parent=5 // pred_fallthru
        _
      %p360 = scmp.lt.s32.totalorder %s25, 2
      // Predicated region
      $region53: #{tpu_custom_call.1} parent=5 // pred_check
        %p361 = pneg %p360
      $region54: #{tpu_custom_call.1} parent=5 // pred_check_branch
        %363 = sbr.rel (%p361) target = $region56
      $region55: #{tpu_custom_call.1} parent=5 // pred_region
        // Predicated region
        $region57: #{tpu_custom_call.1} parent=55 // pred_check
          %p364 = pneg %p45
        $region58: #{tpu_custom_call.1} parent=55 // pred_check_branch
          %366 = sbr.rel (%p364) target = $region60
        $region59: #{tpu_custom_call.1} parent=55 // pred_region
          %s367 = sand.u32 %s35, 1
          %s368 = scalar_lea.sflag [#allocation4], %s367
          %s369 = sand.u32 %s35, 1
          %s370 = smul.addr %s369, 16
          %s371 = scalar_lea.vmem [#allocation3], %s370
          %s372 = smul.u32 2, %s25
          %s374 = ssub.s32 256, 256
          %375 = vsyncadd %s368, %s374
          %s376 = smul.addr %s372, 128
          %s377 = scalar_lea.hbm %s0, %s376
          %s378 = sshll.u32 %s371, 4
          %s379 = int_to_ptr.vmem [resolvable:$true] %s378
          %384 = dma.hbm_to_vmem [thread:$0]  %s377, 256, %s379, %s368, 128, 128, 8
        $region60: #{tpu_custom_call.1} parent=55 // pred_fallthru
          _
      $region56: #{tpu_custom_call.1} parent=5 // pred_fallthru
        _
      %p385 = scmp.le.s32.totalorder 1, %s25
      %p386 = scmp.lt.s32.totalorder %s25, 3
      %p387 = pnand %p385, %p386
      %p388 = pneg %p387
      // Predicated region
      $region61: #{tpu_custom_call.1} parent=5 // pred_check
        _
      $region62: #{tpu_custom_call.1} parent=5 // pred_check_branch
        %390 = sbr.rel (%p387) target = $region64
      $region63: #{tpu_custom_call.1} parent=5 // pred_region
        %s391 = ssub.s32 %s25, 1
        %s392 = sand.u32 %s38, 1
        %s393 = scalar_lea.sflag [#allocation4], %s392
        %s394 = sand.u32 %s38, 1
        %s395 = smul.addr %s394, 16
        %s396 = scalar_lea.vmem [#allocation3], %s395
        // Predicated region
        $region65: #{tpu_custom_call.1} parent=63 // pred_check
          %p397 = pneg %p51
        $region66: #{tpu_custom_call.1} parent=63 // pred_check_branch
          %399 = sbr.rel (%p397) target = $region68
        $region67: #{tpu_custom_call.1} parent=63 // pred_region
          %400 = dma.done %s393, 256
        $region68: #{tpu_custom_call.1} parent=63 // pred_fallthru
          _
        // Predicated region
        $region69: #{tpu_custom_call.1} parent=63 // pred_check
          %p401 = pneg %p72
        $region70: #{tpu_custom_call.1} parent=63 // pred_check_branch
          %403 = sbr.rel (%p401) target = $region72
        $region71: #{tpu_custom_call.1} parent=63 // pred_region
          %404 = dma.done [#allocation7], 256
        $region72: #{tpu_custom_call.1} parent=63 // pred_fallthru
          _
        // Predicated region
        $region73: #{tpu_custom_call.1} parent=63 // pred_check
          %p405 = pneg %p114
        $region74: #{tpu_custom_call.1} parent=63 // pred_check_branch
          %407 = sbr.rel (%p405) target = $region76
        $region75: #{tpu_custom_call.1} parent=63 // pred_region
          %408 = dma.done [#allocation7], 256
        $region76: #{tpu_custom_call.1} parent=63 // pred_fallthru
          _
        // Predicated region
        $region77: #{tpu_custom_call.1} parent=63 // pred_check
          %p409 = pneg %p177
        $region78: #{tpu_custom_call.1} parent=63 // pred_check_branch
          %411 = sbr.rel (%p409) target = $region80
        $region79: #{tpu_custom_call.1} parent=63 // pred_region
          %412 = dma.done [#allocation10], 16
        $region80: #{tpu_custom_call.1} parent=63 // pred_fallthru
          _
        %s413 = sand.u32 %s38, 1
        %s414 = scalar_lea.sflag [#allocation4], %s413
        %s415 = sand.u32 %s38, 1
        %s416 = smul.addr %s415, 16
        %s417 = scalar_lea.vmem [#allocation3], %s416
        %p418 = pneg %p51
        %p419 = pneg %p48
        %p420 = pneg %p72
        %p421 = pneg %p69
        %p422 = pneg %p93
        %p423 = pneg %p90
        %p424 = pneg %p114
        %p425 = pneg %p111
        %p426 = pneg %p135
        %p427 = pneg %p132
        %p428 = pneg %p156
        %p429 = pneg %p153
        %p430 = pneg %p177
        %p431 = pneg %p174
        %p432 = pneg %p198
        %p433 = pneg %p195
        %p434 = pneg %p219
        %p435 = pneg %p216
        %p436 = pneg %p240
        %p437 = pneg %p237
        %p438 = pneg %p261
        %p439 = pneg %p258
        %p440 = pneg %p287
        %p441 = pneg %p284
        %s442 = sand.u32 %s274, 1
        %s443 = scalar_lea.sflag [#allocation5], %s442
        %s444 = sand.u32 %s274, 1
        %s445 = smul.addr %s444, 16
        %s446 = scalar_lea.vmem [#allocation11], %s445
        %s447 = smul.u32 2, %s30
        %s448 = smul.u32 2, %s30
        %v449 = vld [vmem:[%s396] sm:$0xff]
        %v450 = vld [vmem:[%s396 + $0x8] sm:$0xff]
        %v451 = vld [vmem:[#allocation6] sm:$0xff]
        %v452 = vld [vmem:[#allocation6 + $0x8] sm:$0xff]
        %v453 = vld [vmem:[%s2] sm:$0x1]
        %v455 = vlaneseq
        %v456 = vshrl.u32 %v455, 7
        %v457 = vsub.s32 0, %v456
        %v458 = vrot.slane %v453, %v457
        %vm460 = vcmask 130048
        %v462 = vsel %vm460, %v449, 0
        %v465 = vsel %vm460, %v450, 0
        %467 = vmatprep.subr.mxu0 0.0
        %468 = vmatpush1.msra.mxu0 %v451
        %469 = vmatprep.subr.mxu0 0.0
        %470 = vmatpush1.msra.mxu0 %v452
        %471 = vmatprep.subr.mxu0 0.0
        %472 = vmatpush1.msra.mxu0 0.0
        %473 = vmatprep.subr.mxu0 0.0
        %474 = vmatpush1.msra.mxu0 0.0
        %475 = vmatprep.subr.mxu0 0.0
        %476 = vmatpush1.msra.mxu0 0.0
        %477 = vmatprep.subr.mxu0 0.0
        %478 = vmatpush1.msra.mxu0 0.0
        %479 = vmatprep.subr.mxu0 0.0
        %480 = vmatpush1.msra.mxu0 0.0
        %481 = vmatprep.subr.mxu0 0.0
        %482 = vmatpush1.msra.mxu0 0.0
        %483 = vmatprep.subr.mxu0 0.0
        %484 = vmatpush1.msra.mxu0 0.0
        %485 = vmatprep.subr.mxu0 0.0
        %486 = vmatpush1.msra.mxu0 0.0
        %487 = vmatprep.subr.mxu0 0.0
        %488 = vmatpush1.msra.mxu0 0.0
        %489 = vmatprep.subr.mxu0 0.0
        %490 = vmatpush1.msra.mxu0 0.0
        %491 = vmatprep.subr.mxu0 0.0
        %492 = vmatpush1.msra.mxu0 0.0
        %493 = vmatprep.subr.mxu0 0.0
        %494 = vmatpush1.msra.mxu0 0.0
        %495 = vmatprep.subr.mxu0 0.0
        %496 = vmatpush1.msra.mxu0 0.0
        %497 = vmatprep.subr.mxu0 0.0
        %498 = vmatpush1.msra.mxu0 0.0
        %499 = vmatprep.subr.mxu0 0.0
        %500 = vmatpush1.msra.mxu0 0.0
        %501 = vmatprep.subr.mxu0 0.0
        %502 = vmatpush1.msra.mxu0 0.0
        %503 = vmatprep.subr.mxu0 0.0
        %504 = vmatpush1.msra.mxu0 0.0
        %505 = vmatprep.subr.mxu0 0.0
        %506 = vmatpush1.msra.mxu0 0.0
        %507 = vmatprep.subr.mxu0 0.0
        %508 = vmatpush1.msra.mxu0 0.0
        %509 = vmatprep.subr.mxu0 0.0
        %510 = vmatpush1.msra.mxu0 0.0
        %511 = vmatprep.subr.mxu0 0.0
        %512 = vmatpush1.msra.mxu0 0.0
        %513 = vmatprep.subr.mxu0 0.0
        %514 = vmatpush1.msra.mxu0 0.0
        %515 = vmatprep.subr.mxu0 0.0
        %516 = vmatpush1.msra.mxu0 0.0
        %517 = vmatprep.subr.mxu0 0.0
        %518 = vmatpush1.msra.mxu0 0.0
        %519 = vmatprep.subr.mxu0 0.0
        %520 = vmatpush1.msra.mxu0 0.0
        %521 = vmatprep.subr.mxu0 0.0
        %522 = vmatpush1.msra.mxu0 0.0
        %523 = vmatprep.subr.mxu0 0.0
        %524 = vmatpush1.msra.mxu0 0.0
        %525 = vmatprep.subr.mxu0 0.0
        %526 = vmatpush1.msra.mxu0 0.0
        %527 = vmatprep.subr.mxu0 0.0
        %528 = vmatpush1.msra.mxu0 0.0
        %529 = vmatprep.subr.mxu0 0.0
        %530 = vmatpush1.msra.mxu0 0.0
        %531 = vmatprep.mubr.f32.mxu0 0.0
        %532 = vmatmul.mubr.f32.gmra.mrb[0].mxu0 %v462
        %v533 = vpop.f32.mrb[0].mxu0
        %v534 = vadd.f32 %v458, %v533
        %v535 = vpop.f32.mrb[0].mxu0
        %536 = vmatprep.mubr.f32.mxu0 0.0
        %537 = vmatmul.mubr.f32.gmra.mrb[0].mxu0 %v465
        %v538 = vpop.f32.mrb[0].mxu0
        %v539 = vadd.f32 %v458, %v538
        %v540 = vpop.f32.mrb[0].mxu0
        %541 = vdwg.mxu0
        %v542 = vld [vmem:[#allocation8] sm:$0xff]
        %v543 = vld [vmem:[#allocation8 + $0x8] sm:$0xff]
        %v544 = vld [vmem:[%s4] sm:$0x1]
        %v546 = vlaneseq
        %v547 = vshrl.u32 %v546, 7
        %v548 = vsub.s32 0, %v547
        %v549 = vrot.slane %v544, %v548
        %v552 = vsel %vm460, 0.0, 0
        %554 = vmatprep.subr.mxu0 0.0
        %555 = vmatpush1.msra.mxu0 %v542
        %556 = vmatprep.subr.mxu0 0.0
        %557 = vmatpush1.msra.mxu0 %v543
        %558 = vmatprep.subr.mxu0 0.0
        %559 = vmatpush1.msra.mxu0 0.0
        %560 = vmatprep.subr.mxu0 0.0
        %561 = vmatpush1.msra.mxu0 0.0
        %562 = vmatprep.subr.mxu0 0.0
        %563 = vmatpush1.msra.mxu0 0.0
        %564 = vmatprep.subr.mxu0 0.0
        %565 = vmatpush1.msra.mxu0 0.0
        %566 = vmatprep.subr.mxu0 0.0
        %567 = vmatpush1.msra.mxu0 0.0
        %568 = vmatprep.subr.mxu0 0.0
        %569 = vmatpush1.msra.mxu0 0.0
        %570 = vmatprep.subr.mxu0 0.0
        %571 = vmatpush1.msra.mxu0 0.0
        %572 = vmatprep.subr.mxu0 0.0
        %573 = vmatpush1.msra.mxu0 0.0
        %574 = vmatprep.subr.mxu0 0.0
        %575 = vmatpush1.msra.mxu0 0.0
        %576 = vmatprep.subr.mxu0 0.0
        %577 = vmatpush1.msra.mxu0 0.0
        %578 = vmatprep.subr.mxu0 0.0
        %579 = vmatpush1.msra.mxu0 0.0
        %580 = vmatprep.subr.mxu0 0.0
        %581 = vmatpush1.msra.mxu0 0.0
        %582 = vmatprep.subr.mxu0 0.0
        %583 = vmatpush1.msra.mxu0 0.0
        %584 = vmatprep.subr.mxu0 0.0
        %585 = vmatpush1.msra.mxu0 0.0
        %586 = vmatprep.subr.mxu0 0.0
        %587 = vmatpush1.msra.mxu0 0.0
        %588 = vmatprep.subr.mxu0 0.0
        %589 = vmatpush1.msra.mxu0 0.0
        %590 = vmatprep.subr.mxu0 0.0
        %591 = vmatpush1.msra.mxu0 0.0
        %592 = vmatprep.subr.mxu0 0.0
        %593 = vmatpush1.msra.mxu0 0.0
        %594 = vmatprep.subr.mxu0 0.0
        %595 = vmatpush1.msra.mxu0 0.0
        %596 = vmatprep.subr.mxu0 0.0
        %597 = vmatpush1.msra.mxu0 0.0
        %598 = vmatprep.subr.mxu0 0.0
        %599 = vmatpush1.msra.mxu0 0.0
        %600 = vmatprep.subr.mxu0 0.0
        %601 = vmatpush1.msra.mxu0 0.0
        %602 = vmatprep.subr.mxu0 0.0
        %603 = vmatpush1.msra.mxu0 0.0
        %604 = vmatprep.subr.mxu0 0.0
        %605 = vmatpush1.msra.mxu0 0.0
        %606 = vmatprep.subr.mxu0 0.0
        %607 = vmatpush1.msra.mxu0 0.0
        %608 = vmatprep.subr.mxu0 0.0
        %609 = vmatpush1.msra.mxu0 0.0
        %610 = vmatprep.subr.mxu0 0.0
        %611 = vmatpush1.msra.mxu0 0.0
        %612 = vmatprep.subr.mxu0 0.0
        %613 = vmatpush1.msra.mxu0 0.0
        %614 = vmatprep.subr.mxu0 0.0
        %615 = vmatpush1.msra.mxu0 0.0
        %616 = vmatprep.subr.mxu0 0.0
        %617 = vmatpush1.msra.mxu0 0.0
        %618 = vmatprep.mubr.f32.mxu0 0.0
        %619 = vmatmul.mubr.f32.gmra.mrb[0].mxu0 %v552
        %v620 = vpop.f32.mrb[0].mxu0
        %v621 = vadd.f32 %v549, %v620
        %v622 = vpop.f32.mrb[0].mxu0
        %623 = vdwg.mxu0
        %v625 = vrot.slane %v621, 1
        %v628 = vadd.f32 %v534, %v621
        %v629 = vadd.f32 %v539, %v625
        %v630 = vxor.u32 %v628, 2147483648
        %v631 = vxor.u32 %v629, 2147483648
        %v632 = vmul.f32 %v630, 1.442695
        %v633 = vpow.pop %v632
        %v634 = vmul.f32 %v631, 1.442695
        %v635 = vpow.pop %v634
        %v636 = vadd.f32 %v633, 1.0
        %v637 = vadd.f32 %v635, 1.0
        %v638 = vrcp.pop %v636
        %v639 = vmul.f32 1.0, %v638
        %v640 = vrcp.pop %v637
        %v641 = vmul.f32 1.0, %v640
        %642 = vrot.lane.b32.xlu0 %v621, 96
        %v643 = vpop.permute.xlu0 %642
        %644 = vrot.lane.b32.xlu0 %v625, 96
        %v645 = vpop.permute.xlu0 %644
        %v648 = vmul.f32 %v639, %v643
        %v649 = vmul.f32 %v641, %v645
        %652 = vrot.lane.b32.xlu0 %v648, 32
        %v653 = vpop.permute.xlu0 %652
        %654 = vrot.lane.b32.xlu0 %v649, 32
        %v655 = vpop.permute.xlu0 %654
        %v658 = vadd.f32 %v534, %v653
        %v659 = vadd.f32 %v539, %v655
        %v660 = vtanh.pop %v658
        %v661 = vtanh.pop %v659
        %v662 = vsub.f32 1.0, %v639
        %v663 = vsub.f32 1.0, %v641
        %666 = vrot.lane.b32.xlu0 %v660, 112
        %v667 = vpop.permute.xlu0 %666
        %668 = vrot.lane.b32.xlu0 %v661, 112
        %v669 = vpop.permute.xlu0 %668
        %v672 = vmul.f32 %v662, %v667
        %v673 = vmul.f32 %v663, %v669
        %v674 = vmul.f32 %v639, 0.0
        %v675 = vmul.f32 %v641, 0.0
        %v676 = vadd.f32 %v672, %v674
        %v677 = vadd.f32 %v673, %v675
        %680 = vrot.lane.b32.xlu0 %v676, 112
        %v681 = vpop.permute.xlu0 %680
        %682 = vrot.lane.b32.xlu0 %v677, 112
        %v683 = vpop.permute.xlu0 %682
        %vm686 = vcmask 122880
        %687 = vst.msk [vmem:[#allocation2] sm:$0x1] %vm686, %v681
        %688 = vst.msk [vmem:[#allocation2 + $0x8] sm:$0x1] %vm686, %v683
        %v689 = vrot.slane %v677, 7
        %vm690 = vcmask 1041409
        %v691 = vsel %vm690, %v689, %v676
        %692 = vrot.lane.b32.xlu0 %v691, 112
        %v693 = vpop.permute.xlu0 %692
        %v694 = vsel %vm460, %v693, 0
        %696 = vmatprep.subr.mxu0 0.0
        %697 = vmatpush1.msra.mxu0 %v542
        %698 = vmatprep.subr.mxu0 0.0
        %699 = vmatpush1.msra.mxu0 %v543
        %700 = vmatprep.subr.mxu0 0.0
        %701 = vmatpush1.msra.mxu0 0.0
        %702 = vmatprep.subr.mxu0 0.0
        %703 = vmatpush1.msra.mxu0 0.0
        %704 = vmatprep.subr.mxu0 0.0
        %705 = vmatpush1.msra.mxu0 0.0
        %706 = vmatprep.subr.mxu0 0.0
        %707 = vmatpush1.msra.mxu0 0.0
        %708 = vmatprep.subr.mxu0 0.0
        %709 = vmatpush1.msra.mxu0 0.0
        %710 = vmatprep.subr.mxu0 0.0
        %711 = vmatpush1.msra.mxu0 0.0
        %712 = vmatprep.subr.mxu0 0.0
        %713 = vmatpush1.msra.mxu0 0.0
        %714 = vmatprep.subr.mxu0 0.0
        %715 = vmatpush1.msra.mxu0 0.0
        %716 = vmatprep.subr.mxu0 0.0
        %717 = vmatpush1.msra.mxu0 0.0
        %718 = vmatprep.subr.mxu0 0.0
        %719 = vmatpush1.msra.mxu0 0.0
        %720 = vmatprep.subr.mxu0 0.0
        %721 = vmatpush1.msra.mxu0 0.0
        %722 = vmatprep.subr.mxu0 0.0
        %723 = vmatpush1.msra.mxu0 0.0
        %724 = vmatprep.subr.mxu0 0.0
        %725 = vmatpush1.msra.mxu0 0.0
        %726 = vmatprep.subr.mxu0 0.0
        %727 = vmatpush1.msra.mxu0 0.0
        %728 = vmatprep.subr.mxu0 0.0
        %729 = vmatpush1.msra.mxu0 0.0
        %730 = vmatprep.subr.mxu0 0.0
        %731 = vmatpush1.msra.mxu0 0.0
        %732 = vmatprep.subr.mxu0 0.0
        %733 = vmatpush1.msra.mxu0 0.0
        %734 = vmatprep.subr.mxu0 0.0
        %735 = vmatpush1.msra.mxu0 0.0
        %736 = vmatprep.subr.mxu0 0.0
        %737 = vmatpush1.msra.mxu0 0.0
        %738 = vmatprep.subr.mxu0 0.0
        %739 = vmatpush1.msra.mxu0 0.0
        %740 = vmatprep.subr.mxu0 0.0
        %741 = vmatpush1.msra.mxu0 0.0
        %742 = vmatprep.subr.mxu0 0.0
        %743 = vmatpush1.msra.mxu0 0.0
        %744 = vmatprep.subr.mxu0 0.0
        %745 = vmatpush1.msra.mxu0 0.0
        %746 = vmatprep.subr.mxu0 0.0
        %747 = vmatpush1.msra.mxu0 0.0
        %748 = vmatprep.subr.mxu0 0.0
        %749 = vmatpush1.msra.mxu0 0.0
        %750 = vmatprep.subr.mxu0 0.0
        %751 = vmatpush1.msra.mxu0 0.0
        %752 = vmatprep.subr.mxu0 0.0
        %753 = vmatpush1.msra.mxu0 0.0
        %754 = vmatprep.subr.mxu0 0.0
        %755 = vmatpush1.msra.mxu0 0.0
        %756 = vmatprep.subr.mxu0 0.0
        %757 = vmatpush1.msra.mxu0 0.0
        %758 = vmatprep.subr.mxu0 0.0
        %759 = vmatpush1.msra.mxu0 0.0
        %760 = vmatprep.mubr.f32.mxu0 0.0
        %761 = vmatmul.mubr.f32.gmra.mrb[0].mxu0 %v694
        %v762 = vpop.f32.mrb[0].mxu0
        %v763 = vadd.f32 %v549, %v762
        %v764 = vpop.f32.mrb[0].mxu0
        %765 = vdwg.mxu0
        %v767 = vrot.slane %v763, 7
        %v770 = vadd.f32 %v534, %v767
        %v771 = vadd.f32 %v539, %v763
        %v772 = vxor.u32 %v770, 2147483648
        %v773 = vxor.u32 %v771, 2147483648
        %v774 = vmul.f32 %v772, 1.442695
        %v775 = vpow.pop %v774
        %v776 = vmul.f32 %v773, 1.442695
        %v777 = vpow.pop %v776
        %v778 = vadd.f32 %v775, 1.0
        %v779 = vadd.f32 %v777, 1.0
        %v780 = vrcp.pop %v778
        %v781 = vmul.f32 1.0, %v780
        %v782 = vrcp.pop %v779
        %v783 = vmul.f32 1.0, %v782
        %784 = vrot.lane.b32.xlu0 %v767, 96
        %v785 = vpop.permute.xlu0 %784
        %786 = vrot.lane.b32.xlu0 %v763, 96
        %v787 = vpop.permute.xlu0 %786
        %v790 = vmul.f32 %v781, %v785
        %v791 = vmul.f32 %v783, %v787
        %794 = vrot.lane.b32.xlu0 %v790, 32
        %v795 = vpop.permute.xlu0 %794
        %796 = vrot.lane.b32.xlu0 %v791, 32
        %v797 = vpop.permute.xlu0 %796
        %v800 = vadd.f32 %v534, %v795
        %v801 = vadd.f32 %v539, %v797
        %v802 = vtanh.pop %v800
        %v803 = vtanh.pop %v801
        %v804 = vsub.f32 1.0, %v781
        %v805 = vsub.f32 1.0, %v783
        %808 = vrot.lane.b32.xlu0 %v802, 112
        %v809 = vpop.permute.xlu0 %808
        %810 = vrot.lane.b32.xlu0 %v803, 112
        %v811 = vpop.permute.xlu0 %810
        %v814 = vmul.f32 %v804, %v809
        %v815 = vmul.f32 %v805, %v811
        %v816 = vrot.slane %v676, 7
        %v819 = vmul.f32 %v781, %v816
        %v820 = vmul.f32 %v783, %v689
        %v821 = vadd.f32 %v814, %v819
        %v822 = vadd.f32 %v815, %v820
        %825 = vrot.lane.b32.xlu0 %v821, 112
        %v826 = vpop.permute.xlu0 %825
        %827 = vrot.lane.b32.xlu0 %v822, 112
        %v828 = vpop.permute.xlu0 %827
        %vm831 = vcmask 123905
        %832 = vst.msk [vmem:[#allocation2] sm:$0x2] %vm831, %v826
        %833 = vst.msk [vmem:[#allocation2 + $0x8] sm:$0x2] %vm831, %v828
        %v834 = vrot.slane %v821, 1
        %v835 = vsel %vm690, %v822, %v834
        %836 = vrot.lane.b32.xlu0 %v835, 112
        %v837 = vpop.permute.xlu0 %836
        %v838 = vsel %vm460, %v837, 0
        %840 = vmatprep.subr.mxu0 0.0
        %841 = vmatpush1.msra.mxu0 %v542
        %842 = vmatprep.subr.mxu0 0.0
        %843 = vmatpush1.msra.mxu0 %v543
        %844 = vmatprep.subr.mxu0 0.0
        %845 = vmatpush1.msra.mxu0 0.0
        %846 = vmatprep.subr.mxu0 0.0
        %847 = vmatpush1.msra.mxu0 0.0
        %848 = vmatprep.subr.mxu0 0.0
        %849 = vmatpush1.msra.mxu0 0.0
        %850 = vmatprep.subr.mxu0 0.0
        %851 = vmatpush1.msra.mxu0 0.0
        %852 = vmatprep.subr.mxu0 0.0
        %853 = vmatpush1.msra.mxu0 0.0
        %854 = vmatprep.subr.mxu0 0.0
        %855 = vmatpush1.msra.mxu0 0.0
        %856 = vmatprep.subr.mxu0 0.0
        %857 = vmatpush1.msra.mxu0 0.0
        %858 = vmatprep.subr.mxu0 0.0
        %859 = vmatpush1.msra.mxu0 0.0
        %860 = vmatprep.subr.mxu0 0.0
        %861 = vmatpush1.msra.mxu0 0.0
        %862 = vmatprep.subr.mxu0 0.0
        %863 = vmatpush1.msra.mxu0 0.0
        %864 = vmatprep.subr.mxu0 0.0
        %865 = vmatpush1.msra.mxu0 0.0
        %866 = vmatprep.subr.mxu0 0.0
        %867 = vmatpush1.msra.mxu0 0.0
        %868 = vmatprep.subr.mxu0 0.0
        %869 = vmatpush1.msra.mxu0 0.0
        %870 = vmatprep.subr.mxu0 0.0
        %871 = vmatpush1.msra.mxu0 0.0
        %872 = vmatprep.subr.mxu0 0.0
        %873 = vmatpush1.msra.mxu0 0.0
        %874 = vmatprep.subr.mxu0 0.0
        %875 = vmatpush1.msra.mxu0 0.0
        %876 = vmatprep.subr.mxu0 0.0
        %877 = vmatpush1.msra.mxu0 0.0
        %878 = vmatprep.subr.mxu0 0.0
        %879 = vmatpush1.msra.mxu0 0.0
        %880 = vmatprep.subr.mxu0 0.0
        %881 = vmatpush1.msra.mxu0 0.0
        %882 = vmatprep.subr.mxu0 0.0
        %883 = vmatpush1.msra.mxu0 0.0
        %884 = vmatprep.subr.mxu0 0.0
        %885 = vmatpush1.msra.mxu0 0.0
        %886 = vmatprep.subr.mxu0 0.0
        %887 = vmatpush1.msra.mxu0 0.0
        %888 = vmatprep.subr.mxu0 0.0
        %889 = vmatpush1.msra.mxu0 0.0
        %890 = vmatprep.subr.mxu0 0.0
        %891 = vmatpush1.msra.mxu0 0.0
        %892 = vmatprep.subr.mxu0 0.0
        %893 = vmatpush1.msra.mxu0 0.0
        %894 = vmatprep.subr.mxu0 0.0
        %895 = vmatpush1.msra.mxu0 0.0
        %896 = vmatprep.subr.mxu0 0.0
        %897 = vmatpush1.msra.mxu0 0.0
        %898 = vmatprep.subr.mxu0 0.0
        %899 = vmatpush1.msra.mxu0 0.0
        %900 = vmatprep.subr.mxu0 0.0
        %901 = vmatpush1.msra.mxu0 0.0
        %902 = vmatprep.subr.mxu0 0.0
        %903 = vmatpush1.msra.mxu0 0.0
        %904 = vmatprep.mubr.f32.mxu0 0.0
        %905 = vmatmul.mubr.f32.gmra.mrb[0].mxu0 %v838
        %v906 = vpop.f32.mrb[0].mxu0
        %v907 = vadd.f32 %v549, %v906
        %v908 = vpop.f32.mrb[0].mxu0
        %909 = vdwg.mxu0
        %v911 = vrot.slane %v907, 6
        %v912 = vrot.slane %v907, 7
        %v915 = vadd.f32 %v534, %v911
        %v916 = vadd.f32 %v539, %v912
        %v917 = vxor.u32 %v915, 2147483648
        %v918 = vxor.u32 %v916, 2147483648
        %v919 = vmul.f32 %v917, 1.442695
        %v920 = vpow.pop %v919
        %v921 = vmul.f32 %v918, 1.442695
        %v922 = vpow.pop %v921
        %v923 = vadd.f32 %v920, 1.0
        %v924 = vadd.f32 %v922, 1.0
        %v925 = vrcp.pop %v923
        %v926 = vmul.f32 1.0, %v925
        %v927 = vrcp.pop %v924
        %v928 = vmul.f32 1.0, %v927
        %929 = vrot.lane.b32.xlu0 %v911, 96
        %v930 = vpop.permute.xlu0 %929
        %931 = vrot.lane.b32.xlu0 %v912, 96
        %v932 = vpop.permute.xlu0 %931
        %v935 = vmul.f32 %v926, %v930
        %v936 = vmul.f32 %v928, %v932
        %939 = vrot.lane.b32.xlu0 %v935, 32
        %v940 = vpop.permute.xlu0 %939
        %941 = vrot.lane.b32.xlu0 %v936, 32
        %v942 = vpop.permute.xlu0 %941
        %v945 = vadd.f32 %v534, %v940
        %v946 = vadd.f32 %v539, %v942
        %v947 = vtanh.pop %v945
        %v948 = vtanh.pop %v946
        %v949 = vsub.f32 1.0, %v926
        %v950 = vsub.f32 1.0, %v928
        %953 = vrot.lane.b32.xlu0 %v947, 112
        %v954 = vpop.permute.xlu0 %953
        %955 = vrot.lane.b32.xlu0 %v948, 112
        %v956 = vpop.permute.xlu0 %955
        %v959 = vmul.f32 %v949, %v954
        %v960 = vmul.f32 %v950, %v956
        %v961 = vrot.slane %v821, 7
        %v962 = vrot.slane %v822, 7
        %v965 = vmul.f32 %v926, %v961
        %v966 = vmul.f32 %v928, %v962
        %v967 = vadd.f32 %v959, %v965
        %v968 = vadd.f32 %v960, %v966
        %971 = vrot.lane.b32.xlu0 %v967, 112
        %v972 = vpop.permute.xlu0 %971
        %973 = vrot.lane.b32.xlu0 %v968, 112
        %v974 = vpop.permute.xlu0 %973
        %vm977 = vcmask 124930
        %978 = vst.msk [vmem:[#allocation2] sm:$0x4] %vm977, %v972
        %979 = vst.msk [vmem:[#allocation2 + $0x8] sm:$0x4] %vm977, %v974
        %v980 = vrot.slane %v967, 2
        %v981 = vrot.slane %v968, 1
        %v982 = vsel %vm690, %v981, %v980
        %983 = vrot.lane.b32.xlu0 %v982, 112
        %v984 = vpop.permute.xlu0 %983
        %v985 = vsel %vm460, %v984, 0
        %987 = vmatprep.subr.mxu0 0.0
        %988 = vmatpush1.msra.mxu0 %v542
        %989 = vmatprep.subr.mxu0 0.0
        %990 = vmatpush1.msra.mxu0 %v543
        %991 = vmatprep.subr.mxu0 0.0
        %992 = vmatpush1.msra.mxu0 0.0
        %993 = vmatprep.subr.mxu0 0.0
        %994 = vmatpush1.msra.mxu0 0.0
        %995 = vmatprep.subr.mxu0 0.0
        %996 = vmatpush1.msra.mxu0 0.0
        %997 = vmatprep.subr.mxu0 0.0
        %998 = vmatpush1.msra.mxu0 0.0
        %999 = vmatprep.subr.mxu0 0.0
        %1000 = vmatpush1.msra.mxu0 0.0
        %1001 = vmatprep.subr.mxu0 0.0
        %1002 = vmatpush1.msra.mxu0 0.0
        %1003 = vmatprep.subr.mxu0 0.0
        %1004 = vmatpush1.msra.mxu0 0.0
        %1005 = vmatprep.subr.mxu0 0.0
        %1006 = vmatpush1.msra.mxu0 0.0
        %1007 = vmatprep.subr.mxu0 0.0
        %1008 = vmatpush1.msra.mxu0 0.0
        %1009 = vmatprep.subr.mxu0 0.0
        %1010 = vmatpush1.msra.mxu0 0.0
        %1011 = vmatprep.subr.mxu0 0.0
        %1012 = vmatpush1.msra.mxu0 0.0
        %1013 = vmatprep.subr.mxu0 0.0
        %1014 = vmatpush1.msra.mxu0 0.0
        %1015 = vmatprep.subr.mxu0 0.0
        %1016 = vmatpush1.msra.mxu0 0.0
        %1017 = vmatprep.subr.mxu0 0.0
        %1018 = vmatpush1.msra.mxu0 0.0
        %1019 = vmatprep.subr.mxu0 0.0
        %1020 = vmatpush1.msra.mxu0 0.0
        %1021 = vmatprep.subr.mxu0 0.0
        %1022 = vmatpush1.msra.mxu0 0.0
        %1023 = vmatprep.subr.mxu0 0.0
        %1024 = vmatpush1.msra.mxu0 0.0
        %1025 = vmatprep.subr.mxu0 0.0
        %1026 = vmatpush1.msra.mxu0 0.0
        %1027 = vmatprep.subr.mxu0 0.0
        %1028 = vmatpush1.msra.mxu0 0.0
        %1029 = vmatprep.subr.mxu0 0.0
        %1030 = vmatpush1.msra.mxu0 0.0
        %1031 = vmatprep.subr.mxu0 0.0
        %1032 = vmatpush1.msra.mxu0 0.0
        %1033 = vmatprep.subr.mxu0 0.0
        %1034 = vmatpush1.msra.mxu0 0.0
        %1035 = vmatprep.subr.mxu0 0.0
        %1036 = vmatpush1.msra.mxu0 0.0
        %1037 = vmatprep.subr.mxu0 0.0
        %1038 = vmatpush1.msra.mxu0 0.0
        %1039 = vmatprep.subr.mxu0 0.0
        %1040 = vmatpush1.msra.mxu0 0.0
        %1041 = vmatprep.subr.mxu0 0.0
        %1042 = vmatpush1.msra.mxu0 0.0
        %1043 = vmatprep.subr.mxu0 0.0
        %1044 = vmatpush1.msra.mxu0 0.0
        %1045 = vmatprep.subr.mxu0 0.0
        %1046 = vmatpush1.msra.mxu0 0.0
        %1047 = vmatprep.subr.mxu0 0.0
        %1048 = vmatpush1.msra.mxu0 0.0
        %1049 = vmatprep.subr.mxu0 0.0
        %1050 = vmatpush1.msra.mxu0 0.0
        %1051 = vmatprep.mubr.f32.mxu0 0.0
        %1052 = vmatmul.mubr.f32.gmra.mrb[0].mxu0 %v985
        %v1053 = vpop.f32.mrb[0].mxu0
        %v1054 = vadd.f32 %v549, %v1053
        %v1055 = vpop.f32.mrb[0].mxu0
        %1056 = vdwg.mxu0
        %v1058 = vrot.slane %v1054, 5
        %v1059 = vrot.slane %v1054, 6
        %v1062 = vadd.f32 %v534, %v1058
        %v1063 = vadd.f32 %v539, %v1059
        %v1064 = vxor.u32 %v1062, 2147483648
        %v1065 = vxor.u32 %v1063, 2147483648
        %v1066 = vmul.f32 %v1064, 1.442695
        %v1067 = vpow.pop %v1066
        %v1068 = vmul.f32 %v1065, 1.442695
        %v1069 = vpow.pop %v1068
        %v1070 = vadd.f32 %v1067, 1.0
        %v1071 = vadd.f32 %v1069, 1.0
        %v1072 = vrcp.pop %v1070
        %v1073 = vmul.f32 1.0, %v1072
        %v1074 = vrcp.pop %v1071
        %v1075 = vmul.f32 1.0, %v1074
        %1076 = vrot.lane.b32.xlu0 %v1058, 96
        %v1077 = vpop.permute.xlu0 %1076
        %1078 = vrot.lane.b32.xlu0 %v1059, 96
        %v1079 = vpop.permute.xlu0 %1078
        %v1082 = vmul.f32 %v1073, %v1077
        %v1083 = vmul.f32 %v1075, %v1079
        %1086 = vrot.lane.b32.xlu0 %v1082, 32
        %v1087 = vpop.permute.xlu0 %1086
        %1088 = vrot.lane.b32.xlu0 %v1083, 32
        %v1089 = vpop.permute.xlu0 %1088
        %v1092 = vadd.f32 %v534, %v1087
        %v1093 = vadd.f32 %v539, %v1089
        %v1094 = vtanh.pop %v1092
        %v1095 = vtanh.pop %v1093
        %v1096 = vsub.f32 1.0, %v1073
        %v1097 = vsub.f32 1.0, %v1075
        %1100 = vrot.lane.b32.xlu0 %v1094, 112
        %v1101 = vpop.permute.xlu0 %1100
        %1102 = vrot.lane.b32.xlu0 %v1095, 112
        %v1103 = vpop.permute.xlu0 %1102
        %v1106 = vmul.f32 %v1096, %v1101
        %v1107 = vmul.f32 %v1097, %v1103
        %v1108 = vrot.slane %v967, 7
        %v1109 = vrot.slane %v968, 7
        %v1112 = vmul.f32 %v1073, %v1108
        %v1113 = vmul.f32 %v1075, %v1109
        %v1114 = vadd.f32 %v1106, %v1112
        %v1115 = vadd.f32 %v1107, %v1113
        %1118 = vrot.lane.b32.xlu0 %v1114, 112
        %v1119 = vpop.permute.xlu0 %1118
        %1120 = vrot.lane.b32.xlu0 %v1115, 112
        %v1121 = vpop.permute.xlu0 %1120
        %vm1124 = vcmask 125955
        %1125 = vst.msk [vmem:[#allocation2] sm:$0x8] %vm1124, %v1119
        %1126 = vst.msk [vmem:[#allocation2 + $0x8] sm:$0x8] %vm1124, %v1121
        %v1127 = vrot.slane %v1114, 3
        %v1128 = vrot.slane %v1115, 2
        %v1129 = vsel %vm690, %v1128, %v1127
        %1130 = vrot.lane.b32.xlu0 %v1129, 112
        %v1131 = vpop.permute.xlu0 %1130
        %v1132 = vsel %vm460, %v1131, 0
        %1134 = vmatprep.subr.mxu0 0.0
        %1135 = vmatpush1.msra.mxu0 %v542
        %1136 = vmatprep.subr.mxu0 0.0
        %1137 = vmatpush1.msra.mxu0 %v543
        %1138 = vmatprep.subr.mxu0 0.0
        %1139 = vmatpush1.msra.mxu0 0.0
        %1140 = vmatprep.subr.mxu0 0.0
        %1141 = vmatpush1.msra.mxu0 0.0
        %1142 = vmatprep.subr.mxu0 0.0
        %1143 = vmatpush1.msra.mxu0 0.0
        %1144 = vmatprep.subr.mxu0 0.0
        %1145 = vmatpush1.msra.mxu0 0.0
        %1146 = vmatprep.subr.mxu0 0.0
        %1147 = vmatpush1.msra.mxu0 0.0
        %1148 = vmatprep.subr.mxu0 0.0
        %1149 = vmatpush1.msra.mxu0 0.0
        %1150 = vmatprep.subr.mxu0 0.0
        %1151 = vmatpush1.msra.mxu0 0.0
        %1152 = vmatprep.subr.mxu0 0.0
        %1153 = vmatpush1.msra.mxu0 0.0
        %1154 = vmatprep.subr.mxu0 0.0
        %1155 = vmatpush1.msra.mxu0 0.0
        %1156 = vmatprep.subr.mxu0 0.0
        %1157 = vmatpush1.msra.mxu0 0.0
        %1158 = vmatprep.subr.mxu0 0.0
        %1159 = vmatpush1.msra.mxu0 0.0
        %1160 = vmatprep.subr.mxu0 0.0
        %1161 = vmatpush1.msra.mxu0 0.0
        %1162 = vmatprep.subr.mxu0 0.0
        %1163 = vmatpush1.msra.mxu0 0.0
        %1164 = vmatprep.subr.mxu0 0.0
        %1165 = vmatpush1.msra.mxu0 0.0
        %1166 = vmatprep.subr.mxu0 0.0
        %1167 = vmatpush1.msra.mxu0 0.0
        %1168 = vmatprep.subr.mxu0 0.0
        %1169 = vmatpush1.msra.mxu0 0.0
        %1170 = vmatprep.subr.mxu0 0.0
        %1171 = vmatpush1.msra.mxu0 0.0
        %1172 = vmatprep.subr.mxu0 0.0
        %1173 = vmatpush1.msra.mxu0 0.0
        %1174 = vmatprep.subr.mxu0 0.0
        %1175 = vmatpush1.msra.mxu0 0.0
        %1176 = vmatprep.subr.mxu0 0.0
        %1177 = vmatpush1.msra.mxu0 0.0
        %1178 = vmatprep.subr.mxu0 0.0
        %1179 = vmatpush1.msra.mxu0 0.0
        %1180 = vmatprep.subr.mxu0 0.0
        %1181 = vmatpush1.msra.mxu0 0.0
        %1182 = vmatprep.subr.mxu0 0.0
        %1183 = vmatpush1.msra.mxu0 0.0
        %1184 = vmatprep.subr.mxu0 0.0
        %1185 = vmatpush1.msra.mxu0 0.0
        %1186 = vmatprep.subr.mxu0 0.0
        %1187 = vmatpush1.msra.mxu0 0.0
        %1188 = vmatprep.subr.mxu0 0.0
        %1189 = vmatpush1.msra.mxu0 0.0
        %1190 = vmatprep.subr.mxu0 0.0
        %1191 = vmatpush1.msra.mxu0 0.0
        %1192 = vmatprep.subr.mxu0 0.0
        %1193 = vmatpush1.msra.mxu0 0.0
        %1194 = vmatprep.subr.mxu0 0.0
        %1195 = vmatpush1.msra.mxu0 0.0
        %1196 = vmatprep.subr.mxu0 0.0
        %1197 = vmatpush1.msra.mxu0 0.0
        %1198 = vmatprep.mubr.f32.mxu0 0.0
        %1199 = vmatmul.mubr.f32.gmra.mrb[0].mxu0 %v1132
        %v1200 = vpop.f32.mrb[0].mxu0
        %v1201 = vadd.f32 %v549, %v1200
        %v1202 = vpop.f32.mrb[0].mxu0
        %1203 = vdwg.mxu0
        %v1205 = vrot.slane %v1201, 4
        %v1206 = vrot.slane %v1201, 5
        %v1209 = vadd.f32 %v534, %v1205
        %v1210 = vadd.f32 %v539, %v1206
        %v1211 = vxor.u32 %v1209, 2147483648
        %v1212 = vxor.u32 %v1210, 2147483648
        %v1213 = vmul.f32 %v1211, 1.442695
        %v1214 = vpow.pop %v1213
        %v1215 = vmul.f32 %v1212, 1.442695
        %v1216 = vpow.pop %v1215
        %v1217 = vadd.f32 %v1214, 1.0
        %v1218 = vadd.f32 %v1216, 1.0
        %v1219 = vrcp.pop %v1217
        %v1220 = vmul.f32 1.0, %v1219
        %v1221 = vrcp.pop %v1218
        %v1222 = vmul.f32 1.0, %v1221
        %1223 = vrot.lane.b32.xlu0 %v1205, 96
        %v1224 = vpop.permute.xlu0 %1223
        %1225 = vrot.lane.b32.xlu0 %v1206, 96
        %v1226 = vpop.permute.xlu0 %1225
        %v1229 = vmul.f32 %v1220, %v1224
        %v1230 = vmul.f32 %v1222, %v1226
        %1233 = vrot.lane.b32.xlu0 %v1229, 32
        %v1234 = vpop.permute.xlu0 %1233
        %1235 = vrot.lane.b32.xlu0 %v1230, 32
        %v1236 = vpop.permute.xlu0 %1235
        %v1239 = vadd.f32 %v534, %v1234
        %v1240 = vadd.f32 %v539, %v1236
        %v1241 = vtanh.pop %v1239
        %v1242 = vtanh.pop %v1240
        %v1243 = vsub.f32 1.0, %v1220
        %v1244 = vsub.f32 1.0, %v1222
        %1247 = vrot.lane.b32.xlu0 %v1241, 112
        %v1248 = vpop.permute.xlu0 %1247
        %1249 = vrot.lane.b32.xlu0 %v1242, 112
        %v1250 = vpop.permute.xlu0 %1249
        %v1253 = vmul.f32 %v1243, %v1248
        %v1254 = vmul.f32 %v1244, %v1250
        %v1255 = vrot.slane %v1114, 7
        %v1256 = vrot.slane %v1115, 7
        %v1259 = vmul.f32 %v1220, %v1255
        %v1260 = vmul.f32 %v1222, %v1256
        %v1261 = vadd.f32 %v1253, %v1259
        %v1262 = vadd.f32 %v1254, %v1260
        %1265 = vrot.lane.b32.xlu0 %v1261, 112
        %v1266 = vpop.permute.xlu0 %1265
        %1267 = vrot.lane.b32.xlu0 %v1262, 112
        %v1268 = vpop.permute.xlu0 %1267
        %vm1271 = vcmask 126980
        %1272 = vst.msk [vmem:[#allocation2] sm:$0x10] %vm1271, %v1266
        %1273 = vst.msk [vmem:[#allocation2 + $0x8] sm:$0x10] %vm1271, %v1268
        %v1274 = vrot.slane %v1261, 4
        %v1275 = vrot.slane %v1262, 3
        %v1276 = vsel %vm690, %v1275, %v1274
        %1277 = vrot.lane.b32.xlu0 %v1276, 112
        %v1278 = vpop.permute.xlu0 %1277
        %v1279 = vsel %vm460, %v1278, 0
        %1281 = vmatprep.subr.mxu0 0.0
        %1282 = vmatpush1.msra.mxu0 %v542
        %1283 = vmatprep.subr.mxu0 0.0
        %1284 = vmatpush1.msra.mxu0 %v543
        %1285 = vmatprep.subr.mxu0 0.0
        %1286 = vmatpush1.msra.mxu0 0.0
        %1287 = vmatprep.subr.mxu0 0.0
        %1288 = vmatpush1.msra.mxu0 0.0
        %1289 = vmatprep.subr.mxu0 0.0
        %1290 = vmatpush1.msra.mxu0 0.0
        %1291 = vmatprep.subr.mxu0 0.0
        %1292 = vmatpush1.msra.mxu0 0.0
        %1293 = vmatprep.subr.mxu0 0.0
        %1294 = vmatpush1.msra.mxu0 0.0
        %1295 = vmatprep.subr.mxu0 0.0
        %1296 = vmatpush1.msra.mxu0 0.0
        %1297 = vmatprep.subr.mxu0 0.0
        %1298 = vmatpush1.msra.mxu0 0.0
        %1299 = vmatprep.subr.mxu0 0.0
        %1300 = vmatpush1.msra.mxu0 0.0
        %1301 = vmatprep.subr.mxu0 0.0
        %1302 = vmatpush1.msra.mxu0 0.0
        %1303 = vmatprep.subr.mxu0 0.0
        %1304 = vmatpush1.msra.mxu0 0.0
        %1305 = vmatprep.subr.mxu0 0.0
        %1306 = vmatpush1.msra.mxu0 0.0
        %1307 = vmatprep.subr.mxu0 0.0
        %1308 = vmatpush1.msra.mxu0 0.0
        %1309 = vmatprep.subr.mxu0 0.0
        %1310 = vmatpush1.msra.mxu0 0.0
        %1311 = vmatprep.subr.mxu0 0.0
        %1312 = vmatpush1.msra.mxu0 0.0
        %1313 = vmatprep.subr.mxu0 0.0
        %1314 = vmatpush1.msra.mxu0 0.0
        %1315 = vmatprep.subr.mxu0 0.0
        %1316 = vmatpush1.msra.mxu0 0.0
        %1317 = vmatprep.subr.mxu0 0.0
        %1318 = vmatpush1.msra.mxu0 0.0
        %1319 = vmatprep.subr.mxu0 0.0
        %1320 = vmatpush1.msra.mxu0 0.0
        %1321 = vmatprep.subr.mxu0 0.0
        %1322 = vmatpush1.msra.mxu0 0.0
        %1323 = vmatprep.subr.mxu0 0.0
        %1324 = vmatpush1.msra.mxu0 0.0
        %1325 = vmatprep.subr.mxu0 0.0
        %1326 = vmatpush1.msra.mxu0 0.0
        %1327 = vmatprep.subr.mxu0 0.0
        %1328 = vmatpush1.msra.mxu0 0.0
        %1329 = vmatprep.subr.mxu0 0.0
        %1330 = vmatpush1.msra.mxu0 0.0
        %1331 = vmatprep.subr.mxu0 0.0
        %1332 = vmatpush1.msra.mxu0 0.0
        %1333 = vmatprep.subr.mxu0 0.0
        %1334 = vmatpush1.msra.mxu0 0.0
        %1335 = vmatprep.subr.mxu0 0.0
        %1336 = vmatpush1.msra.mxu0 0.0
        %1337 = vmatprep.subr.mxu0 0.0
        %1338 = vmatpush1.msra.mxu0 0.0
        %1339 = vmatprep.subr.mxu0 0.0
        %1340 = vmatpush1.msra.mxu0 0.0
        %1341 = vmatprep.subr.mxu0 0.0
        %1342 = vmatpush1.msra.mxu0 0.0
        %1343 = vmatprep.subr.mxu0 0.0
        %1344 = vmatpush1.msra.mxu0 0.0
        %1345 = vmatprep.mubr.f32.mxu0 0.0
        %1346 = vmatmul.mubr.f32.gmra.mrb[0].mxu0 %v1279
        %v1347 = vpop.f32.mrb[0].mxu0
        %v1348 = vadd.f32 %v549, %v1347
        %v1349 = vpop.f32.mrb[0].mxu0
        %1350 = vdwg.mxu0
        %v1352 = vrot.slane %v1348, 3
        %v1353 = vrot.slane %v1348, 4
        %v1356 = vadd.f32 %v534, %v1352
        %v1357 = vadd.f32 %v539, %v1353
        %v1358 = vxor.u32 %v1356, 2147483648
        %v1359 = vxor.u32 %v1357, 2147483648
        %v1360 = vmul.f32 %v1358, 1.442695
        %v1361 = vpow.pop %v1360
        %v1362 = vmul.f32 %v1359, 1.442695
        %v1363 = vpow.pop %v1362
        %v1364 = vadd.f32 %v1361, 1.0
        %v1365 = vadd.f32 %v1363, 1.0
        %v1366 = vrcp.pop %v1364
        %v1367 = vmul.f32 1.0, %v1366
        %v1368 = vrcp.pop %v1365
        %v1369 = vmul.f32 1.0, %v1368
        %1370 = vrot.lane.b32.xlu0 %v1352, 96
        %v1371 = vpop.permute.xlu0 %1370
        %1372 = vrot.lane.b32.xlu0 %v1353, 96
        %v1373 = vpop.permute.xlu0 %1372
        %v1376 = vmul.f32 %v1367, %v1371
        %v1377 = vmul.f32 %v1369, %v1373
        %1380 = vrot.lane.b32.xlu0 %v1376, 32
        %v1381 = vpop.permute.xlu0 %1380
        %1382 = vrot.lane.b32.xlu0 %v1377, 32
        %v1383 = vpop.permute.xlu0 %1382
        %v1386 = vadd.f32 %v534, %v1381
        %v1387 = vadd.f32 %v539, %v1383
        %v1388 = vtanh.pop %v1386
        %v1389 = vtanh.pop %v1387
        %v1390 = vsub.f32 1.0, %v1367
        %v1391 = vsub.f32 1.0, %v1369
        %1394 = vrot.lane.b32.xlu0 %v1388, 112
        %v1395 = vpop.permute.xlu0 %1394
        %1396 = vrot.lane.b32.xlu0 %v1389, 112
        %v1397 = vpop.permute.xlu0 %1396
        %v1400 = vmul.f32 %v1390, %v1395
        %v1401 = vmul.f32 %v1391, %v1397
        %v1402 = vrot.slane %v1261, 7
        %v1403 = vrot.slane %v1262, 7
        %v1406 = vmul.f32 %v1367, %v1402
        %v1407 = vmul.f32 %v1369, %v1403
        %v1408 = vadd.f32 %v1400, %v1406
        %v1409 = vadd.f32 %v1401, %v1407
        %1412 = vrot.lane.b32.xlu0 %v1408, 112
        %v1413 = vpop.permute.xlu0 %1412
        %1414 = vrot.lane.b32.xlu0 %v1409, 112
        %v1415 = vpop.permute.xlu0 %1414
        %vm1418 = vcmask 128005
        %1419 = vst.msk [vmem:[#allocation2] sm:$0x20] %vm1418, %v1413
        %1420 = vst.msk [vmem:[#allocation2 + $0x8] sm:$0x20] %vm1418, %v1415
        %v1421 = vrot.slane %v1408, 5
        %v1422 = vrot.slane %v1409, 4
        %v1423 = vsel %vm690, %v1422, %v1421
        %1424 = vrot.lane.b32.xlu0 %v1423, 112
        %v1425 = vpop.permute.xlu0 %1424
        %v1426 = vsel %vm460, %v1425, 0
        %1428 = vmatprep.subr.mxu0 0.0
        %1429 = vmatpush1.msra.mxu0 %v542
        %1430 = vmatprep.subr.mxu0 0.0
        %1431 = vmatpush1.msra.mxu0 %v543
        %1432 = vmatprep.subr.mxu0 0.0
        %1433 = vmatpush1.msra.mxu0 0.0
        %1434 = vmatprep.subr.mxu0 0.0
        %1435 = vmatpush1.msra.mxu0 0.0
        %1436 = vmatprep.subr.mxu0 0.0
        %1437 = vmatpush1.msra.mxu0 0.0
        %1438 = vmatprep.subr.mxu0 0.0
        %1439 = vmatpush1.msra.mxu0 0.0
        %1440 = vmatprep.subr.mxu0 0.0
        %1441 = vmatpush1.msra.mxu0 0.0
        %1442 = vmatprep.subr.mxu0 0.0
        %1443 = vmatpush1.msra.mxu0 0.0
        %1444 = vmatprep.subr.mxu0 0.0
        %1445 = vmatpush1.msra.mxu0 0.0
        %1446 = vmatprep.subr.mxu0 0.0
        %1447 = vmatpush1.msra.mxu0 0.0
        %1448 = vmatprep.subr.mxu0 0.0
        %1449 = vmatpush1.msra.mxu0 0.0
        %1450 = vmatprep.subr.mxu0 0.0
        %1451 = vmatpush1.msra.mxu0 0.0
        %1452 = vmatprep.subr.mxu0 0.0
        %1453 = vmatpush1.msra.mxu0 0.0
        %1454 = vmatprep.subr.mxu0 0.0
        %1455 = vmatpush1.msra.mxu0 0.0
        %1456 = vmatprep.subr.mxu0 0.0
        %1457 = vmatpush1.msra.mxu0 0.0
        %1458 = vmatprep.subr.mxu0 0.0
        %1459 = vmatpush1.msra.mxu0 0.0
        %1460 = vmatprep.subr.mxu0 0.0
        %1461 = vmatpush1.msra.mxu0 0.0
        %1462 = vmatprep.subr.mxu0 0.0
        %1463 = vmatpush1.msra.mxu0 0.0
        %1464 = vmatprep.subr.mxu0 0.0
        %1465 = vmatpush1.msra.mxu0 0.0
        %1466 = vmatprep.subr.mxu0 0.0
        %1467 = vmatpush1.msra.mxu0 0.0
        %1468 = vmatprep.subr.mxu0 0.0
        %1469 = vmatpush1.msra.mxu0 0.0
        %1470 = vmatprep.subr.mxu0 0.0
        %1471 = vmatpush1.msra.mxu0 0.0
        %1472 = vmatprep.subr.mxu0 0.0
        %1473 = vmatpush1.msra.mxu0 0.0
        %1474 = vmatprep.subr.mxu0 0.0
        %1475 = vmatpush1.msra.mxu0 0.0
        %1476 = vmatprep.subr.mxu0 0.0
        %1477 = vmatpush1.msra.mxu0 0.0
        %1478 = vmatprep.subr.mxu0 0.0
        %1479 = vmatpush1.msra.mxu0 0.0
        %1480 = vmatprep.subr.mxu0 0.0
        %1481 = vmatpush1.msra.mxu0 0.0
        %1482 = vmatprep.subr.mxu0 0.0
        %1483 = vmatpush1.msra.mxu0 0.0
        %1484 = vmatprep.subr.mxu0 0.0
        %1485 = vmatpush1.msra.mxu0 0.0
        %1486 = vmatprep.subr.mxu0 0.0
        %1487 = vmatpush1.msra.mxu0 0.0
        %1488 = vmatprep.subr.mxu0 0.0
        %1489 = vmatpush1.msra.mxu0 0.0
        %1490 = vmatprep.subr.mxu0 0.0
        %1491 = vmatpush1.msra.mxu0 0.0
        %1492 = vmatprep.mubr.f32.mxu0 0.0
        %1493 = vmatmul.mubr.f32.gmra.mrb[0].mxu0 %v1426
        %v1494 = vpop.f32.mrb[0].mxu0
        %v1495 = vadd.f32 %v549, %v1494
        %v1496 = vpop.f32.mrb[0].mxu0
        %1497 = vdwg.mxu0
        %v1499 = vrot.slane %v1495, 2
        %v1500 = vrot.slane %v1495, 3
        %v1503 = vadd.f32 %v534, %v1499
        %v1504 = vadd.f32 %v539, %v1500
        %v1505 = vxor.u32 %v1503, 2147483648
        %v1506 = vxor.u32 %v1504, 2147483648
        %v1507 = vmul.f32 %v1505, 1.442695
        %v1508 = vpow.pop %v1507
        %v1509 = vmul.f32 %v1506, 1.442695
        %v1510 = vpow.pop %v1509
        %v1511 = vadd.f32 %v1508, 1.0
        %v1512 = vadd.f32 %v1510, 1.0
        %v1513 = vrcp.pop %v1511
        %v1514 = vmul.f32 1.0, %v1513
        %v1515 = vrcp.pop %v1512
        %v1516 = vmul.f32 1.0, %v1515
        %1517 = vrot.lane.b32.xlu0 %v1499, 96
        %v1518 = vpop.permute.xlu0 %1517
        %1519 = vrot.lane.b32.xlu0 %v1500, 96
        %v1520 = vpop.permute.xlu0 %1519
        %v1523 = vmul.f32 %v1514, %v1518
        %v1524 = vmul.f32 %v1516, %v1520
        %1527 = vrot.lane.b32.xlu0 %v1523, 32
        %v1528 = vpop.permute.xlu0 %1527
        %1529 = vrot.lane.b32.xlu0 %v1524, 32
        %v1530 = vpop.permute.xlu0 %1529
        %v1533 = vadd.f32 %v534, %v1528
        %v1534 = vadd.f32 %v539, %v1530
        %v1535 = vtanh.pop %v1533
        %v1536 = vtanh.pop %v1534
        %v1537 = vsub.f32 1.0, %v1514
        %v1538 = vsub.f32 1.0, %v1516
        %1541 = vrot.lane.b32.xlu0 %v1535, 112
        %v1542 = vpop.permute.xlu0 %1541
        %1543 = vrot.lane.b32.xlu0 %v1536, 112
        %v1544 = vpop.permute.xlu0 %1543
        %v1547 = vmul.f32 %v1537, %v1542
        %v1548 = vmul.f32 %v1538, %v1544
        %v1549 = vrot.slane %v1408, 7
        %v1550 = vrot.slane %v1409, 7
        %v1553 = vmul.f32 %v1514, %v1549
        %v1554 = vmul.f32 %v1516, %v1550
        %v1555 = vadd.f32 %v1547, %v1553
        %v1556 = vadd.f32 %v1548, %v1554
        %1559 = vrot.lane.b32.xlu0 %v1555, 112
        %v1560 = vpop.permute.xlu0 %1559
        %1561 = vrot.lane.b32.xlu0 %v1556, 112
        %v1562 = vpop.permute.xlu0 %1561
        %vm1565 = vcmask 129030
        %1566 = vst.msk [vmem:[#allocation2] sm:$0x40] %vm1565, %v1560
        %1567 = vst.msk [vmem:[#allocation2 + $0x8] sm:$0x40] %vm1565, %v1562
        %v1568 = vrot.slane %v1555, 6
        %v1569 = vrot.slane %v1556, 5
        %v1570 = vsel %vm690, %v1569, %v1568
        %1571 = vrot.lane.b32.xlu0 %v1570, 112
        %v1572 = vpop.permute.xlu0 %1571
        %v1573 = vsel %vm460, %v1572, 0
        %1575 = vmatprep.subr.mxu0 0.0
        %1576 = vmatpush1.msra.mxu0 %v542
        %1577 = vmatprep.subr.mxu0 0.0
        %1578 = vmatpush1.msra.mxu0 %v543
        %1579 = vmatprep.subr.mxu0 0.0
        %1580 = vmatpush1.msra.mxu0 0.0
        %1581 = vmatprep.subr.mxu0 0.0
        %1582 = vmatpush1.msra.mxu0 0.0
        %1583 = vmatprep.subr.mxu0 0.0
        %1584 = vmatpush1.msra.mxu0 0.0
        %1585 = vmatprep.subr.mxu0 0.0
        %1586 = vmatpush1.msra.mxu0 0.0
        %1587 = vmatprep.subr.mxu0 0.0
        %1588 = vmatpush1.msra.mxu0 0.0
        %1589 = vmatprep.subr.mxu0 0.0
        %1590 = vmatpush1.msra.mxu0 0.0
        %1591 = vmatprep.subr.mxu0 0.0
        %1592 = vmatpush1.msra.mxu0 0.0
        %1593 = vmatprep.subr.mxu0 0.0
        %1594 = vmatpush1.msra.mxu0 0.0
        %1595 = vmatprep.subr.mxu0 0.0
        %1596 = vmatpush1.msra.mxu0 0.0
        %1597 = vmatprep.subr.mxu0 0.0
        %1598 = vmatpush1.msra.mxu0 0.0
        %1599 = vmatprep.subr.mxu0 0.0
        %1600 = vmatpush1.msra.mxu0 0.0
        %1601 = vmatprep.subr.mxu0 0.0
        %1602 = vmatpush1.msra.mxu0 0.0
        %1603 = vmatprep.subr.mxu0 0.0
        %1604 = vmatpush1.msra.mxu0 0.0
        %1605 = vmatprep.subr.mxu0 0.0
        %1606 = vmatpush1.msra.mxu0 0.0
        %1607 = vmatprep.subr.mxu0 0.0
        %1608 = vmatpush1.msra.mxu0 0.0
        %1609 = vmatprep.subr.mxu0 0.0
        %1610 = vmatpush1.msra.mxu0 0.0
        %1611 = vmatprep.subr.mxu0 0.0
        %1612 = vmatpush1.msra.mxu0 0.0
        %1613 = vmatprep.subr.mxu0 0.0
        %1614 = vmatpush1.msra.mxu0 0.0
        %1615 = vmatprep.subr.mxu0 0.0
        %1616 = vmatpush1.msra.mxu0 0.0
        %1617 = vmatprep.subr.mxu0 0.0
        %1618 = vmatpush1.msra.mxu0 0.0
        %1619 = vmatprep.subr.mxu0 0.0
        %1620 = vmatpush1.msra.mxu0 0.0
        %1621 = vmatprep.subr.mxu0 0.0
        %1622 = vmatpush1.msra.mxu0 0.0
        %1623 = vmatprep.subr.mxu0 0.0
        %1624 = vmatpush1.msra.mxu0 0.0
        %1625 = vmatprep.subr.mxu0 0.0
        %1626 = vmatpush1.msra.mxu0 0.0
        %1627 = vmatprep.subr.mxu0 0.0
        %1628 = vmatpush1.msra.mxu0 0.0
        %1629 = vmatprep.subr.mxu0 0.0
        %1630 = vmatpush1.msra.mxu0 0.0
        %1631 = vmatprep.subr.mxu0 0.0
        %1632 = vmatpush1.msra.mxu0 0.0
        %1633 = vmatprep.subr.mxu0 0.0
        %1634 = vmatpush1.msra.mxu0 0.0
        %1635 = vmatprep.subr.mxu0 0.0
        %1636 = vmatpush1.msra.mxu0 0.0
        %1637 = vmatprep.subr.mxu0 0.0
        %1638 = vmatpush1.msra.mxu0 0.0
        %1639 = vmatprep.mubr.f32.mxu0 0.0
        %1640 = vmatmul.mubr.f32.gmra.mrb[0].mxu0 %v1573
        %v1641 = vpop.f32.mrb[0].mxu0
        %v1642 = vadd.f32 %v549, %v1641
        %v1643 = vpop.f32.mrb[0].mxu0
        %1644 = vdwg.mxu0
        %v1646 = vrot.slane %v1642, 1
        %v1647 = vrot.slane %v1642, 2
        %v1650 = vadd.f32 %v534, %v1646
        %v1651 = vadd.f32 %v539, %v1647
        %v1652 = vxor.u32 %v1650, 2147483648
        %v1653 = vxor.u32 %v1651, 2147483648
        %v1654 = vmul.f32 %v1652, 1.442695
        %v1655 = vpow.pop %v1654
        %v1656 = vmul.f32 %v1653, 1.442695
        %v1657 = vpow.pop %v1656
        %v1658 = vadd.f32 %v1655, 1.0
        %v1659 = vadd.f32 %v1657, 1.0
        %v1660 = vrcp.pop %v1658
        %v1661 = vmul.f32 1.0, %v1660
        %v1662 = vrcp.pop %v1659
        %v1663 = vmul.f32 1.0, %v1662
        %1664 = vrot.lane.b32.xlu0 %v1646, 96
        %v1665 = vpop.permute.xlu0 %1664
        %1666 = vrot.lane.b32.xlu0 %v1647, 96
        %v1667 = vpop.permute.xlu0 %1666
        %v1670 = vmul.f32 %v1661, %v1665
        %v1671 = vmul.f32 %v1663, %v1667
        %1674 = vrot.lane.b32.xlu0 %v1670, 32
        %v1675 = vpop.permute.xlu0 %1674
        %1676 = vrot.lane.b32.xlu0 %v1671, 32
        %v1677 = vpop.permute.xlu0 %1676
        %v1680 = vadd.f32 %v534, %v1675
        %v1681 = vadd.f32 %v539, %v1677
        %v1682 = vtanh.pop %v1680
        %v1683 = vtanh.pop %v1681
        %v1684 = vsub.f32 1.0, %v1661
        %v1685 = vsub.f32 1.0, %v1663
        %1688 = vrot.lane.b32.xlu0 %v1682, 112
        %v1689 = vpop.permute.xlu0 %1688
        %1690 = vrot.lane.b32.xlu0 %v1683, 112
        %v1691 = vpop.permute.xlu0 %1690
        %v1694 = vmul.f32 %v1684, %v1689
        %v1695 = vmul.f32 %v1685, %v1691
        %v1696 = vrot.slane %v1555, 7
        %v1697 = vrot.slane %v1556, 7
        %v1700 = vmul.f32 %v1661, %v1696
        %v1701 = vmul.f32 %v1663, %v1697
        %v1702 = vadd.f32 %v1694, %v1700
        %v1703 = vadd.f32 %v1695, %v1701
        %1706 = vrot.lane.b32.xlu0 %v1702, 112
        %v1707 = vpop.permute.xlu0 %1706
        %1708 = vrot.lane.b32.xlu0 %v1703, 112
        %v1709 = vpop.permute.xlu0 %1708
        %vm1712 = vcmask 130055
        %1713 = vst.msk [vmem:[#allocation2] sm:$0x80] %vm1712, %v1707
        %1714 = vst.msk [vmem:[#allocation2 + $0x8] sm:$0x80] %vm1712, %v1709
        %v1715 = vld [vmem:[#allocation2] sm:$0xff]
        %v1716 = vld [vmem:[#allocation2 + $0x8] sm:$0xff]
        %v1717 = vld [vmem:[%s5] sm:$0xff]
        %v1718 = vld [vmem:[%s5 + $0x8] sm:$0xff]
        %v1719 = vld [vmem:[#allocation9] sm:$0x1]
        %v1721 = vlaneseq
        %v1722 = vshrl.u32 %v1721, 7
        %v1723 = vsub.s32 0, %v1722
        %v1724 = vrot.slane %v1719, %v1723
        %v1727 = vsel %vm460, %v1715, 0
        %v1730 = vsel %vm460, %v1716, 0
        %1732 = vmatprep.subr.mxu0 0.0
        %1733 = vmatpush1.msra.mxu0 %v1717
        %1734 = vmatprep.subr.mxu0 0.0
        %1735 = vmatpush1.msra.mxu0 %v1718
        %1736 = vmatprep.subr.mxu0 0.0
        %1737 = vmatpush1.msra.mxu0 0.0
        %1738 = vmatprep.subr.mxu0 0.0
        %1739 = vmatpush1.msra.mxu0 0.0
        %1740 = vmatprep.subr.mxu0 0.0
        %1741 = vmatpush1.msra.mxu0 0.0
        %1742 = vmatprep.subr.mxu0 0.0
        %1743 = vmatpush1.msra.mxu0 0.0
        %1744 = vmatprep.subr.mxu0 0.0
        %1745 = vmatpush1.msra.mxu0 0.0
        %1746 = vmatprep.subr.mxu0 0.0
        %1747 = vmatpush1.msra.mxu0 0.0
        %1748 = vmatprep.subr.mxu0 0.0
        %1749 = vmatpush1.msra.mxu0 0.0
        %1750 = vmatprep.subr.mxu0 0.0
        %1751 = vmatpush1.msra.mxu0 0.0
        %1752 = vmatprep.subr.mxu0 0.0
        %1753 = vmatpush1.msra.mxu0 0.0
        %1754 = vmatprep.subr.mxu0 0.0
        %1755 = vmatpush1.msra.mxu0 0.0
        %1756 = vmatprep.subr.mxu0 0.0
        %1757 = vmatpush1.msra.mxu0 0.0
        %1758 = vmatprep.subr.mxu0 0.0
        %1759 = vmatpush1.msra.mxu0 0.0
        %1760 = vmatprep.subr.mxu0 0.0
        %1761 = vmatpush1.msra.mxu0 0.0
        %1762 = vmatprep.subr.mxu0 0.0
        %1763 = vmatpush1.msra.mxu0 0.0
        %1764 = vmatprep.subr.mxu0 0.0
        %1765 = vmatpush1.msra.mxu0 0.0
        %1766 = vmatprep.subr.mxu0 0.0
        %1767 = vmatpush1.msra.mxu0 0.0
        %1768 = vmatprep.subr.mxu0 0.0
        %1769 = vmatpush1.msra.mxu0 0.0
        %1770 = vmatprep.subr.mxu0 0.0
        %1771 = vmatpush1.msra.mxu0 0.0
        %1772 = vmatprep.subr.mxu0 0.0
        %1773 = vmatpush1.msra.mxu0 0.0
        %1774 = vmatprep.subr.mxu0 0.0
        %1775 = vmatpush1.msra.mxu0 0.0
        %1776 = vmatprep.subr.mxu0 0.0
        %1777 = vmatpush1.msra.mxu0 0.0
        %1778 = vmatprep.subr.mxu0 0.0
        %1779 = vmatpush1.msra.mxu0 0.0
        %1780 = vmatprep.subr.mxu0 0.0
        %1781 = vmatpush1.msra.mxu0 0.0
        %1782 = vmatprep.subr.mxu0 0.0
        %1783 = vmatpush1.msra.mxu0 0.0
        %1784 = vmatprep.subr.mxu0 0.0
        %1785 = vmatpush1.msra.mxu0 0.0
        %1786 = vmatprep.subr.mxu0 0.0
        %1787 = vmatpush1.msra.mxu0 0.0
        %1788 = vmatprep.subr.mxu0 0.0
        %1789 = vmatpush1.msra.mxu0 0.0
        %1790 = vmatprep.subr.mxu0 0.0
        %1791 = vmatpush1.msra.mxu0 0.0
        %1792 = vmatprep.subr.mxu0 0.0
        %1793 = vmatpush1.msra.mxu0 0.0
        %1794 = vmatprep.subr.mxu0 0.0
        %1795 = vmatpush1.msra.mxu0 0.0
        %1796 = vmatprep.mubr.f32.mxu0 0.0
        %1797 = vmatmul.mubr.f32.gmra.mrb[0].mxu0 %v1727
        %v1798 = vpop.f32.mrb[0].mxu0
        %v1799 = vadd.f32 %v1724, %v1798
        %v1800 = vpop.f32.mrb[0].mxu0
        %1801 = vmatprep.mubr.f32.mxu0 0.0
        %1802 = vmatmul.mubr.f32.gmra.mrb[0].mxu0 %v1730
        %v1803 = vpop.f32.mrb[0].mxu0
        %v1804 = vadd.f32 %v1724, %v1803
        %v1805 = vpop.f32.mrb[0].mxu0
        %1806 = vdwg.mxu0
        %1808 = vrot.lane.b32.xlu0 %v1799, 120
        %v1809 = vpop.permute.xlu0 %1808
        %vm1810 = vcmask 31744
        %v1811 = vsel %vm1810, %v1799, 0
        %v1813 = vsel %vm1810, %v1809, 0
        %1815 = vmatprep.subr.mxu0 0.0
        %1816 = vmatpush1.xpose.msra.mxu0 %v1813
        %1817 = vmatprep.subr.mxu0 0.0
        %1818 = vmatpush1.xpose.msra.mxu0 0.0
        %1819 = vmatprep.subr.mxu0 0.0
        %1820 = vmatpush1.xpose.msra.mxu0 0.0
        %1821 = vmatprep.subr.mxu0 0.0
        %1822 = vmatpush1.xpose.msra.mxu0 0.0
        %1823 = vmatprep.subr.mxu0 0.0
        %1824 = vmatpush1.xpose.msra.mxu0 0.0
        %1825 = vmatprep.subr.mxu0 0.0
        %1826 = vmatpush1.xpose.msra.mxu0 0.0
        %1827 = vmatprep.subr.mxu0 0.0
        %1828 = vmatpush1.xpose.msra.mxu0 0.0
        %1829 = vmatprep.subr.mxu0 0.0
        %1830 = vmatpush1.xpose.msra.mxu0 0.0
        %1831 = vmatprep.subr.mxu0 0.0
        %1832 = vmatpush1.xpose.msra.mxu0 0.0
        %1833 = vmatprep.subr.mxu0 0.0
        %1834 = vmatpush1.xpose.msra.mxu0 0.0
        %1835 = vmatprep.subr.mxu0 0.0
        %1836 = vmatpush1.xpose.msra.mxu0 0.0
        %1837 = vmatprep.subr.mxu0 0.0
        %1838 = vmatpush1.xpose.msra.mxu0 0.0
        %1839 = vmatprep.subr.mxu0 0.0
        %1840 = vmatpush1.xpose.msra.mxu0 0.0
        %1841 = vmatprep.subr.mxu0 0.0
        %1842 = vmatpush1.xpose.msra.mxu0 0.0
        %1843 = vmatprep.subr.mxu0 0.0
        %1844 = vmatpush1.xpose.msra.mxu0 0.0
        %1845 = vmatprep.subr.mxu0 0.0
        %1846 = vmatpush1.xpose.msra.mxu0 0.0
        %1847 = vmatprep.subr.mxu0 0.0
        %1848 = vmatpush1.xpose.msra.mxu0 0.0
        %1849 = vmatprep.subr.mxu0 0.0
        %1850 = vmatpush1.xpose.msra.mxu0 0.0
        %1851 = vmatprep.subr.mxu0 0.0
        %1852 = vmatpush1.xpose.msra.mxu0 0.0
        %1853 = vmatprep.subr.mxu0 0.0
        %1854 = vmatpush1.xpose.msra.mxu0 0.0
        %1855 = vmatprep.subr.mxu0 0.0
        %1856 = vmatpush1.xpose.msra.mxu0 0.0
        %1857 = vmatprep.subr.mxu0 0.0
        %1858 = vmatpush1.xpose.msra.mxu0 0.0
        %1859 = vmatprep.subr.mxu0 0.0
        %1860 = vmatpush1.xpose.msra.mxu0 0.0
        %1861 = vmatprep.subr.mxu0 0.0
        %1862 = vmatpush1.xpose.msra.mxu0 0.0
        %1863 = vmatprep.subr.mxu0 0.0
        %1864 = vmatpush1.xpose.msra.mxu0 0.0
        %1865 = vmatprep.subr.mxu0 0.0
        %1866 = vmatpush1.xpose.msra.mxu0 0.0
        %1867 = vmatprep.subr.mxu0 0.0
        %1868 = vmatpush1.xpose.msra.mxu0 0.0
        %1869 = vmatprep.subr.mxu0 0.0
        %1870 = vmatpush1.xpose.msra.mxu0 0.0
        %1871 = vmatprep.subr.mxu0 0.0
        %1872 = vmatpush1.xpose.msra.mxu0 0.0
        %1873 = vmatprep.subr.mxu0 0.0
        %1874 = vmatpush1.xpose.msra.mxu0 0.0
        %1875 = vmatprep.subr.mxu0 0.0
        %1876 = vmatpush1.xpose.msra.mxu0 0.0
        %1877 = vmatprep.subr.mxu0 0.0
        %1878 = vmatpush1.xpose.msra.mxu0 0.0
        %1879 = vmatprep.mubr.f32.mxu0 0.0
        %1880 = vmatmul.mubr.f32.gmra.mrb[0].mxu0 %v1811
        %v1881 = vpop.f32.mrb[0].mxu0
        %v1882 = vadd.f32 0.0, %v1881
        %v1883 = vpop.f32.mrb[0].mxu0
        %1884 = vdwg.mxu0
        %1886 = vrot.lane.b32.xlu0 %v1804, 120
        %v1887 = vpop.permute.xlu0 %1886
        %v1888 = vsel %vm1810, %v1804, 0
        %v1890 = vsel %vm1810, %v1887, 0
        %1892 = vmatprep.subr.mxu0 0.0
        %1893 = vmatpush1.xpose.msra.mxu0 %v1890
        %1894 = vmatprep.subr.mxu0 0.0
        %1895 = vmatpush1.xpose.msra.mxu0 0.0
        %1896 = vmatprep.subr.mxu0 0.0
        %1897 = vmatpush1.xpose.msra.mxu0 0.0
        %1898 = vmatprep.subr.mxu0 0.0
        %1899 = vmatpush1.xpose.msra.mxu0 0.0
        %1900 = vmatprep.subr.mxu0 0.0
        %1901 = vmatpush1.xpose.msra.mxu0 0.0
        %1902 = vmatprep.subr.mxu0 0.0
        %1903 = vmatpush1.xpose.msra.mxu0 0.0
        %1904 = vmatprep.subr.mxu0 0.0
        %1905 = vmatpush1.xpose.msra.mxu0 0.0
        %1906 = vmatprep.subr.mxu0 0.0
        %1907 = vmatpush1.xpose.msra.mxu0 0.0
        %1908 = vmatprep.subr.mxu0 0.0
        %1909 = vmatpush1.xpose.msra.mxu0 0.0
        %1910 = vmatprep.subr.mxu0 0.0
        %1911 = vmatpush1.xpose.msra.mxu0 0.0
        %1912 = vmatprep.subr.mxu0 0.0
        %1913 = vmatpush1.xpose.msra.mxu0 0.0
        %1914 = vmatprep.subr.mxu0 0.0
        %1915 = vmatpush1.xpose.msra.mxu0 0.0
        %1916 = vmatprep.subr.mxu0 0.0
        %1917 = vmatpush1.xpose.msra.mxu0 0.0
        %1918 = vmatprep.subr.mxu0 0.0
        %1919 = vmatpush1.xpose.msra.mxu0 0.0
        %1920 = vmatprep.subr.mxu0 0.0
        %1921 = vmatpush1.xpose.msra.mxu0 0.0
        %1922 = vmatprep.subr.mxu0 0.0
        %1923 = vmatpush1.xpose.msra.mxu0 0.0
        %1924 = vmatprep.subr.mxu0 0.0
        %1925 = vmatpush1.xpose.msra.mxu0 0.0
        %1926 = vmatprep.subr.mxu0 0.0
        %1927 = vmatpush1.xpose.msra.mxu0 0.0
        %1928 = vmatprep.subr.mxu0 0.0
        %1929 = vmatpush1.xpose.msra.mxu0 0.0
        %1930 = vmatprep.subr.mxu0 0.0
        %1931 = vmatpush1.xpose.msra.mxu0 0.0
        %1932 = vmatprep.subr.mxu0 0.0
        %1933 = vmatpush1.xpose.msra.mxu0 0.0
        %1934 = vmatprep.subr.mxu0 0.0
        %1935 = vmatpush1.xpose.msra.mxu0 0.0
        %1936 = vmatprep.subr.mxu0 0.0
        %1937 = vmatpush1.xpose.msra.mxu0 0.0
        %1938 = vmatprep.subr.mxu0 0.0
        %1939 = vmatpush1.xpose.msra.mxu0 0.0
        %1940 = vmatprep.subr.mxu0 0.0
        %1941 = vmatpush1.xpose.msra.mxu0 0.0
        %1942 = vmatprep.subr.mxu0 0.0
        %1943 = vmatpush1.xpose.msra.mxu0 0.0
        %1944 = vmatprep.subr.mxu0 0.0
        %1945 = vmatpush1.xpose.msra.mxu0 0.0
        %1946 = vmatprep.subr.mxu0 0.0
        %1947 = vmatpush1.xpose.msra.mxu0 0.0
        %1948 = vmatprep.subr.mxu0 0.0
        %1949 = vmatpush1.xpose.msra.mxu0 0.0
        %1950 = vmatprep.subr.mxu0 0.0
        %1951 = vmatpush1.xpose.msra.mxu0 0.0
        %1952 = vmatprep.subr.mxu0 0.0
        %1953 = vmatpush1.xpose.msra.mxu0 0.0
        %1954 = vmatprep.subr.mxu0 0.0
        %1955 = vmatpush1.xpose.msra.mxu0 0.0
        %1956 = vmatprep.mubr.f32.mxu0 0.0
        %1957 = vmatmul.mubr.f32.gmra.mrb[0].mxu0 %v1888
        %v1958 = vpop.f32.mrb[0].mxu0
        %v1959 = vadd.f32 0.0, %v1958
        %v1960 = vpop.f32.mrb[0].mxu0
        %1961 = vdwg.mxu0
        %v1962 = vmul.f32 %v1882, 0.5
        %v1963 = vmul.f32 %v1959, 0.5
        %vm1964 = vcmask 64512
        %v1965 = vsel %vm1964, %v1962, -inf
        %1966 = vmax.xlane.f32.xlu0 %v1965
        %v1967 = vpop.xlane.xlu0 %1966
        %v1968 = vsel %vm1964, %v1963, -inf
        %1969 = vmax.xlane.f32.xlu0 %v1968
        %v1970 = vpop.xlane.xlu0 %1969
        %v1971 = vsub.f32 %v1962, %v1967
        %v1972 = vsub.f32 %v1963, %v1970
        %v1973 = vmul.f32 %v1971, 1.442695
        %v1974 = vpow.pop %v1973
        %v1975 = vmul.f32 %v1972, 1.442695
        %v1976 = vpow.pop %v1975
        %v1977 = vsel %vm1964, %v1974, 0.0
        %1978 = vadd.xlane.f32.xlu0 %v1977
        %v1979 = vpop.xlane.xlu0 %1978
        %v1980 = vsel %vm1964, %v1976, 0.0
        %1981 = vadd.xlane.f32.xlu0 %v1980
        %v1982 = vpop.xlane.xlu0 %1981
        %v1983 = vrcp.pop %v1979
        %v1984 = vmul.f32 %v1974, %v1983
        %v1985 = vrcp.pop %v1982
        %v1986 = vmul.f32 %v1976, %v1985
        %1987 = vrot.lane.b32.xlu0 %v1799, 112
        %v1988 = vpop.permute.xlu0 %1987
        %v1991 = vsel %vm1964, %v1984, 0
        %1993 = vmatprep.subr.mxu0 0.0
        %1994 = vmatpush1.msra.mxu0 %v1988
        %1995 = vmatprep.subr.mxu0 0.0
        %1996 = vmatpush1.msra.mxu0 0.0
        %1997 = vmatprep.subr.mxu0 0.0
        %1998 = vmatpush1.msra.mxu0 0.0
        %1999 = vmatprep.subr.mxu0 0.0
        %2000 = vmatpush1.msra.mxu0 0.0
        %2001 = vmatprep.subr.mxu0 0.0
        %2002 = vmatpush1.msra.mxu0 0.0
        %2003 = vmatprep.subr.mxu0 0.0
        %2004 = vmatpush1.msra.mxu0 0.0
        %2005 = vmatprep.subr.mxu0 0.0
        %2006 = vmatpush1.msra.mxu0 0.0
        %2007 = vmatprep.subr.mxu0 0.0
        %2008 = vmatpush1.msra.mxu0 0.0
        %2009 = vmatprep.subr.mxu0 0.0
        %2010 = vmatpush1.msra.mxu0 0.0
        %2011 = vmatprep.subr.mxu0 0.0
        %2012 = vmatpush1.msra.mxu0 0.0
        %2013 = vmatprep.subr.mxu0 0.0
        %2014 = vmatpush1.msra.mxu0 0.0
        %2015 = vmatprep.subr.mxu0 0.0
        %2016 = vmatpush1.msra.mxu0 0.0
        %2017 = vmatprep.subr.mxu0 0.0
        %2018 = vmatpush1.msra.mxu0 0.0
        %2019 = vmatprep.subr.mxu0 0.0
        %2020 = vmatpush1.msra.mxu0 0.0
        %2021 = vmatprep.subr.mxu0 0.0
        %2022 = vmatpush1.msra.mxu0 0.0
        %2023 = vmatprep.subr.mxu0 0.0
        %2024 = vmatpush1.msra.mxu0 0.0
        %2025 = vmatprep.subr.mxu0 0.0
        %2026 = vmatpush1.msra.mxu0 0.0
        %2027 = vmatprep.subr.mxu0 0.0
        %2028 = vmatpush1.msra.mxu0 0.0
        %2029 = vmatprep.subr.mxu0 0.0
        %2030 = vmatpush1.msra.mxu0 0.0
        %2031 = vmatprep.subr.mxu0 0.0
        %2032 = vmatpush1.msra.mxu0 0.0
        %2033 = vmatprep.subr.mxu0 0.0
        %2034 = vmatpush1.msra.mxu0 0.0
        %2035 = vmatprep.subr.mxu0 0.0
        %2036 = vmatpush1.msra.mxu0 0.0
        %2037 = vmatprep.subr.mxu0 0.0
        %2038 = vmatpush1.msra.mxu0 0.0
        %2039 = vmatprep.subr.mxu0 0.0
        %2040 = vmatpush1.msra.mxu0 0.0
        %2041 = vmatprep.subr.mxu0 0.0
        %2042 = vmatpush1.msra.mxu0 0.0
        %2043 = vmatprep.subr.mxu0 0.0
        %2044 = vmatpush1.msra.mxu0 0.0
        %2045 = vmatprep.subr.mxu0 0.0
        %2046 = vmatpush1.msra.mxu0 0.0
        %2047 = vmatprep.subr.mxu0 0.0
        %2048 = vmatpush1.msra.mxu0 0.0
        %2049 = vmatprep.subr.mxu0 0.0
        %2050 = vmatpush1.msra.mxu0 0.0
        %2051 = vmatprep.subr.mxu0 0.0
        %2052 = vmatpush1.msra.mxu0 0.0
        %2053 = vmatprep.subr.mxu0 0.0
        %2054 = vmatpush1.msra.mxu0 0.0
        %2055 = vmatprep.subr.mxu0 0.0
        %2056 = vmatpush1.msra.mxu0 0.0
        %2057 = vmatprep.mubr.f32.mxu0 0.0
        %2058 = vmatmul.mubr.f32.gmra.mrb[0].mxu0 %v1991
        %v2059 = vpop.f32.mrb[0].mxu0
        %v2060 = vadd.f32 0.0, %v2059
        %v2061 = vpop.f32.mrb[0].mxu0
        %2062 = vdwg.mxu0
        %2063 = vrot.lane.b32.xlu0 %v1804, 112
        %v2064 = vpop.permute.xlu0 %2063
        %v2067 = vsel %vm1964, %v1986, 0
        %2069 = vmatprep.subr.mxu0 0.0
        %2070 = vmatpush1.msra.mxu0 %v2064
        %2071 = vmatprep.subr.mxu0 0.0
        %2072 = vmatpush1.msra.mxu0 0.0
        %2073 = vmatprep.subr.mxu0 0.0
        %2074 = vmatpush1.msra.mxu0 0.0
        %2075 = vmatprep.subr.mxu0 0.0
        %2076 = vmatpush1.msra.mxu0 0.0
        %2077 = vmatprep.subr.mxu0 0.0
        %2078 = vmatpush1.msra.mxu0 0.0
        %2079 = vmatprep.subr.mxu0 0.0
        %2080 = vmatpush1.msra.mxu0 0.0
        %2081 = vmatprep.subr.mxu0 0.0
        %2082 = vmatpush1.msra.mxu0 0.0
        %2083 = vmatprep.subr.mxu0 0.0
        %2084 = vmatpush1.msra.mxu0 0.0
        %2085 = vmatprep.subr.mxu0 0.0
        %2086 = vmatpush1.msra.mxu0 0.0
        %2087 = vmatprep.subr.mxu0 0.0
        %2088 = vmatpush1.msra.mxu0 0.0
        %2089 = vmatprep.subr.mxu0 0.0
        %2090 = vmatpush1.msra.mxu0 0.0
        %2091 = vmatprep.subr.mxu0 0.0
        %2092 = vmatpush1.msra.mxu0 0.0
        %2093 = vmatprep.subr.mxu0 0.0
        %2094 = vmatpush1.msra.mxu0 0.0
        %2095 = vmatprep.subr.mxu0 0.0
        %2096 = vmatpush1.msra.mxu0 0.0
        %2097 = vmatprep.subr.mxu0 0.0
        %2098 = vmatpush1.msra.mxu0 0.0
        %2099 = vmatprep.subr.mxu0 0.0
        %2100 = vmatpush1.msra.mxu0 0.0
        %2101 = vmatprep.subr.mxu0 0.0
        %2102 = vmatpush1.msra.mxu0 0.0
        %2103 = vmatprep.subr.mxu0 0.0
        %2104 = vmatpush1.msra.mxu0 0.0
        %2105 = vmatprep.subr.mxu0 0.0
        %2106 = vmatpush1.msra.mxu0 0.0
        %2107 = vmatprep.subr.mxu0 0.0
        %2108 = vmatpush1.msra.mxu0 0.0
        %2109 = vmatprep.subr.mxu0 0.0
        %2110 = vmatpush1.msra.mxu0 0.0
        %2111 = vmatprep.subr.mxu0 0.0
        %2112 = vmatpush1.msra.mxu0 0.0
        %2113 = vmatprep.subr.mxu0 0.0
        %2114 = vmatpush1.msra.mxu0 0.0
        %2115 = vmatprep.subr.mxu0 0.0
        %2116 = vmatpush1.msra.mxu0 0.0
        %2117 = vmatprep.subr.mxu0 0.0
        %2118 = vmatpush1.msra.mxu0 0.0
        %2119 = vmatprep.subr.mxu0 0.0
        %2120 = vmatpush1.msra.mxu0 0.0
        %2121 = vmatprep.subr.mxu0 0.0
        %2122 = vmatpush1.msra.mxu0 0.0
        %2123 = vmatprep.subr.mxu0 0.0
        %2124 = vmatpush1.msra.mxu0 0.0
        %2125 = vmatprep.subr.mxu0 0.0
        %2126 = vmatpush1.msra.mxu0 0.0
        %2127 = vmatprep.subr.mxu0 0.0
        %2128 = vmatpush1.msra.mxu0 0.0
        %2129 = vmatprep.subr.mxu0 0.0
        %2130 = vmatpush1.msra.mxu0 0.0
        %2131 = vmatprep.subr.mxu0 0.0
        %2132 = vmatpush1.msra.mxu0 0.0
        %2133 = vmatprep.mubr.f32.mxu0 0.0
        %2134 = vmatmul.mubr.f32.gmra.mrb[0].mxu0 %v2067
        %v2135 = vpop.f32.mrb[0].mxu0
        %v2136 = vadd.f32 0.0, %v2135
        %v2137 = vpop.f32.mrb[0].mxu0
        %2138 = vdwg.mxu0
        %2139 = vrot.lane.b32.xlu0 %v1799, 124
        %v2140 = vpop.permute.xlu0 %2139
        %2141 = vrot.lane.b32.xlu0 %v1799, 116
        %v2142 = vpop.permute.xlu0 %2141
        %v2143 = vsel %vm1810, %v2140, 0
        %v2145 = vsel %vm1810, %v2142, 0
        %2147 = vmatprep.subr.mxu0 0.0
        %2148 = vmatpush1.xpose.msra.mxu0 %v2145
        %2149 = vmatprep.subr.mxu0 0.0
        %2150 = vmatpush1.xpose.msra.mxu0 0.0
        %2151 = vmatprep.subr.mxu0 0.0
        %2152 = vmatpush1.xpose.msra.mxu0 0.0
        %2153 = vmatprep.subr.mxu0 0.0
        %2154 = vmatpush1.xpose.msra.mxu0 0.0
        %2155 = vmatprep.subr.mxu0 0.0
        %2156 = vmatpush1.xpose.msra.mxu0 0.0
        %2157 = vmatprep.subr.mxu0 0.0
        %2158 = vmatpush1.xpose.msra.mxu0 0.0
        %2159 = vmatprep.subr.mxu0 0.0
        %2160 = vmatpush1.xpose.msra.mxu0 0.0
        %2161 = vmatprep.subr.mxu0 0.0
        %2162 = vmatpush1.xpose.msra.mxu0 0.0
        %2163 = vmatprep.subr.mxu0 0.0
        %2164 = vmatpush1.xpose.msra.mxu0 0.0
        %2165 = vmatprep.subr.mxu0 0.0
        %2166 = vmatpush1.xpose.msra.mxu0 0.0
        %2167 = vmatprep.subr.mxu0 0.0
        %2168 = vmatpush1.xpose.msra.mxu0 0.0
        %2169 = vmatprep.subr.mxu0 0.0
        %2170 = vmatpush1.xpose.msra.mxu0 0.0
        %2171 = vmatprep.subr.mxu0 0.0
        %2172 = vmatpush1.xpose.msra.mxu0 0.0
        %2173 = vmatprep.subr.mxu0 0.0
        %2174 = vmatpush1.xpose.msra.mxu0 0.0
        %2175 = vmatprep.subr.mxu0 0.0
        %2176 = vmatpush1.xpose.msra.mxu0 0.0
        %2177 = vmatprep.subr.mxu0 0.0
        %2178 = vmatpush1.xpose.msra.mxu0 0.0
        %2179 = vmatprep.subr.mxu0 0.0
        %2180 = vmatpush1.xpose.msra.mxu0 0.0
        %2181 = vmatprep.subr.mxu0 0.0
        %2182 = vmatpush1.xpose.msra.mxu0 0.0
        %2183 = vmatprep.subr.mxu0 0.0
        %2184 = vmatpush1.xpose.msra.mxu0 0.0
        %2185 = vmatprep.subr.mxu0 0.0
        %2186 = vmatpush1.xpose.msra.mxu0 0.0
        %2187 = vmatprep.subr.mxu0 0.0
        %2188 = vmatpush1.xpose.msra.mxu0 0.0
        %2189 = vmatprep.subr.mxu0 0.0
        %2190 = vmatpush1.xpose.msra.mxu0 0.0
        %2191 = vmatprep.subr.mxu0 0.0
        %2192 = vmatpush1.xpose.msra.mxu0 0.0
        %2193 = vmatprep.subr.mxu0 0.0
        %2194 = vmatpush1.xpose.msra.mxu0 0.0
        %2195 = vmatprep.subr.mxu0 0.0
        %2196 = vmatpush1.xpose.msra.mxu0 0.0
        %2197 = vmatprep.subr.mxu0 0.0
        %2198 = vmatpush1.xpose.msra.mxu0 0.0
        %2199 = vmatprep.subr.mxu0 0.0
        %2200 = vmatpush1.xpose.msra.mxu0 0.0
        %2201 = vmatprep.subr.mxu0 0.0
        %2202 = vmatpush1.xpose.msra.mxu0 0.0
        %2203 = vmatprep.subr.mxu0 0.0
        %2204 = vmatpush1.xpose.msra.mxu0 0.0
        %2205 = vmatprep.subr.mxu0 0.0
        %2206 = vmatpush1.xpose.msra.mxu0 0.0
        %2207 = vmatprep.subr.mxu0 0.0
        %2208 = vmatpush1.xpose.msra.mxu0 0.0
        %2209 = vmatprep.subr.mxu0 0.0
        %2210 = vmatpush1.xpose.msra.mxu0 0.0
        %2211 = vmatprep.mubr.f32.mxu0 0.0
        %2212 = vmatmul.mubr.f32.gmra.mrb[0].mxu0 %v2143
        %v2213 = vpop.f32.mrb[0].mxu0
        %v2214 = vadd.f32 0.0, %v2213
        %v2215 = vpop.f32.mrb[0].mxu0
        %2216 = vdwg.mxu0
        %2217 = vrot.lane.b32.xlu0 %v1804, 124
        %v2218 = vpop.permute.xlu0 %2217
        %2219 = vrot.lane.b32.xlu0 %v1804, 116
        %v2220 = vpop.permute.xlu0 %2219
        %v2221 = vsel %vm1810, %v2218, 0
        %v2223 = vsel %vm1810, %v2220, 0
        %2225 = vmatprep.subr.mxu0 0.0
        %2226 = vmatpush1.xpose.msra.mxu0 %v2223
        %2227 = vmatprep.subr.mxu0 0.0
        %2228 = vmatpush1.xpose.msra.mxu0 0.0
        %2229 = vmatprep.subr.mxu0 0.0
        %2230 = vmatpush1.xpose.msra.mxu0 0.0
        %2231 = vmatprep.subr.mxu0 0.0
        %2232 = vmatpush1.xpose.msra.mxu0 0.0
        %2233 = vmatprep.subr.mxu0 0.0
        %2234 = vmatpush1.xpose.msra.mxu0 0.0
        %2235 = vmatprep.subr.mxu0 0.0
        %2236 = vmatpush1.xpose.msra.mxu0 0.0
        %2237 = vmatprep.subr.mxu0 0.0
        %2238 = vmatpush1.xpose.msra.mxu0 0.0
        %2239 = vmatprep.subr.mxu0 0.0
        %2240 = vmatpush1.xpose.msra.mxu0 0.0
        %2241 = vmatprep.subr.mxu0 0.0
        %2242 = vmatpush1.xpose.msra.mxu0 0.0
        %2243 = vmatprep.subr.mxu0 0.0
        %2244 = vmatpush1.xpose.msra.mxu0 0.0
        %2245 = vmatprep.subr.mxu0 0.0
        %2246 = vmatpush1.xpose.msra.mxu0 0.0
        %2247 = vmatprep.subr.mxu0 0.0
        %2248 = vmatpush1.xpose.msra.mxu0 0.0
        %2249 = vmatprep.subr.mxu0 0.0
        %2250 = vmatpush1.xpose.msra.mxu0 0.0
        %2251 = vmatprep.subr.mxu0 0.0
        %2252 = vmatpush1.xpose.msra.mxu0 0.0
        %2253 = vmatprep.subr.mxu0 0.0
        %2254 = vmatpush1.xpose.msra.mxu0 0.0
        %2255 = vmatprep.subr.mxu0 0.0
        %2256 = vmatpush1.xpose.msra.mxu0 0.0
        %2257 = vmatprep.subr.mxu0 0.0
        %2258 = vmatpush1.xpose.msra.mxu0 0.0
        %2259 = vmatprep.subr.mxu0 0.0
        %2260 = vmatpush1.xpose.msra.mxu0 0.0
        %2261 = vmatprep.subr.mxu0 0.0
        %2262 = vmatpush1.xpose.msra.mxu0 0.0
        %2263 = vmatprep.subr.mxu0 0.0
        %2264 = vmatpush1.xpose.msra.mxu0 0.0
        %2265 = vmatprep.subr.mxu0 0.0
        %2266 = vmatpush1.xpose.msra.mxu0 0.0
        %2267 = vmatprep.subr.mxu0 0.0
        %2268 = vmatpush1.xpose.msra.mxu0 0.0
        %2269 = vmatprep.subr.mxu0 0.0
        %2270 = vmatpush1.xpose.msra.mxu0 0.0
        %2271 = vmatprep.subr.mxu0 0.0
        %2272 = vmatpush1.xpose.msra.mxu0 0.0
        %2273 = vmatprep.subr.mxu0 0.0
        %2274 = vmatpush1.xpose.msra.mxu0 0.0
        %2275 = vmatprep.subr.mxu0 0.0
        %2276 = vmatpush1.xpose.msra.mxu0 0.0
        %2277 = vmatprep.subr.mxu0 0.0
        %2278 = vmatpush1.xpose.msra.mxu0 0.0
        %2279 = vmatprep.subr.mxu0 0.0
        %2280 = vmatpush1.xpose.msra.mxu0 0.0
        %2281 = vmatprep.subr.mxu0 0.0
        %2282 = vmatpush1.xpose.msra.mxu0 0.0
        %2283 = vmatprep.subr.mxu0 0.0
        %2284 = vmatpush1.xpose.msra.mxu0 0.0
        %2285 = vmatprep.subr.mxu0 0.0
        %2286 = vmatpush1.xpose.msra.mxu0 0.0
        %2287 = vmatprep.subr.mxu0 0.0
        %2288 = vmatpush1.xpose.msra.mxu0 0.0
        %2289 = vmatprep.mubr.f32.mxu0 0.0
        %2290 = vmatmul.mubr.f32.gmra.mrb[0].mxu0 %v2221
        %v2291 = vpop.f32.mrb[0].mxu0
        %v2292 = vadd.f32 0.0, %v2291
        %v2293 = vpop.f32.mrb[0].mxu0
        %2294 = vdwg.mxu0
        %v2295 = vmul.f32 %v2214, 0.5
        %v2296 = vmul.f32 %v2292, 0.5
        %v2297 = vsel %vm1964, %v2295, -inf
        %2298 = vmax.xlane.f32.xlu0 %v2297
        %v2299 = vpop.xlane.xlu0 %2298
        %v2300 = vsel %vm1964, %v2296, -inf
        %2301 = vmax.xlane.f32.xlu0 %v2300
        %v2302 = vpop.xlane.xlu0 %2301
        %v2303 = vsub.f32 %v2295, %v2299
        %v2304 = vsub.f32 %v2296, %v2302
        %v2305 = vmul.f32 %v2303, 1.442695
        %v2306 = vpow.pop %v2305
        %v2307 = vmul.f32 %v2304, 1.442695
        %v2308 = vpow.pop %v2307
        %v2309 = vsel %vm1964, %v2306, 0.0
        %2310 = vadd.xlane.f32.xlu0 %v2309
        %v2311 = vpop.xlane.xlu0 %2310
        %v2312 = vsel %vm1964, %v2308, 0.0
        %2313 = vadd.xlane.f32.xlu0 %v2312
        %v2314 = vpop.xlane.xlu0 %2313
        %v2315 = vrcp.pop %v2311
        %v2316 = vmul.f32 %v2306, %v2315
        %v2317 = vrcp.pop %v2314
        %v2318 = vmul.f32 %v2308, %v2317
        %2319 = vrot.lane.b32.xlu0 %v1799, 108
        %v2320 = vpop.permute.xlu0 %2319
        %v2323 = vsel %vm1964, %v2316, 0
        %2325 = vmatprep.subr.mxu0 0.0
        %2326 = vmatpush1.msra.mxu0 %v2320
        %2327 = vmatprep.subr.mxu0 0.0
        %2328 = vmatpush1.msra.mxu0 0.0
        %2329 = vmatprep.subr.mxu0 0.0
        %2330 = vmatpush1.msra.mxu0 0.0
        %2331 = vmatprep.subr.mxu0 0.0
        %2332 = vmatpush1.msra.mxu0 0.0
        %2333 = vmatprep.subr.mxu0 0.0
        %2334 = vmatpush1.msra.mxu0 0.0
        %2335 = vmatprep.subr.mxu0 0.0
        %2336 = vmatpush1.msra.mxu0 0.0
        %2337 = vmatprep.subr.mxu0 0.0
        %2338 = vmatpush1.msra.mxu0 0.0
        %2339 = vmatprep.subr.mxu0 0.0
        %2340 = vmatpush1.msra.mxu0 0.0
        %2341 = vmatprep.subr.mxu0 0.0
        %2342 = vmatpush1.msra.mxu0 0.0
        %2343 = vmatprep.subr.mxu0 0.0
        %2344 = vmatpush1.msra.mxu0 0.0
        %2345 = vmatprep.subr.mxu0 0.0
        %2346 = vmatpush1.msra.mxu0 0.0
        %2347 = vmatprep.subr.mxu0 0.0
        %2348 = vmatpush1.msra.mxu0 0.0
        %2349 = vmatprep.subr.mxu0 0.0
        %2350 = vmatpush1.msra.mxu0 0.0
        %2351 = vmatprep.subr.mxu0 0.0
        %2352 = vmatpush1.msra.mxu0 0.0
        %2353 = vmatprep.subr.mxu0 0.0
        %2354 = vmatpush1.msra.mxu0 0.0
        %2355 = vmatprep.subr.mxu0 0.0
        %2356 = vmatpush1.msra.mxu0 0.0
        %2357 = vmatprep.subr.mxu0 0.0
        %2358 = vmatpush1.msra.mxu0 0.0
        %2359 = vmatprep.subr.mxu0 0.0
        %2360 = vmatpush1.msra.mxu0 0.0
        %2361 = vmatprep.subr.mxu0 0.0
        %2362 = vmatpush1.msra.mxu0 0.0
        %2363 = vmatprep.subr.mxu0 0.0
        %2364 = vmatpush1.msra.mxu0 0.0
        %2365 = vmatprep.subr.mxu0 0.0
        %2366 = vmatpush1.msra.mxu0 0.0
        %2367 = vmatprep.subr.mxu0 0.0
        %2368 = vmatpush1.msra.mxu0 0.0
        %2369 = vmatprep.subr.mxu0 0.0
        %2370 = vmatpush1.msra.mxu0 0.0
        %2371 = vmatprep.subr.mxu0 0.0
        %2372 = vmatpush1.msra.mxu0 0.0
        %2373 = vmatprep.subr.mxu0 0.0
        %2374 = vmatpush1.msra.mxu0 0.0
        %2375 = vmatprep.subr.mxu0 0.0
        %2376 = vmatpush1.msra.mxu0 0.0
        %2377 = vmatprep.subr.mxu0 0.0
        %2378 = vmatpush1.msra.mxu0 0.0
        %2379 = vmatprep.subr.mxu0 0.0
        %2380 = vmatpush1.msra.mxu0 0.0
        %2381 = vmatprep.subr.mxu0 0.0
        %2382 = vmatpush1.msra.mxu0 0.0
        %2383 = vmatprep.subr.mxu0 0.0
        %2384 = vmatpush1.msra.mxu0 0.0
        %2385 = vmatprep.subr.mxu0 0.0
        %2386 = vmatpush1.msra.mxu0 0.0
        %2387 = vmatprep.subr.mxu0 0.0
        %2388 = vmatpush1.msra.mxu0 0.0
        %2389 = vmatprep.mubr.f32.mxu0 0.0
        %2390 = vmatmul.mubr.f32.gmra.mrb[0].mxu0 %v2323
        %v2391 = vpop.f32.mrb[0].mxu0
        %v2392 = vadd.f32 0.0, %v2391
        %v2393 = vpop.f32.mrb[0].mxu0
        %2394 = vdwg.mxu0
        %2395 = vrot.lane.b32.xlu0 %v1804, 108
        %v2396 = vpop.permute.xlu0 %2395
        %v2399 = vsel %vm1964, %v2318, 0
        %2401 = vmatprep.subr.mxu0 0.0
        %2402 = vmatpush1.msra.mxu0 %v2396
        %2403 = vmatprep.subr.mxu0 0.0
        %2404 = vmatpush1.msra.mxu0 0.0
        %2405 = vmatprep.subr.mxu0 0.0
        %2406 = vmatpush1.msra.mxu0 0.0
        %2407 = vmatprep.subr.mxu0 0.0
        %2408 = vmatpush1.msra.mxu0 0.0
        %2409 = vmatprep.subr.mxu0 0.0
        %2410 = vmatpush1.msra.mxu0 0.0
        %2411 = vmatprep.subr.mxu0 0.0
        %2412 = vmatpush1.msra.mxu0 0.0
        %2413 = vmatprep.subr.mxu0 0.0
        %2414 = vmatpush1.msra.mxu0 0.0
        %2415 = vmatprep.subr.mxu0 0.0
        %2416 = vmatpush1.msra.mxu0 0.0
        %2417 = vmatprep.subr.mxu0 0.0
        %2418 = vmatpush1.msra.mxu0 0.0
        %2419 = vmatprep.subr.mxu0 0.0
        %2420 = vmatpush1.msra.mxu0 0.0
        %2421 = vmatprep.subr.mxu0 0.0
        %2422 = vmatpush1.msra.mxu0 0.0
        %2423 = vmatprep.subr.mxu0 0.0
        %2424 = vmatpush1.msra.mxu0 0.0
        %2425 = vmatprep.subr.mxu0 0.0
        %2426 = vmatpush1.msra.mxu0 0.0
        %2427 = vmatprep.subr.mxu0 0.0
        %2428 = vmatpush1.msra.mxu0 0.0
        %2429 = vmatprep.subr.mxu0 0.0
        %2430 = vmatpush1.msra.mxu0 0.0
        %2431 = vmatprep.subr.mxu0 0.0
        %2432 = vmatpush1.msra.mxu0 0.0
        %2433 = vmatprep.subr.mxu0 0.0
        %2434 = vmatpush1.msra.mxu0 0.0
        %2435 = vmatprep.subr.mxu0 0.0
        %2436 = vmatpush1.msra.mxu0 0.0
        %2437 = vmatprep.subr.mxu0 0.0
        %2438 = vmatpush1.msra.mxu0 0.0
        %2439 = vmatprep.subr.mxu0 0.0
        %2440 = vmatpush1.msra.mxu0 0.0
        %2441 = vmatprep.subr.mxu0 0.0
        %2442 = vmatpush1.msra.mxu0 0.0
        %2443 = vmatprep.subr.mxu0 0.0
        %2444 = vmatpush1.msra.mxu0 0.0
        %2445 = vmatprep.subr.mxu0 0.0
        %2446 = vmatpush1.msra.mxu0 0.0
        %2447 = vmatprep.subr.mxu0 0.0
        %2448 = vmatpush1.msra.mxu0 0.0
        %2449 = vmatprep.subr.mxu0 0.0
        %2450 = vmatpush1.msra.mxu0 0.0
        %2451 = vmatprep.subr.mxu0 0.0
        %2452 = vmatpush1.msra.mxu0 0.0
        %2453 = vmatprep.subr.mxu0 0.0
        %2454 = vmatpush1.msra.mxu0 0.0
        %2455 = vmatprep.subr.mxu0 0.0
        %2456 = vmatpush1.msra.mxu0 0.0
        %2457 = vmatprep.subr.mxu0 0.0
        %2458 = vmatpush1.msra.mxu0 0.0
        %2459 = vmatprep.subr.mxu0 0.0
        %2460 = vmatpush1.msra.mxu0 0.0
        %2461 = vmatprep.subr.mxu0 0.0
        %2462 = vmatpush1.msra.mxu0 0.0
        %2463 = vmatprep.subr.mxu0 0.0
        %2464 = vmatpush1.msra.mxu0 0.0
        %2465 = vmatprep.mubr.f32.mxu0 0.0
        %2466 = vmatmul.mubr.f32.gmra.mrb[0].mxu0 %v2399
        %v2467 = vpop.f32.mrb[0].mxu0
        %v2468 = vadd.f32 0.0, %v2467
        %v2469 = vpop.f32.mrb[0].mxu0
        %2470 = vdwg.mxu0
        %2473 = vrot.lane.b32.xlu0 %v2392, 4
        %v2474 = vpop.permute.xlu0 %2473
        %2475 = vrot.lane.b32.xlu0 %v2468, 4
        %v2476 = vpop.permute.xlu0 %2475
        %v2479 = vsel %vm1810, %v2060, %v2474
        %v2480 = vsel %vm1810, %v2136, %v2476
        %v2481 = vld [vmem:[%s7] sm:$0xff]
        %v2482 = vld [vmem:[%s8] sm:$0x1]
        %v2484 = vlaneseq
        %v2485 = vshrl.u32 %v2484, 7
        %v2486 = vsub.s32 0, %v2485
        %v2487 = vrot.slane %v2482, %v2486
        %v2490 = vsel %vm1964, %v2479, 0
        %v2493 = vsel %vm1964, %v2480, 0
        %2495 = vmatprep.subr.mxu0 0.0
        %2496 = vmatpush1.msra.mxu0 %v2481
        %2497 = vmatprep.subr.mxu0 0.0
        %2498 = vmatpush1.msra.mxu0 0.0
        %2499 = vmatprep.subr.mxu0 0.0
        %2500 = vmatpush1.msra.mxu0 0.0
        %2501 = vmatprep.subr.mxu0 0.0
        %2502 = vmatpush1.msra.mxu0 0.0
        %2503 = vmatprep.subr.mxu0 0.0
        %2504 = vmatpush1.msra.mxu0 0.0
        %2505 = vmatprep.subr.mxu0 0.0
        %2506 = vmatpush1.msra.mxu0 0.0
        %2507 = vmatprep.subr.mxu0 0.0
        %2508 = vmatpush1.msra.mxu0 0.0
        %2509 = vmatprep.subr.mxu0 0.0
        %2510 = vmatpush1.msra.mxu0 0.0
        %2511 = vmatprep.subr.mxu0 0.0
        %2512 = vmatpush1.msra.mxu0 0.0
        %2513 = vmatprep.subr.mxu0 0.0
        %2514 = vmatpush1.msra.mxu0 0.0
        %2515 = vmatprep.subr.mxu0 0.0
        %2516 = vmatpush1.msra.mxu0 0.0
        %2517 = vmatprep.subr.mxu0 0.0
        %2518 = vmatpush1.msra.mxu0 0.0
        %2519 = vmatprep.subr.mxu0 0.0
        %2520 = vmatpush1.msra.mxu0 0.0
        %2521 = vmatprep.subr.mxu0 0.0
        %2522 = vmatpush1.msra.mxu0 0.0
        %2523 = vmatprep.subr.mxu0 0.0
        %2524 = vmatpush1.msra.mxu0 0.0
        %2525 = vmatprep.subr.mxu0 0.0
        %2526 = vmatpush1.msra.mxu0 0.0
        %2527 = vmatprep.subr.mxu0 0.0
        %2528 = vmatpush1.msra.mxu0 0.0
        %2529 = vmatprep.subr.mxu0 0.0
        %2530 = vmatpush1.msra.mxu0 0.0
        %2531 = vmatprep.subr.mxu0 0.0
        %2532 = vmatpush1.msra.mxu0 0.0
        %2533 = vmatprep.subr.mxu0 0.0
        %2534 = vmatpush1.msra.mxu0 0.0
        %2535 = vmatprep.subr.mxu0 0.0
        %2536 = vmatpush1.msra.mxu0 0.0
        %2537 = vmatprep.subr.mxu0 0.0
        %2538 = vmatpush1.msra.mxu0 0.0
        %2539 = vmatprep.subr.mxu0 0.0
        %2540 = vmatpush1.msra.mxu0 0.0
        %2541 = vmatprep.subr.mxu0 0.0
        %2542 = vmatpush1.msra.mxu0 0.0
        %2543 = vmatprep.subr.mxu0 0.0
        %2544 = vmatpush1.msra.mxu0 0.0
        %2545 = vmatprep.subr.mxu0 0.0
        %2546 = vmatpush1.msra.mxu0 0.0
        %2547 = vmatprep.subr.mxu0 0.0
        %2548 = vmatpush1.msra.mxu0 0.0
        %2549 = vmatprep.subr.mxu0 0.0
        %2550 = vmatpush1.msra.mxu0 0.0
        %2551 = vmatprep.subr.mxu0 0.0
        %2552 = vmatpush1.msra.mxu0 0.0
        %2553 = vmatprep.subr.mxu0 0.0
        %2554 = vmatpush1.msra.mxu0 0.0
        %2555 = vmatprep.subr.mxu0 0.0
        %2556 = vmatpush1.msra.mxu0 0.0
        %2557 = vmatprep.subr.mxu0 0.0
        %2558 = vmatpush1.msra.mxu0 0.0
        %2559 = vmatprep.mubr.f32.mxu0 0.0
        %2560 = vmatmul.mubr.f32.gmra.mrb[0].mxu0 %v2490
        %v2561 = vpop.f32.mrb[0].mxu0
        %v2562 = vadd.f32 %v2487, %v2561
        %v2563 = vpop.f32.mrb[0].mxu0
        %2564 = vmatprep.mubr.f32.mxu0 0.0
        %2565 = vmatmul.mubr.f32.gmra.mrb[0].mxu0 %v2493
        %v2566 = vpop.f32.mrb[0].mxu0
        %v2567 = vadd.f32 %v2487, %v2566
        %v2568 = vpop.f32.mrb[0].mxu0
        %2569 = vdwg.mxu0
        %v2570 = vsel %vm1964, %v2562, 0.0
        %2571 = vadd.xlane.f32.xlu0 %v2570
        %v2572 = vpop.xlane.xlu0 %2571
        %v2573 = vsel %vm1964, %v2567, 0.0
        %2574 = vadd.xlane.f32.xlu0 %v2573
        %v2575 = vpop.xlane.xlu0 %2574
        %v2576 = vrcp.pop 8.0
        %v2577 = vmul.f32 %v2572, %v2576
        %v2578 = vmul.f32 %v2575, %v2576
        %v2579 = vsub.f32 %v2562, %v2577
        %v2580 = vsub.f32 %v2567, %v2578
        %v2581 = vmul.f32 %v2579, %v2579
        %v2582 = vmul.f32 %v2580, %v2580
        %v2583 = vsel %vm1964, %v2581, 0.0
        %2584 = vadd.xlane.f32.xlu0 %v2583
        %v2585 = vpop.xlane.xlu0 %2584
        %v2586 = vsel %vm1964, %v2582, 0.0
        %2587 = vadd.xlane.f32.xlu0 %v2586
        %v2588 = vpop.xlane.xlu0 %2587
        %v2589 = vmul.f32 %v2585, %v2576
        %v2590 = vmul.f32 %v2588, %v2576
        %v2591 = vadd.f32 %v2589, 1e-12
        %v2592 = vadd.f32 %v2590, 1e-12
        %v2593 = vrsqrt.pop %v2591
        %v2594 = vrsqrt.pop %v2592
        %v2595 = vmul.f32 %v2579, %v2593
        %v2596 = vmul.f32 %v2580, %v2594
        %v2597 = vld [vmem:[%s9] sm:$0x1]
        %v2599 = vlaneseq
        %v2600 = vshrl.u32 %v2599, 7
        %v2601 = vsub.s32 0, %v2600
        %v2602 = vrot.slane %v2597, %v2601
        %v2604 = vmul.f32 %v2602, %v2595
        %v2605 = vmul.f32 %v2602, %v2596
        %v2606 = vld [vmem:[%s10] sm:$0x1]
        %v2608 = vlaneseq
        %v2609 = vshrl.u32 %v2608, 7
        %v2610 = vsub.s32 0, %v2609
        %v2611 = vrot.slane %v2606, %v2610
        %v2613 = vadd.f32 %v2604, %v2611
        %v2614 = vadd.f32 %v2605, %v2611
        %v2615 = vmax.f32 %v2613, 0.0
        %2616 = vxpose.xlu0.b32.start [1/16] %v2615, 128
        %2617 = vxpose.xlu0.b32.cont [2/16] 0.0, 128
        %2618 = vxpose.xlu0.b32.cont [3/16] 0.0, 128
        %2619 = vxpose.xlu0.b32.cont [4/16] 0.0, 128
        %2620 = vxpose.xlu0.b32.cont [5/16] 0.0, 128
        %2621 = vxpose.xlu0.b32.cont [6/16] 0.0, 128
        %2622 = vxpose.xlu0.b32.cont [7/16] 0.0, 128
        %2623 = vxpose.xlu0.b32.cont [8/16] 0.0, 128
        %2624 = vxpose.xlu0.b32.cont [9/16] 0.0, 128
        %2625 = vxpose.xlu0.b32.cont [10/16] 0.0, 128
        %2626 = vxpose.xlu0.b32.cont [11/16] 0.0, 128
        %2627 = vxpose.xlu0.b32.cont [12/16] 0.0, 128
        %2628 = vxpose.xlu0.b32.cont [13/16] 0.0, 128
        %2629 = vxpose.xlu0.b32.cont [14/16] 0.0, 128
        %2630 = vxpose.xlu0.b32.cont [15/16] 0.0, 128
        %2631 = vxpose.xlu0.b32.end [16/16] 0.0, 128
        %v2632 = vpop.trf.xlu0
        %v2633 = vpop.trf.xlu0
        %v2634 = vpop.trf.xlu0
        %v2635 = vpop.trf.xlu0
        %v2636 = vpop.trf.xlu0
        %v2637 = vpop.trf.xlu0
        %v2638 = vpop.trf.xlu0
        %v2639 = vpop.trf.xlu0
        %v2640 = vpop.trf.xlu0
        %v2641 = vpop.trf.xlu0
        %v2642 = vpop.trf.xlu0
        %v2643 = vpop.trf.xlu0
        %v2644 = vpop.trf.xlu0
        %v2645 = vpop.trf.xlu0
        %v2646 = vpop.trf.xlu0
        %v2647 = vpop.trf.xlu0
        %v2648 = vadd.f32 %v2615, %v2632
        %v2649 = vmul.f32 %v2648, 0.5
        %v2650 = vsel %vm1964, %v2649, 0.0
        %2651 = vadd.xlane.f32.xlu0 %v2650
        %v2652 = vpop.xlane.xlu0 %2651
        %v2653 = vrot.slane %v2650, 4
        %v2654 = vadd.f32 %v2650, %v2653
        %v2655 = vrot.slane %v2654, 2
        %v2656 = vadd.f32 %v2654, %v2655
        %v2657 = vrot.slane %v2656, 1
        %v2658 = vadd.f32 %v2656, %v2657
        %vm2659 = vcmp.gt.f32.partialorder %v2652, 0.0
        %v2660 = vrsqrt.pop %v2652
        %v2661 = vsel %vm2659, %v2660, 0.0
        %vm2662 = vcmp.gt.f32.partialorder %v2658, 0.0
        %v2663 = vrsqrt.pop %v2658
        %v2664 = vsel %vm2662, %v2663, 0.0
        %v2665 = vmul.f32 %v2649, %v2661
        %v2666 = vmul.f32 %v2665, %v2664
        %2667 = vst.msk [vmem:[%s446] sm:$0xff] %vm1964, %v2666
        %v2668 = vmax.f32 %v2614, 0.0
        %2669 = vxpose.xlu0.b32.start [1/16] %v2668, 128
        %2670 = vxpose.xlu0.b32.cont [2/16] 0.0, 128
        %2671 = vxpose.xlu0.b32.cont [3/16] 0.0, 128
        %2672 = vxpose.xlu0.b32.cont [4/16] 0.0, 128
        %2673 = vxpose.xlu0.b32.cont [5/16] 0.0, 128
        %2674 = vxpose.xlu0.b32.cont [6/16] 0.0, 128
        %2675 = vxpose.xlu0.b32.cont [7/16] 0.0, 128
        %2676 = vxpose.xlu0.b32.cont [8/16] 0.0, 128
        %2677 = vxpose.xlu0.b32.cont [9/16] 0.0, 128
        %2678 = vxpose.xlu0.b32.cont [10/16] 0.0, 128
        %2679 = vxpose.xlu0.b32.cont [11/16] 0.0, 128
        %2680 = vxpose.xlu0.b32.cont [12/16] 0.0, 128
        %2681 = vxpose.xlu0.b32.cont [13/16] 0.0, 128
        %2682 = vxpose.xlu0.b32.cont [14/16] 0.0, 128
        %2683 = vxpose.xlu0.b32.cont [15/16] 0.0, 128
        %2684 = vxpose.xlu0.b32.end [16/16] 0.0, 128
        %v2685 = vpop.trf.xlu0
        %v2686 = vpop.trf.xlu0
        %v2687 = vpop.trf.xlu0
        %v2688 = vpop.trf.xlu0
        %v2689 = vpop.trf.xlu0
        %v2690 = vpop.trf.xlu0
        %v2691 = vpop.trf.xlu0
        %v2692 = vpop.trf.xlu0
        %v2693 = vpop.trf.xlu0
        %v2694 = vpop.trf.xlu0
        %v2695 = vpop.trf.xlu0
        %v2696 = vpop.trf.xlu0
        %v2697 = vpop.trf.xlu0
        %v2698 = vpop.trf.xlu0
        %v2699 = vpop.trf.xlu0
        %v2700 = vpop.trf.xlu0
        %v2701 = vadd.f32 %v2668, %v2685
        %v2702 = vmul.f32 %v2701, 0.5
        %v2703 = vsel %vm1964, %v2702, 0.0
        %2704 = vadd.xlane.f32.xlu0 %v2703
        %v2705 = vpop.xlane.xlu0 %2704
        %v2706 = vrot.slane %v2703, 4
        %v2707 = vadd.f32 %v2703, %v2706
        %v2708 = vrot.slane %v2707, 2
        %v2709 = vadd.f32 %v2707, %v2708
        %v2710 = vrot.slane %v2709, 1
        %v2711 = vadd.f32 %v2709, %v2710
        %vm2712 = vcmp.gt.f32.partialorder %v2705, 0.0
        %v2713 = vrsqrt.pop %v2705
        %v2714 = vsel %vm2712, %v2713, 0.0
        %vm2715 = vcmp.gt.f32.partialorder %v2711, 0.0
        %v2716 = vrsqrt.pop %v2711
        %v2717 = vsel %vm2715, %v2716, 0.0
        %v2718 = vmul.f32 %v2702, %v2714
        %v2719 = vmul.f32 %v2718, %v2717
        %s2720 = scalar_lea.vmem %s446, 8 [#allocation11]
        %2721 = vst.msk [vmem:[%s2720] sm:$0xff] %vm1964, %v2719
        %s2722 = sand.u32 %s274, 1
        %s2723 = scalar_lea.sflag [#allocation5], %s2722
        %s2724 = sand.u32 %s274, 1
        %s2725 = smul.addr %s2724, 16
        %s2726 = scalar_lea.vmem [#allocation11], %s2725
        // Predicated region
        $region81: #{tpu_custom_call.1} parent=63 // pred_check
          %p2727 = pneg %p284
        $region82: #{tpu_custom_call.1} parent=63 // pred_check_branch
          %2729 = sbr.rel (%p2727) target = $region84
        $region83: #{tpu_custom_call.1} parent=63 // pred_region
          %s2730 = smul.u32 2, %s30
          %s2732 = ssub.s32 256, 256
          %2733 = vsyncadd %s2723, %s2732
          %s2734 = smul.addr %s2730, 128
          %s2735 = scalar_lea.hbm %s11, %s2734
          %s2736 = sshll.u32 %s2726, 4
          %s2737 = int_to_ptr.vmem [resolvable:$true] %s2736
          %2742 = dma.vmem_to_hbm [thread:$0]  %s2737, 256, %s2735, %s2723, 128, 128, 8
        $region84: #{tpu_custom_call.1} parent=63 // pred_fallthru
          _
      $region64: #{tpu_custom_call.1} parent=5 // pred_fallthru
        _
      %p2743 = scmp.le.s32.totalorder 2, %s25
      // Predicated region
      $region85: #{tpu_custom_call.1} parent=5 // pred_check
        %p2744 = pneg %p2743
      $region86: #{tpu_custom_call.1} parent=5 // pred_check_branch
        %2746 = sbr.rel (%p2744) target = $region88
      $region87: #{tpu_custom_call.1} parent=5 // pred_region
        %s2747 = ssub.s32 %s25, 2
        // Predicated region
        $region89: #{tpu_custom_call.1} parent=87 // pred_check
          %p2748 = pneg %p290
        $region90: #{tpu_custom_call.1} parent=87 // pred_check_branch
          %2750 = sbr.rel (%p2748) target = $region92
        $region91: #{tpu_custom_call.1} parent=87 // pred_region
          %s2751 = sand.u32 %s275, 1
          %s2752 = scalar_lea.sflag [#allocation5], %s2751
          %s2753 = sand.u32 %s275, 1
          %s2754 = smul.addr %s2753, 16
          %s2755 = scalar_lea.vmem [#allocation11], %s2754
          %2756 = dma.done %s2752, 256
        $region92: #{tpu_custom_call.1} parent=87 // pred_fallthru
          _
      $region88: #{tpu_custom_call.1} parent=5 // pred_fallthru
        _
    $region6: #{tpu_custom_call.1} parent=1 // loop_footer
      %s29 = sadd.s32 1, %s25
    $region7: #{tpu_custom_call.1} parent=1 // loop_footer_branch
      %24 = sbr.rel target = $region3
    $region8: #{tpu_custom_call.1} parent=1 // loop_exit
      _
    %2757 = vsyncpa [#allocation4], 1
    %s2758 = scalar_lea.sflag [#allocation4], 1
    %2759 = vsyncpa %s2758, 1
    %2760 = vsyncpa [#allocation7], 1
    %2761 = vsyncpa [#allocation10], 1
    %2762 = vsyncpa [#allocation5], 1
    %s2763 = scalar_lea.sflag [#allocation5], 1
    %2764 = vsyncpa %s2763, 1

</llo_original>
